<compile_context>
chip_gen: v7x
topology: tpu7x:2x2x1
jax: 0.10.0
libtpu: 0.0.40
codegen_flags: <defaults>
</compile_context>

<pallas_src>
import jax
import jax.numpy as jnp
import numpy as np
from jax.experimental import pallas as pl
from jax.experimental.pallas import tpu as pltpu

C_OUT = 3
K = 5


def _model2d_kernel(x_ref, w_ref, b_ref, o_ref):
    # x_ref: (H, W, TB) f32 VMEM tile  (batch on lanes)
    # w_ref: (C_OUT*K*K,) f32 SMEM     (scalar weight reads)
    # b_ref: (C_OUT,)     f32 SMEM
    # o_ref: (C_OUT, TB)  f32 VMEM     (softmax probabilities, lane-dense store)
    H, W, TB = x_ref.shape
    Ho, Wo = H - K + 1, W - K + 1

    chan_max = []
    for c in range(C_OUT):
        # Bias folded into the accumulator init (saves one full-tile VPU pass).
        acc = jnp.full((Ho, Wo, TB), b_ref[c], dtype=jnp.float32)
        # Valid conv as 25 shifted, scalar-scaled adds; slices stream straight
        # from the VMEM ref so only one (Ho, Wo, TB) accumulator is register
        # resident at a time.
        for ki in range(K):
            for kj in range(K):
                w_scalar = w_ref[c * K * K + ki * K + kj]
                acc = acc + w_scalar * x_ref[ki:ki + Ho, kj:kj + Wo, :]
        t = jnp.tanh(acc)
        # max over W (axis 1) then H (axis 0); batch stays on the lane axis.
        cm = jnp.max(t, axis=0)                      # (Wo, TB)
        cm = jnp.max(cm, axis=0, keepdims=True)      # (1, TB)
        chan_max.append(cm)

    logits = jnp.concatenate(chan_max, axis=0)       # (C_OUT, TB)
    logits = logits - jnp.max(logits, axis=0, keepdims=True)
    e = jnp.exp(logits)
    denom = jnp.sum(e, axis=0, keepdims=True)        # (1, TB)
    sm = e * pl.reciprocal(denom, approx=True)       # EUP slot, ~free
    o_ref[...] = sm.astype(o_ref.dtype)


def _choose_batch_tile(B):
    # Lane-dense batch tiles (multiple of 128); prefer >=2 grid blocks so both
    # TensorCores on v7x get work; cap at 512 (tiny in VMEM for small images).
    for tb in (512, 256, 128):
        if B >= 2 * tb:
            return tb
    return 128


def model2d_forward(x, w, b):
    """x: (B, H, W) f32; w: (C_OUT, K, K) f32; b: (C_OUT,) f32 -> (B, C_OUT)."""
    B, H, W = x.shape
    TB = _choose_batch_tile(B)
    n_blocks = pl.cdiv(B, TB)
    B_pad = n_blocks * TB

    x = x.astype(jnp.float32)
    if B_pad != B:
        x = jnp.pad(x, ((0, B_pad - B), (0, 0), (0, 0)))
    # Batch on the lane (last) axis: (H, W, B_pad). Layout plumbing only.
    x_t = jnp.transpose(x, (1, 2, 0))

    w_flat = w.reshape(-1).astype(jnp.float32)
    b = b.astype(jnp.float32)

    out = pl.pallas_call(
        _model2d_kernel,
        out_shape=jax.ShapeDtypeStruct((C_OUT, B_pad), jnp.float32),
        grid_spec=pltpu.PrefetchScalarGridSpec(
            num_scalar_prefetch=0,
            grid=(n_blocks,),
            in_specs=[
                pl.BlockSpec((H, W, TB), lambda gi: (0, 0, gi)),
                pl.BlockSpec(memory_space=pltpu.MemorySpace.SMEM),
                pl.BlockSpec(memory_space=pltpu.MemorySpace.SMEM),
            ],
            out_specs=pl.BlockSpec((C_OUT, TB), lambda gi: (0, gi)),
        ),
        compiler_params=pltpu.CompilerParams(
            dimension_semantics=("parallel",)),
    )(x_t, w_flat, b)

    return out.T[:B]                                  # (B, C_OUT)


def _reference_forward(x, w, b):
    # Pure-JAX reference matching the PyTorch module semantics (NCHW conv).
    xi = x[:, None, :, :]                             # (B,1,H,W)
    wi = w[:, None, :, :]                             # (3,1,5,5) OIHW
    y = jax.lax.conv_general_dilated(
        xi, wi, window_strides=(1, 1), padding="VALID",
        dimension_numbers=("NCHW", "OIHW", "NCHW"))
    y = y + b[None, :, None, None]
    y = jnp.tanh(y)
    y = jnp.max(y, axis=-1)
    y = jnp.max(y, axis=-1)
    return jax.nn.softmax(y, axis=1)


if __name__ == "__main__":
    key = jax.random.PRNGKey(0)
    k_x, k_w, k_b, k_x2 = jax.random.split(key, 4)

    H, W = 16, 16
    fan_in = 1 * K * K
    bound = 1.0 / np.sqrt(fan_in)
    w = jax.random.uniform(k_w, (C_OUT, K, K), jnp.float32, -bound, bound)
    b = jax.random.uniform(k_b, (C_OUT,), jnp.float32, -bound, bound)

    # Small case matching the module spec (batch=2, 16x16 images).
    B = 2
    x = jax.random.normal(k_x, (B, H, W), dtype=jnp.float32)
    out = jax.block_until_ready(model2d_forward(x, w, b))
    ref = jax.block_until_ready(_reference_forward(x, w, b))
    np.testing.assert_allclose(np.asarray(out), np.asarray(ref),
                               rtol=1e-3, atol=1e-3)

    # Larger batch to exercise padding + a multi-block ("parallel") grid.
    B2 = 300
    x2 = jax.random.normal(k_x2, (B2, H, W), dtype=jnp.float32)
    out2 = jax.block_until_ready(model2d_forward(x2, w, b))
    ref2 = jax.block_until_ready(_reference_forward(x2, w, b))
    np.testing.assert_allclose(np.asarray(out2), np.asarray(ref2),
                               rtol=1e-3, atol=1e-3)

    print("KERNEL_OK")
</pallas_src>

<mosaic_0001>
module attributes {stable_mosaic.version = 11 : i64} {
  func.func @_model2d_kernel(%arg0: i32, %arg1: memref<16x16x128xf32, #tpu.memory_space<vmem>>, %arg2: memref<75xf32, #tpu.memory_space<smem>>, %arg3: memref<3xf32, #tpu.memory_space<smem>>, %arg4: memref<3x128xf32, #tpu.memory_space<vmem>>) attributes {dimension_semantics = [#tpu.dimension_semantics<parallel>], iteration_bounds = array<i64: 1>, scalar_prefetch = 0 : i64, scratch_operands = 0 : i64, tpu.core_type = #tpu.core_type<tc>, window_params = [{transform_indices = @transform_0, window_bounds = array<i64: 16, 16, 128>}, {transform_indices = @transform_1, window_bounds = array<i64: 75>}, {transform_indices = @transform_2, window_bounds = array<i64: 3>}, {transform_indices = @transform_3, window_bounds = array<i64: 3, 128>}]} {
    %c0 = arith.constant 0 : index
    %0 = memref.load %arg3[%c0] : memref<3xf32, #tpu.memory_space<smem>>
    %1 = vector.broadcast %0 : f32 to vector<12x12x128xf32>
    %c0_0 = arith.constant 0 : index
    %2 = memref.load %arg2[%c0_0] : memref<75xf32, #tpu.memory_space<smem>>
    %c0_1 = arith.constant 0 : index
    %c0_2 = arith.constant 0 : index
    %c0_3 = arith.constant 0 : index
    %3 = vector.load %arg1[%c0_1, %c0_2, %c0_3] : memref<16x16x128xf32, #tpu.memory_space<vmem>>, vector<12x12x128xf32>
    %4 = vector.broadcast %2 : f32 to vector<12x12x128xf32>
    %5 = arith.mulf %4, %3 : vector<12x12x128xf32>
    %6 = arith.addf %1, %5 : vector<12x12x128xf32>
    %c1 = arith.constant 1 : index
    %7 = memref.load %arg2[%c1] : memref<75xf32, #tpu.memory_space<smem>>
    %c0_4 = arith.constant 0 : index
    %c1_5 = arith.constant 1 : index
    %c0_6 = arith.constant 0 : index
    %8 = vector.load %arg1[%c0_4, %c1_5, %c0_6] : memref<16x16x128xf32, #tpu.memory_space<vmem>>, vector<12x12x128xf32>
    %9 = vector.broadcast %7 : f32 to vector<12x12x128xf32>
    %10 = arith.mulf %9, %8 : vector<12x12x128xf32>
    %11 = arith.addf %6, %10 : vector<12x12x128xf32>
    %c2 = arith.constant 2 : index
    %12 = memref.load %arg2[%c2] : memref<75xf32, #tpu.memory_space<smem>>
    %c0_7 = arith.constant 0 : index
    %c2_8 = arith.constant 2 : index
    %c0_9 = arith.constant 0 : index
    %13 = vector.load %arg1[%c0_7, %c2_8, %c0_9] : memref<16x16x128xf32, #tpu.memory_space<vmem>>, vector<12x12x128xf32>
    %14 = vector.broadcast %12 : f32 to vector<12x12x128xf32>
    %15 = arith.mulf %14, %13 : vector<12x12x128xf32>
    %16 = arith.addf %11, %15 : vector<12x12x128xf32>
    %c3 = arith.constant 3 : index
    %17 = memref.load %arg2[%c3] : memref<75xf32, #tpu.memory_space<smem>>
    %c0_10 = arith.constant 0 : index
    %c3_11 = arith.constant 3 : index
    %c0_12 = arith.constant 0 : index
    %18 = vector.load %arg1[%c0_10, %c3_11, %c0_12] : memref<16x16x128xf32, #tpu.memory_space<vmem>>, vector<12x12x128xf32>
    %19 = vector.broadcast %17 : f32 to vector<12x12x128xf32>
    %20 = arith.mulf %19, %18 : vector<12x12x128xf32>
    %21 = arith.addf %16, %20 : vector<12x12x128xf32>
    %c4 = arith.constant 4 : index
    %22 = memref.load %arg2[%c4] : memref<75xf32, #tpu.memory_space<smem>>
    %c0_13 = arith.constant 0 : index
    %c4_14 = arith.constant 4 : index
    %c0_15 = arith.constant 0 : index
    %23 = vector.load %arg1[%c0_13, %c4_14, %c0_15] : memref<16x16x128xf32, #tpu.memory_space<vmem>>, vector<12x12x128xf32>
    %24 = vector.broadcast %22 : f32 to vector<12x12x128xf32>
    %25 = arith.mulf %24, %23 : vector<12x12x128xf32>
    %26 = arith.addf %21, %25 : vector<12x12x128xf32>
    %c5 = arith.constant 5 : index
    %27 = memref.load %arg2[%c5] : memref<75xf32, #tpu.memory_space<smem>>
    %c1_16 = arith.constant 1 : index
    %c0_17 = arith.constant 0 : index
    %c0_18 = arith.constant 0 : index
    %28 = vector.load %arg1[%c1_16, %c0_17, %c0_18] : memref<16x16x128xf32, #tpu.memory_space<vmem>>, vector<12x12x128xf32>
    %29 = vector.broadcast %27 : f32 to vector<12x12x128xf32>
    %30 = arith.mulf %29, %28 : vector<12x12x128xf32>
    %31 = arith.addf %26, %30 : vector<12x12x128xf32>
    %c6 = arith.constant 6 : index
    %32 = memref.load %arg2[%c6] : memref<75xf32, #tpu.memory_space<smem>>
    %c1_19 = arith.constant 1 : index
    %c1_20 = arith.constant 1 : index
    %c0_21 = arith.constant 0 : index
    %33 = vector.load %arg1[%c1_19, %c1_20, %c0_21] : memref<16x16x128xf32, #tpu.memory_space<vmem>>, vector<12x12x128xf32>
    %34 = vector.broadcast %32 : f32 to vector<12x12x128xf32>
    %35 = arith.mulf %34, %33 : vector<12x12x128xf32>
    %36 = arith.addf %31, %35 : vector<12x12x128xf32>
    %c7 = arith.constant 7 : index
    %37 = memref.load %arg2[%c7] : memref<75xf32, #tpu.memory_space<smem>>
    %c1_22 = arith.constant 1 : index
    %c2_23 = arith.constant 2 : index
    %c0_24 = arith.constant 0 : index
    %38 = vector.load %arg1[%c1_22, %c2_23, %c0_24] : memref<16x16x128xf32, #tpu.memory_space<vmem>>, vector<12x12x128xf32>
    %39 = vector.broadcast %37 : f32 to vector<12x12x128xf32>
    %40 = arith.mulf %39, %38 : vector<12x12x128xf32>
    %41 = arith.addf %36, %40 : vector<12x12x128xf32>
    %c8 = arith.constant 8 : index
    %42 = memref.load %arg2[%c8] : memref<75xf32, #tpu.memory_space<smem>>
    %c1_25 = arith.constant 1 : index
    %c3_26 = arith.constant 3 : index
    %c0_27 = arith.constant 0 : index
    %43 = vector.load %arg1[%c1_25, %c3_26, %c0_27] : memref<16x16x128xf32, #tpu.memory_space<vmem>>, vector<12x12x128xf32>
    %44 = vector.broadcast %42 : f32 to vector<12x12x128xf32>
    %45 = arith.mulf %44, %43 : vector<12x12x128xf32>
    %46 = arith.addf %41, %45 : vector<12x12x128xf32>
    %c9 = arith.constant 9 : index
    %47 = memref.load %arg2[%c9] : memref<75xf32, #tpu.memory_space<smem>>
    %c1_28 = arith.constant 1 : index
    %c4_29 = arith.constant 4 : index
    %c0_30 = arith.constant 0 : index
    %48 = vector.load %arg1[%c1_28, %c4_29, %c0_30] : memref<16x16x128xf32, #tpu.memory_space<vmem>>, vector<12x12x128xf32>
    %49 = vector.broadcast %47 : f32 to vector<12x12x128xf32>
    %50 = arith.mulf %49, %48 : vector<12x12x128xf32>
    %51 = arith.addf %46, %50 : vector<12x12x128xf32>
    %c10 = arith.constant 10 : index
    %52 = memref.load %arg2[%c10] : memref<75xf32, #tpu.memory_space<smem>>
    %c2_31 = arith.constant 2 : index
    %c0_32 = arith.constant 0 : index
    %c0_33 = arith.constant 0 : index
    %53 = vector.load %arg1[%c2_31, %c0_32, %c0_33] : memref<16x16x128xf32, #tpu.memory_space<vmem>>, vector<12x12x128xf32>
    %54 = vector.broadcast %52 : f32 to vector<12x12x128xf32>
    %55 = arith.mulf %54, %53 : vector<12x12x128xf32>
    %56 = arith.addf %51, %55 : vector<12x12x128xf32>
    %c11 = arith.constant 11 : index
    %57 = memref.load %arg2[%c11] : memref<75xf32, #tpu.memory_space<smem>>
    %c2_34 = arith.constant 2 : index
    %c1_35 = arith.constant 1 : index
    %c0_36 = arith.constant 0 : index
    %58 = vector.load %arg1[%c2_34, %c1_35, %c0_36] : memref<16x16x128xf32, #tpu.memory_space<vmem>>, vector<12x12x128xf32>
    %59 = vector.broadcast %57 : f32 to vector<12x12x128xf32>
    %60 = arith.mulf %59, %58 : vector<12x12x128xf32>
    %61 = arith.addf %56, %60 : vector<12x12x128xf32>
    %c12 = arith.constant 12 : index
    %62 = memref.load %arg2[%c12] : memref<75xf32, #tpu.memory_space<smem>>
    %c2_37 = arith.constant 2 : index
    %c2_38 = arith.constant 2 : index
    %c0_39 = arith.constant 0 : index
    %63 = vector.load %arg1[%c2_37, %c2_38, %c0_39] : memref<16x16x128xf32, #tpu.memory_space<vmem>>, vector<12x12x128xf32>
    %64 = vector.broadcast %62 : f32 to vector<12x12x128xf32>
    %65 = arith.mulf %64, %63 : vector<12x12x128xf32>
    %66 = arith.addf %61, %65 : vector<12x12x128xf32>
    %c13 = arith.constant 13 : index
    %67 = memref.load %arg2[%c13] : memref<75xf32, #tpu.memory_space<smem>>
    %c2_40 = arith.constant 2 : index
    %c3_41 = arith.constant 3 : index
    %c0_42 = arith.constant 0 : index
    %68 = vector.load %arg1[%c2_40, %c3_41, %c0_42] : memref<16x16x128xf32, #tpu.memory_space<vmem>>, vector<12x12x128xf32>
    %69 = vector.broadcast %67 : f32 to vector<12x12x128xf32>
    %70 = arith.mulf %69, %68 : vector<12x12x128xf32>
    %71 = arith.addf %66, %70 : vector<12x12x128xf32>
    %c14 = arith.constant 14 : index
    %72 = memref.load %arg2[%c14] : memref<75xf32, #tpu.memory_space<smem>>
    %c2_43 = arith.constant 2 : index
    %c4_44 = arith.constant 4 : index
    %c0_45 = arith.constant 0 : index
    %73 = vector.load %arg1[%c2_43, %c4_44, %c0_45] : memref<16x16x128xf32, #tpu.memory_space<vmem>>, vector<12x12x128xf32>
    %74 = vector.broadcast %72 : f32 to vector<12x12x128xf32>
    %75 = arith.mulf %74, %73 : vector<12x12x128xf32>
    %76 = arith.addf %71, %75 : vector<12x12x128xf32>
    %c15 = arith.constant 15 : index
    %77 = memref.load %arg2[%c15] : memref<75xf32, #tpu.memory_space<smem>>
    %c3_46 = arith.constant 3 : index
    %c0_47 = arith.constant 0 : index
    %c0_48 = arith.constant 0 : index
    %78 = vector.load %arg1[%c3_46, %c0_47, %c0_48] : memref<16x16x128xf32, #tpu.memory_space<vmem>>, vector<12x12x128xf32>
    %79 = vector.broadcast %77 : f32 to vector<12x12x128xf32>
    %80 = arith.mulf %79, %78 : vector<12x12x128xf32>
    %81 = arith.addf %76, %80 : vector<12x12x128xf32>
    %c16 = arith.constant 16 : index
    %82 = memref.load %arg2[%c16] : memref<75xf32, #tpu.memory_space<smem>>
    %c3_49 = arith.constant 3 : index
    %c1_50 = arith.constant 1 : index
    %c0_51 = arith.constant 0 : index
    %83 = vector.load %arg1[%c3_49, %c1_50, %c0_51] : memref<16x16x128xf32, #tpu.memory_space<vmem>>, vector<12x12x128xf32>
    %84 = vector.broadcast %82 : f32 to vector<12x12x128xf32>
    %85 = arith.mulf %84, %83 : vector<12x12x128xf32>
    %86 = arith.addf %81, %85 : vector<12x12x128xf32>
    %c17 = arith.constant 17 : index
    %87 = memref.load %arg2[%c17] : memref<75xf32, #tpu.memory_space<smem>>
    %c3_52 = arith.constant 3 : index
    %c2_53 = arith.constant 2 : index
    %c0_54 = arith.constant 0 : index
    %88 = vector.load %arg1[%c3_52, %c2_53, %c0_54] : memref<16x16x128xf32, #tpu.memory_space<vmem>>, vector<12x12x128xf32>
    %89 = vector.broadcast %87 : f32 to vector<12x12x128xf32>
    %90 = arith.mulf %89, %88 : vector<12x12x128xf32>
    %91 = arith.addf %86, %90 : vector<12x12x128xf32>
    %c18 = arith.constant 18 : index
    %92 = memref.load %arg2[%c18] : memref<75xf32, #tpu.memory_space<smem>>
    %c3_55 = arith.constant 3 : index
    %c3_56 = arith.constant 3 : index
    %c0_57 = arith.constant 0 : index
    %93 = vector.load %arg1[%c3_55, %c3_56, %c0_57] : memref<16x16x128xf32, #tpu.memory_space<vmem>>, vector<12x12x128xf32>
    %94 = vector.broadcast %92 : f32 to vector<12x12x128xf32>
    %95 = arith.mulf %94, %93 : vector<12x12x128xf32>
    %96 = arith.addf %91, %95 : vector<12x12x128xf32>
    %c19 = arith.constant 19 : index
    %97 = memref.load %arg2[%c19] : memref<75xf32, #tpu.memory_space<smem>>
    %c3_58 = arith.constant 3 : index
    %c4_59 = arith.constant 4 : index
    %c0_60 = arith.constant 0 : index
    %98 = vector.load %arg1[%c3_58, %c4_59, %c0_60] : memref<16x16x128xf32, #tpu.memory_space<vmem>>, vector<12x12x128xf32>
    %99 = vector.broadcast %97 : f32 to vector<12x12x128xf32>
    %100 = arith.mulf %99, %98 : vector<12x12x128xf32>
    %101 = arith.addf %96, %100 : vector<12x12x128xf32>
    %c20 = arith.constant 20 : index
    %102 = memref.load %arg2[%c20] : memref<75xf32, #tpu.memory_space<smem>>
    %c4_61 = arith.constant 4 : index
    %c0_62 = arith.constant 0 : index
    %c0_63 = arith.constant 0 : index
    %103 = vector.load %arg1[%c4_61, %c0_62, %c0_63] : memref<16x16x128xf32, #tpu.memory_space<vmem>>, vector<12x12x128xf32>
    %104 = vector.broadcast %102 : f32 to vector<12x12x128xf32>
    %105 = arith.mulf %104, %103 : vector<12x12x128xf32>
    %106 = arith.addf %101, %105 : vector<12x12x128xf32>
    %c21 = arith.constant 21 : index
    %107 = memref.load %arg2[%c21] : memref<75xf32, #tpu.memory_space<smem>>
    %c4_64 = arith.constant 4 : index
    %c1_65 = arith.constant 1 : index
    %c0_66 = arith.constant 0 : index
    %108 = vector.load %arg1[%c4_64, %c1_65, %c0_66] : memref<16x16x128xf32, #tpu.memory_space<vmem>>, vector<12x12x128xf32>
    %109 = vector.broadcast %107 : f32 to vector<12x12x128xf32>
    %110 = arith.mulf %109, %108 : vector<12x12x128xf32>
    %111 = arith.addf %106, %110 : vector<12x12x128xf32>
    %c22 = arith.constant 22 : index
    %112 = memref.load %arg2[%c22] : memref<75xf32, #tpu.memory_space<smem>>
    %c4_67 = arith.constant 4 : index
    %c2_68 = arith.constant 2 : index
    %c0_69 = arith.constant 0 : index
    %113 = vector.load %arg1[%c4_67, %c2_68, %c0_69] : memref<16x16x128xf32, #tpu.memory_space<vmem>>, vector<12x12x128xf32>
    %114 = vector.broadcast %112 : f32 to vector<12x12x128xf32>
    %115 = arith.mulf %114, %113 : vector<12x12x128xf32>
    %116 = arith.addf %111, %115 : vector<12x12x128xf32>
    %c23 = arith.constant 23 : index
    %117 = memref.load %arg2[%c23] : memref<75xf32, #tpu.memory_space<smem>>
    %c4_70 = arith.constant 4 : index
    %c3_71 = arith.constant 3 : index
    %c0_72 = arith.constant 0 : index
    %118 = vector.load %arg1[%c4_70, %c3_71, %c0_72] : memref<16x16x128xf32, #tpu.memory_space<vmem>>, vector<12x12x128xf32>
    %119 = vector.broadcast %117 : f32 to vector<12x12x128xf32>
    %120 = arith.mulf %119, %118 : vector<12x12x128xf32>
    %121 = arith.addf %116, %120 : vector<12x12x128xf32>
    %c24 = arith.constant 24 : index
    %122 = memref.load %arg2[%c24] : memref<75xf32, #tpu.memory_space<smem>>
    %c4_73 = arith.constant 4 : index
    %c4_74 = arith.constant 4 : index
    %c0_75 = arith.constant 0 : index
    %123 = vector.load %arg1[%c4_73, %c4_74, %c0_75] : memref<16x16x128xf32, #tpu.memory_space<vmem>>, vector<12x12x128xf32>
    %124 = vector.broadcast %122 : f32 to vector<12x12x128xf32>
    %125 = arith.mulf %124, %123 : vector<12x12x128xf32>
    %126 = arith.addf %121, %125 : vector<12x12x128xf32>
    %127 = math.tanh %126 : vector<12x12x128xf32>
    %cst = arith.constant dense<0xFF800000> : vector<12x128xf32>
    %128 = vector.multi_reduction <maximumf>, %127, %cst [0] : vector<12x12x128xf32> to vector<12x128xf32>
    %cst_76 = arith.constant dense<0xFF800000> : vector<128xf32>
    %129 = vector.multi_reduction <maximumf>, %128, %cst_76 [0] : vector<12x128xf32> to vector<128xf32>
    %130 = vector.shape_cast %129 : vector<128xf32> to vector<1x128xf32>
    %c1_77 = arith.constant 1 : index
    %131 = memref.load %arg3[%c1_77] : memref<3xf32, #tpu.memory_space<smem>>
    %132 = vector.broadcast %131 : f32 to vector<12x12x128xf32>
    %c25 = arith.constant 25 : index
    %133 = memref.load %arg2[%c25] : memref<75xf32, #tpu.memory_space<smem>>
    %c0_78 = arith.constant 0 : index
    %c0_79 = arith.constant 0 : index
    %c0_80 = arith.constant 0 : index
    %134 = vector.load %arg1[%c0_78, %c0_79, %c0_80] : memref<16x16x128xf32, #tpu.memory_space<vmem>>, vector<12x12x128xf32>
    %135 = vector.broadcast %133 : f32 to vector<12x12x128xf32>
    %136 = arith.mulf %135, %134 : vector<12x12x128xf32>
    %137 = arith.addf %132, %136 : vector<12x12x128xf32>
    %c26 = arith.constant 26 : index
    %138 = memref.load %arg2[%c26] : memref<75xf32, #tpu.memory_space<smem>>
    %c0_81 = arith.constant 0 : index
    %c1_82 = arith.constant 1 : index
    %c0_83 = arith.constant 0 : index
    %139 = vector.load %arg1[%c0_81, %c1_82, %c0_83] : memref<16x16x128xf32, #tpu.memory_space<vmem>>, vector<12x12x128xf32>
    %140 = vector.broadcast %138 : f32 to vector<12x12x128xf32>
    %141 = arith.mulf %140, %139 : vector<12x12x128xf32>
    %142 = arith.addf %137, %141 : vector<12x12x128xf32>
    %c27 = arith.constant 27 : index
    %143 = memref.load %arg2[%c27] : memref<75xf32, #tpu.memory_space<smem>>
    %c0_84 = arith.constant 0 : index
    %c2_85 = arith.constant 2 : index
    %c0_86 = arith.constant 0 : index
    %144 = vector.load %arg1[%c0_84, %c2_85, %c0_86] : memref<16x16x128xf32, #tpu.memory_space<vmem>>, vector<12x12x128xf32>
    %145 = vector.broadcast %143 : f32 to vector<12x12x128xf32>
    %146 = arith.mulf %145, %144 : vector<12x12x128xf32>
    %147 = arith.addf %142, %146 : vector<12x12x128xf32>
    %c28 = arith.constant 28 : index
    %148 = memref.load %arg2[%c28] : memref<75xf32, #tpu.memory_space<smem>>
    %c0_87 = arith.constant 0 : index
    %c3_88 = arith.constant 3 : index
    %c0_89 = arith.constant 0 : index
    %149 = vector.load %arg1[%c0_87, %c3_88, %c0_89] : memref<16x16x128xf32, #tpu.memory_space<vmem>>, vector<12x12x128xf32>
    %150 = vector.broadcast %148 : f32 to vector<12x12x128xf32>
    %151 = arith.mulf %150, %149 : vector<12x12x128xf32>
    %152 = arith.addf %147, %151 : vector<12x12x128xf32>
    %c29 = arith.constant 29 : index
    %153 = memref.load %arg2[%c29] : memref<75xf32, #tpu.memory_space<smem>>
    %c0_90 = arith.constant 0 : index
    %c4_91 = arith.constant 4 : index
    %c0_92 = arith.constant 0 : index
    %154 = vector.load %arg1[%c0_90, %c4_91, %c0_92] : memref<16x16x128xf32, #tpu.memory_space<vmem>>, vector<12x12x128xf32>
    %155 = vector.broadcast %153 : f32 to vector<12x12x128xf32>
    %156 = arith.mulf %155, %154 : vector<12x12x128xf32>
    %157 = arith.addf %152, %156 : vector<12x12x128xf32>
    %c30 = arith.constant 30 : index
    %158 = memref.load %arg2[%c30] : memref<75xf32, #tpu.memory_space<smem>>
    %c1_93 = arith.constant 1 : index
    %c0_94 = arith.constant 0 : index
    %c0_95 = arith.constant 0 : index
    %159 = vector.load %arg1[%c1_93, %c0_94, %c0_95] : memref<16x16x128xf32, #tpu.memory_space<vmem>>, vector<12x12x128xf32>
    %160 = vector.broadcast %158 : f32 to vector<12x12x128xf32>
    %161 = arith.mulf %160, %159 : vector<12x12x128xf32>
    %162 = arith.addf %157, %161 : vector<12x12x128xf32>
    %c31 = arith.constant 31 : index
    %163 = memref.load %arg2[%c31] : memref<75xf32, #tpu.memory_space<smem>>
    %c1_96 = arith.constant 1 : index
    %c1_97 = arith.constant 1 : index
    %c0_98 = arith.constant 0 : index
    %164 = vector.load %arg1[%c1_96, %c1_97, %c0_98] : memref<16x16x128xf32, #tpu.memory_space<vmem>>, vector<12x12x128xf32>
    %165 = vector.broadcast %163 : f32 to vector<12x12x128xf32>
    %166 = arith.mulf %165, %164 : vector<12x12x128xf32>
    %167 = arith.addf %162, %166 : vector<12x12x128xf32>
    %c32 = arith.constant 32 : index
    %168 = memref.load %arg2[%c32] : memref<75xf32, #tpu.memory_space<smem>>
    %c1_99 = arith.constant 1 : index
    %c2_100 = arith.constant 2 : index
    %c0_101 = arith.constant 0 : index
    %169 = vector.load %arg1[%c1_99, %c2_100, %c0_101] : memref<16x16x128xf32, #tpu.memory_space<vmem>>, vector<12x12x128xf32>
    %170 = vector.broadcast %168 : f32 to vector<12x12x128xf32>
    %171 = arith.mulf %170, %169 : vector<12x12x128xf32>
    %172 = arith.addf %167, %171 : vector<12x12x128xf32>
    %c33 = arith.constant 33 : index
    %173 = memref.load %arg2[%c33] : memref<75xf32, #tpu.memory_space<smem>>
    %c1_102 = arith.constant 1 : index
    %c3_103 = arith.constant 3 : index
    %c0_104 = arith.constant 0 : index
    %174 = vector.load %arg1[%c1_102, %c3_103, %c0_104] : memref<16x16x128xf32, #tpu.memory_space<vmem>>, vector<12x12x128xf32>
    %175 = vector.broadcast %173 : f32 to vector<12x12x128xf32>
    %176 = arith.mulf %175, %174 : vector<12x12x128xf32>
    %177 = arith.addf %172, %176 : vector<12x12x128xf32>
    %c34 = arith.constant 34 : index
    %178 = memref.load %arg2[%c34] : memref<75xf32, #tpu.memory_space<smem>>
    %c1_105 = arith.constant 1 : index
    %c4_106 = arith.constant 4 : index
    %c0_107 = arith.constant 0 : index
    %179 = vector.load %arg1[%c1_105, %c4_106, %c0_107] : memref<16x16x128xf32, #tpu.memory_space<vmem>>, vector<12x12x128xf32>
    %180 = vector.broadcast %178 : f32 to vector<12x12x128xf32>
    %181 = arith.mulf %180, %179 : vector<12x12x128xf32>
    %182 = arith.addf %177, %181 : vector<12x12x128xf32>
    %c35 = arith.constant 35 : index
    %183 = memref.load %arg2[%c35] : memref<75xf32, #tpu.memory_space<smem>>
    %c2_108 = arith.constant 2 : index
    %c0_109 = arith.constant 0 : index
    %c0_110 = arith.constant 0 : index
    %184 = vector.load %arg1[%c2_108, %c0_109, %c0_110] : memref<16x16x128xf32, #tpu.memory_space<vmem>>, vector<12x12x128xf32>
    %185 = vector.broadcast %183 : f32 to vector<12x12x128xf32>
    %186 = arith.mulf %185, %184 : vector<12x12x128xf32>
    %187 = arith.addf %182, %186 : vector<12x12x128xf32>
    %c36 = arith.constant 36 : index
    %188 = memref.load %arg2[%c36] : memref<75xf32, #tpu.memory_space<smem>>
    %c2_111 = arith.constant 2 : index
    %c1_112 = arith.constant 1 : index
    %c0_113 = arith.constant 0 : index
    %189 = vector.load %arg1[%c2_111, %c1_112, %c0_113] : memref<16x16x128xf32, #tpu.memory_space<vmem>>, vector<12x12x128xf32>
    %190 = vector.broadcast %188 : f32 to vector<12x12x128xf32>
    %191 = arith.mulf %190, %189 : vector<12x12x128xf32>
    %192 = arith.addf %187, %191 : vector<12x12x128xf32>
    %c37 = arith.constant 37 : index
    %193 = memref.load %arg2[%c37] : memref<75xf32, #tpu.memory_space<smem>>
    %c2_114 = arith.constant 2 : index
    %c2_115 = arith.constant 2 : index
    %c0_116 = arith.constant 0 : index
    %194 = vector.load %arg1[%c2_114, %c2_115, %c0_116] : memref<16x16x128xf32, #tpu.memory_space<vmem>>, vector<12x12x128xf32>
    %195 = vector.broadcast %193 : f32 to vector<12x12x128xf32>
    %196 = arith.mulf %195, %194 : vector<12x12x128xf32>
    %197 = arith.addf %192, %196 : vector<12x12x128xf32>
    %c38 = arith.constant 38 : index
    %198 = memref.load %arg2[%c38] : memref<75xf32, #tpu.memory_space<smem>>
    %c2_117 = arith.constant 2 : index
    %c3_118 = arith.constant 3 : index
    %c0_119 = arith.constant 0 : index
    %199 = vector.load %arg1[%c2_117, %c3_118, %c0_119] : memref<16x16x128xf32, #tpu.memory_space<vmem>>, vector<12x12x128xf32>
    %200 = vector.broadcast %198 : f32 to vector<12x12x128xf32>
    %201 = arith.mulf %200, %199 : vector<12x12x128xf32>
    %202 = arith.addf %197, %201 : vector<12x12x128xf32>
    %c39 = arith.constant 39 : index
    %203 = memref.load %arg2[%c39] : memref<75xf32, #tpu.memory_space<smem>>
    %c2_120 = arith.constant 2 : index
    %c4_121 = arith.constant 4 : index
    %c0_122 = arith.constant 0 : index
    %204 = vector.load %arg1[%c2_120, %c4_121, %c0_122] : memref<16x16x128xf32, #tpu.memory_space<vmem>>, vector<12x12x128xf32>
    %205 = vector.broadcast %203 : f32 to vector<12x12x128xf32>
    %206 = arith.mulf %205, %204 : vector<12x12x128xf32>
    %207 = arith.addf %202, %206 : vector<12x12x128xf32>
    %c40 = arith.constant 40 : index
    %208 = memref.load %arg2[%c40] : memref<75xf32, #tpu.memory_space<smem>>
    %c3_123 = arith.constant 3 : index
    %c0_124 = arith.constant 0 : index
    %c0_125 = arith.constant 0 : index
    %209 = vector.load %arg1[%c3_123, %c0_124, %c0_125] : memref<16x16x128xf32, #tpu.memory_space<vmem>>, vector<12x12x128xf32>
    %210 = vector.broadcast %208 : f32 to vector<12x12x128xf32>
    %211 = arith.mulf %210, %209 : vector<12x12x128xf32>
    %212 = arith.addf %207, %211 : vector<12x12x128xf32>
    %c41 = arith.constant 41 : index
    %213 = memref.load %arg2[%c41] : memref<75xf32, #tpu.memory_space<smem>>
    %c3_126 = arith.constant 3 : index
    %c1_127 = arith.constant 1 : index
    %c0_128 = arith.constant 0 : index
    %214 = vector.load %arg1[%c3_126, %c1_127, %c0_128] : memref<16x16x128xf32, #tpu.memory_space<vmem>>, vector<12x12x128xf32>
    %215 = vector.broadcast %213 : f32 to vector<12x12x128xf32>
    %216 = arith.mulf %215, %214 : vector<12x12x128xf32>
    %217 = arith.addf %212, %216 : vector<12x12x128xf32>
    %c42 = arith.constant 42 : index
    %218 = memref.load %arg2[%c42] : memref<75xf32, #tpu.memory_space<smem>>
    %c3_129 = arith.constant 3 : index
    %c2_130 = arith.constant 2 : index
    %c0_131 = arith.constant 0 : index
    %219 = vector.load %arg1[%c3_129, %c2_130, %c0_131] : memref<16x16x128xf32, #tpu.memory_space<vmem>>, vector<12x12x128xf32>
    %220 = vector.broadcast %218 : f32 to vector<12x12x128xf32>
    %221 = arith.mulf %220, %219 : vector<12x12x128xf32>
    %222 = arith.addf %217, %221 : vector<12x12x128xf32>
    %c43 = arith.constant 43 : index
    %223 = memref.load %arg2[%c43] : memref<75xf32, #tpu.memory_space<smem>>
    %c3_132 = arith.constant 3 : index
    %c3_133 = arith.constant 3 : index
    %c0_134 = arith.constant 0 : index
    %224 = vector.load %arg1[%c3_132, %c3_133, %c0_134] : memref<16x16x128xf32, #tpu.memory_space<vmem>>, vector<12x12x128xf32>
    %225 = vector.broadcast %223 : f32 to vector<12x12x128xf32>
    %226 = arith.mulf %225, %224 : vector<12x12x128xf32>
    %227 = arith.addf %222, %226 : vector<12x12x128xf32>
    %c44 = arith.constant 44 : index
    %228 = memref.load %arg2[%c44] : memref<75xf32, #tpu.memory_space<smem>>
    %c3_135 = arith.constant 3 : index
    %c4_136 = arith.constant 4 : index
    %c0_137 = arith.constant 0 : index
    %229 = vector.load %arg1[%c3_135, %c4_136, %c0_137] : memref<16x16x128xf32, #tpu.memory_space<vmem>>, vector<12x12x128xf32>
    %230 = vector.broadcast %228 : f32 to vector<12x12x128xf32>
    %231 = arith.mulf %230, %229 : vector<12x12x128xf32>
    %232 = arith.addf %227, %231 : vector<12x12x128xf32>
    %c45 = arith.constant 45 : index
    %233 = memref.load %arg2[%c45] : memref<75xf32, #tpu.memory_space<smem>>
    %c4_138 = arith.constant 4 : index
    %c0_139 = arith.constant 0 : index
    %c0_140 = arith.constant 0 : index
    %234 = vector.load %arg1[%c4_138, %c0_139, %c0_140] : memref<16x16x128xf32, #tpu.memory_space<vmem>>, vector<12x12x128xf32>
    %235 = vector.broadcast %233 : f32 to vector<12x12x128xf32>
    %236 = arith.mulf %235, %234 : vector<12x12x128xf32>
    %237 = arith.addf %232, %236 : vector<12x12x128xf32>
    %c46 = arith.constant 46 : index
    %238 = memref.load %arg2[%c46] : memref<75xf32, #tpu.memory_space<smem>>
    %c4_141 = arith.constant 4 : index
    %c1_142 = arith.constant 1 : index
    %c0_143 = arith.constant 0 : index
    %239 = vector.load %arg1[%c4_141, %c1_142, %c0_143] : memref<16x16x128xf32, #tpu.memory_space<vmem>>, vector<12x12x128xf32>
    %240 = vector.broadcast %238 : f32 to vector<12x12x128xf32>
    %241 = arith.mulf %240, %239 : vector<12x12x128xf32>
    %242 = arith.addf %237, %241 : vector<12x12x128xf32>
    %c47 = arith.constant 47 : index
    %243 = memref.load %arg2[%c47] : memref<75xf32, #tpu.memory_space<smem>>
    %c4_144 = arith.constant 4 : index
    %c2_145 = arith.constant 2 : index
    %c0_146 = arith.constant 0 : index
    %244 = vector.load %arg1[%c4_144, %c2_145, %c0_146] : memref<16x16x128xf32, #tpu.memory_space<vmem>>, vector<12x12x128xf32>
    %245 = vector.broadcast %243 : f32 to vector<12x12x128xf32>
    %246 = arith.mulf %245, %244 : vector<12x12x128xf32>
    %247 = arith.addf %242, %246 : vector<12x12x128xf32>
    %c48 = arith.constant 48 : index
    %248 = memref.load %arg2[%c48] : memref<75xf32, #tpu.memory_space<smem>>
    %c4_147 = arith.constant 4 : index
    %c3_148 = arith.constant 3 : index
    %c0_149 = arith.constant 0 : index
    %249 = vector.load %arg1[%c4_147, %c3_148, %c0_149] : memref<16x16x128xf32, #tpu.memory_space<vmem>>, vector<12x12x128xf32>
    %250 = vector.broadcast %248 : f32 to vector<12x12x128xf32>
    %251 = arith.mulf %250, %249 : vector<12x12x128xf32>
    %252 = arith.addf %247, %251 : vector<12x12x128xf32>
    %c49 = arith.constant 49 : index
    %253 = memref.load %arg2[%c49] : memref<75xf32, #tpu.memory_space<smem>>
    %c4_150 = arith.constant 4 : index
    %c4_151 = arith.constant 4 : index
    %c0_152 = arith.constant 0 : index
    %254 = vector.load %arg1[%c4_150, %c4_151, %c0_152] : memref<16x16x128xf32, #tpu.memory_space<vmem>>, vector<12x12x128xf32>
    %255 = vector.broadcast %253 : f32 to vector<12x12x128xf32>
    %256 = arith.mulf %255, %254 : vector<12x12x128xf32>
    %257 = arith.addf %252, %256 : vector<12x12x128xf32>
    %258 = math.tanh %257 : vector<12x12x128xf32>
    %cst_153 = arith.constant dense<0xFF800000> : vector<12x128xf32>
    %259 = vector.multi_reduction <maximumf>, %258, %cst_153 [0] : vector<12x12x128xf32> to vector<12x128xf32>
    %cst_154 = arith.constant dense<0xFF800000> : vector<128xf32>
    %260 = vector.multi_reduction <maximumf>, %259, %cst_154 [0] : vector<12x128xf32> to vector<128xf32>
    %261 = vector.shape_cast %260 : vector<128xf32> to vector<1x128xf32>
    %c2_155 = arith.constant 2 : index
    %262 = memref.load %arg3[%c2_155] : memref<3xf32, #tpu.memory_space<smem>>
    %263 = vector.broadcast %262 : f32 to vector<12x12x128xf32>
    %c50 = arith.constant 50 : index
    %264 = memref.load %arg2[%c50] : memref<75xf32, #tpu.memory_space<smem>>
    %c0_156 = arith.constant 0 : index
    %c0_157 = arith.constant 0 : index
    %c0_158 = arith.constant 0 : index
    %265 = vector.load %arg1[%c0_156, %c0_157, %c0_158] : memref<16x16x128xf32, #tpu.memory_space<vmem>>, vector<12x12x128xf32>
    %266 = vector.broadcast %264 : f32 to vector<12x12x128xf32>
    %267 = arith.mulf %266, %265 : vector<12x12x128xf32>
    %268 = arith.addf %263, %267 : vector<12x12x128xf32>
    %c51 = arith.constant 51 : index
    %269 = memref.load %arg2[%c51] : memref<75xf32, #tpu.memory_space<smem>>
    %c0_159 = arith.constant 0 : index
    %c1_160 = arith.constant 1 : index
    %c0_161 = arith.constant 0 : index
    %270 = vector.load %arg1[%c0_159, %c1_160, %c0_161] : memref<16x16x128xf32, #tpu.memory_space<vmem>>, vector<12x12x128xf32>
    %271 = vector.broadcast %269 : f32 to vector<12x12x128xf32>
    %272 = arith.mulf %271, %270 : vector<12x12x128xf32>
    %273 = arith.addf %268, %272 : vector<12x12x128xf32>
    %c52 = arith.constant 52 : index
    %274 = memref.load %arg2[%c52] : memref<75xf32, #tpu.memory_space<smem>>
    %c0_162 = arith.constant 0 : index
    %c2_163 = arith.constant 2 : index
    %c0_164 = arith.constant 0 : index
    %275 = vector.load %arg1[%c0_162, %c2_163, %c0_164] : memref<16x16x128xf32, #tpu.memory_space<vmem>>, vector<12x12x128xf32>
    %276 = vector.broadcast %274 : f32 to vector<12x12x128xf32>
    %277 = arith.mulf %276, %275 : vector<12x12x128xf32>
    %278 = arith.addf %273, %277 : vector<12x12x128xf32>
    %c53 = arith.constant 53 : index
    %279 = memref.load %arg2[%c53] : memref<75xf32, #tpu.memory_space<smem>>
    %c0_165 = arith.constant 0 : index
    %c3_166 = arith.constant 3 : index
    %c0_167 = arith.constant 0 : index
    %280 = vector.load %arg1[%c0_165, %c3_166, %c0_167] : memref<16x16x128xf32, #tpu.memory_space<vmem>>, vector<12x12x128xf32>
    %281 = vector.broadcast %279 : f32 to vector<12x12x128xf32>
    %282 = arith.mulf %281, %280 : vector<12x12x128xf32>
    %283 = arith.addf %278, %282 : vector<12x12x128xf32>
    %c54 = arith.constant 54 : index
    %284 = memref.load %arg2[%c54] : memref<75xf32, #tpu.memory_space<smem>>
    %c0_168 = arith.constant 0 : index
    %c4_169 = arith.constant 4 : index
    %c0_170 = arith.constant 0 : index
    %285 = vector.load %arg1[%c0_168, %c4_169, %c0_170] : memref<16x16x128xf32, #tpu.memory_space<vmem>>, vector<12x12x128xf32>
    %286 = vector.broadcast %284 : f32 to vector<12x12x128xf32>
    %287 = arith.mulf %286, %285 : vector<12x12x128xf32>
    %288 = arith.addf %283, %287 : vector<12x12x128xf32>
    %c55 = arith.constant 55 : index
    %289 = memref.load %arg2[%c55] : memref<75xf32, #tpu.memory_space<smem>>
    %c1_171 = arith.constant 1 : index
    %c0_172 = arith.constant 0 : index
    %c0_173 = arith.constant 0 : index
    %290 = vector.load %arg1[%c1_171, %c0_172, %c0_173] : memref<16x16x128xf32, #tpu.memory_space<vmem>>, vector<12x12x128xf32>
    %291 = vector.broadcast %289 : f32 to vector<12x12x128xf32>
    %292 = arith.mulf %291, %290 : vector<12x12x128xf32>
    %293 = arith.addf %288, %292 : vector<12x12x128xf32>
    %c56 = arith.constant 56 : index
    %294 = memref.load %arg2[%c56] : memref<75xf32, #tpu.memory_space<smem>>
    %c1_174 = arith.constant 1 : index
    %c1_175 = arith.constant 1 : index
    %c0_176 = arith.constant 0 : index
    %295 = vector.load %arg1[%c1_174, %c1_175, %c0_176] : memref<16x16x128xf32, #tpu.memory_space<vmem>>, vector<12x12x128xf32>
    %296 = vector.broadcast %294 : f32 to vector<12x12x128xf32>
    %297 = arith.mulf %296, %295 : vector<12x12x128xf32>
    %298 = arith.addf %293, %297 : vector<12x12x128xf32>
    %c57 = arith.constant 57 : index
    %299 = memref.load %arg2[%c57] : memref<75xf32, #tpu.memory_space<smem>>
    %c1_177 = arith.constant 1 : index
    %c2_178 = arith.constant 2 : index
    %c0_179 = arith.constant 0 : index
    %300 = vector.load %arg1[%c1_177, %c2_178, %c0_179] : memref<16x16x128xf32, #tpu.memory_space<vmem>>, vector<12x12x128xf32>
    %301 = vector.broadcast %299 : f32 to vector<12x12x128xf32>
    %302 = arith.mulf %301, %300 : vector<12x12x128xf32>
    %303 = arith.addf %298, %302 : vector<12x12x128xf32>
    %c58 = arith.constant 58 : index
    %304 = memref.load %arg2[%c58] : memref<75xf32, #tpu.memory_space<smem>>
    %c1_180 = arith.constant 1 : index
    %c3_181 = arith.constant 3 : index
    %c0_182 = arith.constant 0 : index
    %305 = vector.load %arg1[%c1_180, %c3_181, %c0_182] : memref<16x16x128xf32, #tpu.memory_space<vmem>>, vector<12x12x128xf32>
    %306 = vector.broadcast %304 : f32 to vector<12x12x128xf32>
    %307 = arith.mulf %306, %305 : vector<12x12x128xf32>
    %308 = arith.addf %303, %307 : vector<12x12x128xf32>
    %c59 = arith.constant 59 : index
    %309 = memref.load %arg2[%c59] : memref<75xf32, #tpu.memory_space<smem>>
    %c1_183 = arith.constant 1 : index
    %c4_184 = arith.constant 4 : index
    %c0_185 = arith.constant 0 : index
    %310 = vector.load %arg1[%c1_183, %c4_184, %c0_185] : memref<16x16x128xf32, #tpu.memory_space<vmem>>, vector<12x12x128xf32>
    %311 = vector.broadcast %309 : f32 to vector<12x12x128xf32>
    %312 = arith.mulf %311, %310 : vector<12x12x128xf32>
    %313 = arith.addf %308, %312 : vector<12x12x128xf32>
    %c60 = arith.constant 60 : index
    %314 = memref.load %arg2[%c60] : memref<75xf32, #tpu.memory_space<smem>>
    %c2_186 = arith.constant 2 : index
    %c0_187 = arith.constant 0 : index
    %c0_188 = arith.constant 0 : index
    %315 = vector.load %arg1[%c2_186, %c0_187, %c0_188] : memref<16x16x128xf32, #tpu.memory_space<vmem>>, vector<12x12x128xf32>
    %316 = vector.broadcast %314 : f32 to vector<12x12x128xf32>
    %317 = arith.mulf %316, %315 : vector<12x12x128xf32>
    %318 = arith.addf %313, %317 : vector<12x12x128xf32>
    %c61 = arith.constant 61 : index
    %319 = memref.load %arg2[%c61] : memref<75xf32, #tpu.memory_space<smem>>
    %c2_189 = arith.constant 2 : index
    %c1_190 = arith.constant 1 : index
    %c0_191 = arith.constant 0 : index
    %320 = vector.load %arg1[%c2_189, %c1_190, %c0_191] : memref<16x16x128xf32, #tpu.memory_space<vmem>>, vector<12x12x128xf32>
    %321 = vector.broadcast %319 : f32 to vector<12x12x128xf32>
    %322 = arith.mulf %321, %320 : vector<12x12x128xf32>
    %323 = arith.addf %318, %322 : vector<12x12x128xf32>
    %c62 = arith.constant 62 : index
    %324 = memref.load %arg2[%c62] : memref<75xf32, #tpu.memory_space<smem>>
    %c2_192 = arith.constant 2 : index
    %c2_193 = arith.constant 2 : index
    %c0_194 = arith.constant 0 : index
    %325 = vector.load %arg1[%c2_192, %c2_193, %c0_194] : memref<16x16x128xf32, #tpu.memory_space<vmem>>, vector<12x12x128xf32>
    %326 = vector.broadcast %324 : f32 to vector<12x12x128xf32>
    %327 = arith.mulf %326, %325 : vector<12x12x128xf32>
    %328 = arith.addf %323, %327 : vector<12x12x128xf32>
    %c63 = arith.constant 63 : index
    %329 = memref.load %arg2[%c63] : memref<75xf32, #tpu.memory_space<smem>>
    %c2_195 = arith.constant 2 : index
    %c3_196 = arith.constant 3 : index
    %c0_197 = arith.constant 0 : index
    %330 = vector.load %arg1[%c2_195, %c3_196, %c0_197] : memref<16x16x128xf32, #tpu.memory_space<vmem>>, vector<12x12x128xf32>
    %331 = vector.broadcast %329 : f32 to vector<12x12x128xf32>
    %332 = arith.mulf %331, %330 : vector<12x12x128xf32>
    %333 = arith.addf %328, %332 : vector<12x12x128xf32>
    %c64 = arith.constant 64 : index
    %334 = memref.load %arg2[%c64] : memref<75xf32, #tpu.memory_space<smem>>
    %c2_198 = arith.constant 2 : index
    %c4_199 = arith.constant 4 : index
    %c0_200 = arith.constant 0 : index
    %335 = vector.load %arg1[%c2_198, %c4_199, %c0_200] : memref<16x16x128xf32, #tpu.memory_space<vmem>>, vector<12x12x128xf32>
    %336 = vector.broadcast %334 : f32 to vector<12x12x128xf32>
    %337 = arith.mulf %336, %335 : vector<12x12x128xf32>
    %338 = arith.addf %333, %337 : vector<12x12x128xf32>
    %c65 = arith.constant 65 : index
    %339 = memref.load %arg2[%c65] : memref<75xf32, #tpu.memory_space<smem>>
    %c3_201 = arith.constant 3 : index
    %c0_202 = arith.constant 0 : index
    %c0_203 = arith.constant 0 : index
    %340 = vector.load %arg1[%c3_201, %c0_202, %c0_203] : memref<16x16x128xf32, #tpu.memory_space<vmem>>, vector<12x12x128xf32>
    %341 = vector.broadcast %339 : f32 to vector<12x12x128xf32>
    %342 = arith.mulf %341, %340 : vector<12x12x128xf32>
    %343 = arith.addf %338, %342 : vector<12x12x128xf32>
    %c66 = arith.constant 66 : index
    %344 = memref.load %arg2[%c66] : memref<75xf32, #tpu.memory_space<smem>>
    %c3_204 = arith.constant 3 : index
    %c1_205 = arith.constant 1 : index
    %c0_206 = arith.constant 0 : index
    %345 = vector.load %arg1[%c3_204, %c1_205, %c0_206] : memref<16x16x128xf32, #tpu.memory_space<vmem>>, vector<12x12x128xf32>
    %346 = vector.broadcast %344 : f32 to vector<12x12x128xf32>
    %347 = arith.mulf %346, %345 : vector<12x12x128xf32>
    %348 = arith.addf %343, %347 : vector<12x12x128xf32>
    %c67 = arith.constant 67 : index
    %349 = memref.load %arg2[%c67] : memref<75xf32, #tpu.memory_space<smem>>
    %c3_207 = arith.constant 3 : index
    %c2_208 = arith.constant 2 : index
    %c0_209 = arith.constant 0 : index
    %350 = vector.load %arg1[%c3_207, %c2_208, %c0_209] : memref<16x16x128xf32, #tpu.memory_space<vmem>>, vector<12x12x128xf32>
    %351 = vector.broadcast %349 : f32 to vector<12x12x128xf32>
    %352 = arith.mulf %351, %350 : vector<12x12x128xf32>
    %353 = arith.addf %348, %352 : vector<12x12x128xf32>
    %c68 = arith.constant 68 : index
    %354 = memref.load %arg2[%c68] : memref<75xf32, #tpu.memory_space<smem>>
    %c3_210 = arith.constant 3 : index
    %c3_211 = arith.constant 3 : index
    %c0_212 = arith.constant 0 : index
    %355 = vector.load %arg1[%c3_210, %c3_211, %c0_212] : memref<16x16x128xf32, #tpu.memory_space<vmem>>, vector<12x12x128xf32>
    %356 = vector.broadcast %354 : f32 to vector<12x12x128xf32>
    %357 = arith.mulf %356, %355 : vector<12x12x128xf32>
    %358 = arith.addf %353, %357 : vector<12x12x128xf32>
    %c69 = arith.constant 69 : index
    %359 = memref.load %arg2[%c69] : memref<75xf32, #tpu.memory_space<smem>>
    %c3_213 = arith.constant 3 : index
    %c4_214 = arith.constant 4 : index
    %c0_215 = arith.constant 0 : index
    %360 = vector.load %arg1[%c3_213, %c4_214, %c0_215] : memref<16x16x128xf32, #tpu.memory_space<vmem>>, vector<12x12x128xf32>
    %361 = vector.broadcast %359 : f32 to vector<12x12x128xf32>
    %362 = arith.mulf %361, %360 : vector<12x12x128xf32>
    %363 = arith.addf %358, %362 : vector<12x12x128xf32>
    %c70 = arith.constant 70 : index
    %364 = memref.load %arg2[%c70] : memref<75xf32, #tpu.memory_space<smem>>
    %c4_216 = arith.constant 4 : index
    %c0_217 = arith.constant 0 : index
    %c0_218 = arith.constant 0 : index
    %365 = vector.load %arg1[%c4_216, %c0_217, %c0_218] : memref<16x16x128xf32, #tpu.memory_space<vmem>>, vector<12x12x128xf32>
    %366 = vector.broadcast %364 : f32 to vector<12x12x128xf32>
    %367 = arith.mulf %366, %365 : vector<12x12x128xf32>
    %368 = arith.addf %363, %367 : vector<12x12x128xf32>
    %c71 = arith.constant 71 : index
    %369 = memref.load %arg2[%c71] : memref<75xf32, #tpu.memory_space<smem>>
    %c4_219 = arith.constant 4 : index
    %c1_220 = arith.constant 1 : index
    %c0_221 = arith.constant 0 : index
    %370 = vector.load %arg1[%c4_219, %c1_220, %c0_221] : memref<16x16x128xf32, #tpu.memory_space<vmem>>, vector<12x12x128xf32>
    %371 = vector.broadcast %369 : f32 to vector<12x12x128xf32>
    %372 = arith.mulf %371, %370 : vector<12x12x128xf32>
    %373 = arith.addf %368, %372 : vector<12x12x128xf32>
    %c72 = arith.constant 72 : index
    %374 = memref.load %arg2[%c72] : memref<75xf32, #tpu.memory_space<smem>>
    %c4_222 = arith.constant 4 : index
    %c2_223 = arith.constant 2 : index
    %c0_224 = arith.constant 0 : index
    %375 = vector.load %arg1[%c4_222, %c2_223, %c0_224] : memref<16x16x128xf32, #tpu.memory_space<vmem>>, vector<12x12x128xf32>
    %376 = vector.broadcast %374 : f32 to vector<12x12x128xf32>
    %377 = arith.mulf %376, %375 : vector<12x12x128xf32>
    %378 = arith.addf %373, %377 : vector<12x12x128xf32>
    %c73 = arith.constant 73 : index
    %379 = memref.load %arg2[%c73] : memref<75xf32, #tpu.memory_space<smem>>
    %c4_225 = arith.constant 4 : index
    %c3_226 = arith.constant 3 : index
    %c0_227 = arith.constant 0 : index
    %380 = vector.load %arg1[%c4_225, %c3_226, %c0_227] : memref<16x16x128xf32, #tpu.memory_space<vmem>>, vector<12x12x128xf32>
    %381 = vector.broadcast %379 : f32 to vector<12x12x128xf32>
    %382 = arith.mulf %381, %380 : vector<12x12x128xf32>
    %383 = arith.addf %378, %382 : vector<12x12x128xf32>
    %c74 = arith.constant 74 : index
    %384 = memref.load %arg2[%c74] : memref<75xf32, #tpu.memory_space<smem>>
    %c4_228 = arith.constant 4 : index
    %c4_229 = arith.constant 4 : index
    %c0_230 = arith.constant 0 : index
    %385 = vector.load %arg1[%c4_228, %c4_229, %c0_230] : memref<16x16x128xf32, #tpu.memory_space<vmem>>, vector<12x12x128xf32>
    %386 = vector.broadcast %384 : f32 to vector<12x12x128xf32>
    %387 = arith.mulf %386, %385 : vector<12x12x128xf32>
    %388 = arith.addf %383, %387 : vector<12x12x128xf32>
    %389 = math.tanh %388 : vector<12x12x128xf32>
    %cst_231 = arith.constant dense<0xFF800000> : vector<12x128xf32>
    %390 = vector.multi_reduction <maximumf>, %389, %cst_231 [0] : vector<12x12x128xf32> to vector<12x128xf32>
    %cst_232 = arith.constant dense<0xFF800000> : vector<128xf32>
    %391 = vector.multi_reduction <maximumf>, %390, %cst_232 [0] : vector<12x128xf32> to vector<128xf32>
    %392 = vector.shape_cast %391 : vector<128xf32> to vector<1x128xf32>
    %393 = tpu.concatenate %130, %261, %392 in 0 : vector<1x128xf32>, vector<1x128xf32>, vector<1x128xf32> -> vector<3x128xf32>
    %cst_233 = arith.constant dense<0xFF800000> : vector<128xf32>
    %394 = vector.multi_reduction <maximumf>, %393, %cst_233 [0] : vector<3x128xf32> to vector<128xf32>
    %395 = vector.shape_cast %394 : vector<128xf32> to vector<1x128xf32>
    %396 = vector.broadcast %395 : vector<1x128xf32> to vector<3x128xf32>
    %397 = arith.subf %393, %396 : vector<3x128xf32>
    %398 = math.exp %397 : vector<3x128xf32>
    %cst_234 = arith.constant dense<0.000000e+00> : vector<128xf32>
    %399 = vector.multi_reduction <add>, %398, %cst_234 [0] : vector<3x128xf32> to vector<128xf32>
    %400 = vector.shape_cast %399 : vector<128xf32> to vector<1x128xf32>
    %401 = tpu.reciprocal %400 {approx = true} : vector<1x128xf32> -> vector<1x128xf32>
    %402 = vector.broadcast %401 : vector<1x128xf32> to vector<3x128xf32>
    %403 = arith.mulf %398, %402 : vector<3x128xf32>
    %c0_235 = arith.constant 0 : index
    %c0_236 = arith.constant 0 : index
    %404 = vector.load %arg4[%c0_235, %c0_236] : memref<3x128xf32, #tpu.memory_space<vmem>>, vector<3x128xf32>
    tpu.vector_store %arg4[%c0_235, %c0_236], %403 {strides = array<i32>} : memref<3x128xf32, #tpu.memory_space<vmem>>, vector<3x128xf32>,
    return
  }
  func.func @transform_0(%arg0: i32) -> (i32, i32, i32) {
    %c0_i32 = arith.constant 0 : i32
    %c0_i32_0 = arith.constant 0 : i32
    %c0_i32_1 = arith.constant 0 : i32
    return %c0_i32, %c0_i32_0, %arg0 : i32, i32, i32
  }
  func.func @transform_1(%arg0: i32) -> i32 {
    %c0_i32 = arith.constant 0 : i32
    %c0_i32_0 = arith.constant 0 : i32
    return %c0_i32 : i32
  }
  func.func @transform_2(%arg0: i32) -> i32 {
    %c0_i32 = arith.constant 0 : i32
    %c0_i32_0 = arith.constant 0 : i32
    return %c0_i32 : i32
  }
  func.func @transform_3(%arg0: i32) -> (i32, i32) {
    %c0_i32 = arith.constant 0 : i32
    %c0_i32_0 = arith.constant 0 : i32
    return %c0_i32, %arg0 : i32, i32
  }
}

</mosaic_0001>

<llo_original>
// kernel: tpu_custom_call.1
$region0: #{tpu_custom_call.1}
  #allocation0 [shape = 'u32[]', space=smem, size = 0x4, offset = 0x4, fixed_abs, tag = 'smem constant byte address 0x4 - core index']
  #allocation1 [shape = 'u32[144,128]{1,0:T(1,128)}', space=vmem, size = 0x12000, scoped, tag = 'internal scratch']
  %s0 = inlined_call_operand.hbm [shape: f32[16,16,128], index: 0, kind: input, shape index: {}]
  %s1 = inlined_call_operand.vmem [shape: f32[75], index: 1, kind: input, shape index: {}]
  %s2 = inlined_call_operand.vmem [shape: f32[3], index: 2, kind: input, shape index: {}]
  %s3 = inlined_call_operand.hbm [shape: f32[3,128], index: 3, kind: output, shape index: {}]
  %s4 = sld [smem:[#allocation0]]
  $region34: #{tpu_custom_call.1} parent=0
    _
  %s6 = ssub.s32 1, %s4
  %s7 = scalar_select 0, %s6, %s4
  $region1: #{tpu_custom_call.1} parent=0
    #allocation2 [shape = 'u8[131072]{0}', space=vmem, size = 0x20000, scoped, tag = 'input window, operand 0, single buffered']
    #allocation3 [shape = 's32[1]{0}', space=sflag, size = 0x4, scoped, tag = 'scoped memory for tpu_custom_call.1']
    #allocation4 [shape = 's32[1]{0}', space=sflag, size = 0x4, scoped, tag = 'scoped memory for tpu_custom_call.1']
    #allocation5 [shape = 's32[1]{0}', space=sflag, size = 0x4, scoped, tag = 'scoped memory for tpu_custom_call.1']
    #allocation6 [shape = 'u8[512]{0}', space=smem, size = 0x200, scoped, tag = 'input window, operand 1, single buffered']
    #allocation7 [shape = 'u8[512]{0}', space=smem, size = 0x200, scoped, tag = 'input window, operand 2, single buffered']
    #allocation8 [shape = 's32[1]{0}', space=sflag, size = 0x4, scoped, tag = 'scoped memory for tpu_custom_call.1']
    #allocation9 [shape = 'u8[2048]{0}', space=vmem, size = 0x800, scoped, tag = 'output window, operand 0, single buffered']
    %8 = vsyncpa [#allocation3], 0
    %9 = vsyncpa [#allocation5], 0
    %10 = vsyncpa [#allocation8], 0
    %11 = vsyncpa [#allocation4], 0
    // Predicated region
    $region2: #{tpu_custom_call.1} parent=1 // pred_check
      _
    $region3: #{tpu_custom_call.1} parent=1 // pred_check_branch
      %13 = sbr.rel (0) target = $region5
    $region4: #{tpu_custom_call.1} parent=1 // pred_region
      %s15 = ssub.s32 4096, 4096
      %16 = vsyncadd [#allocation3], %s15
      %s17 = sshll.u32 [#allocation2], 4
      %s18 = int_to_ptr.vmem [resolvable:$true] %s17
      %23 = dma.hbm_to_vmem [thread:$0]  %s0, 4096, %s18, [#allocation3], 128, 128, 8
    $region5: #{tpu_custom_call.1} parent=1 // pred_fallthru
      _
    // Predicated region
    $region6: #{tpu_custom_call.1} parent=1 // pred_check
      _
    $region7: #{tpu_custom_call.1} parent=1 // pred_check_branch
      %25 = sbr.rel (0) target = $region9
    $region8: #{tpu_custom_call.1} parent=1 // pred_region
      %s27 = ssub.s32 16, 16
      %28 = vsyncadd [#allocation5], %s27
      %s30 = sshll.u32 %s1, 4
      %s31 = int_to_ptr.vmem [resolvable:$true] %s30
      %33 = dma.vmem_to_smem %s31, 16, [#allocation6], [#allocation5]
    $region9: #{tpu_custom_call.1} parent=1 // pred_fallthru
      _
    // Predicated region
    $region10: #{tpu_custom_call.1} parent=1 // pred_check
      _
    $region11: #{tpu_custom_call.1} parent=1 // pred_check_branch
      %35 = sbr.rel (0) target = $region13
    $region12: #{tpu_custom_call.1} parent=1 // pred_region
      %s37 = ssub.s32 16, 16
      %38 = vsyncadd [#allocation8], %s37
      %s40 = sshll.u32 %s2, 4
      %s41 = int_to_ptr.vmem [resolvable:$true] %s40
      %43 = dma.vmem_to_smem %s41, 16, [#allocation7], [#allocation8]
    $region13: #{tpu_custom_call.1} parent=1 // pred_fallthru
      _
    // Predicated region
    $region14: #{tpu_custom_call.1} parent=1 // pred_check
      _
    $region15: #{tpu_custom_call.1} parent=1 // pred_check_branch
      %45 = sbr.rel (0) target = $region17
    $region16: #{tpu_custom_call.1} parent=1 // pred_region
      %46 = dma.done [#allocation3], 4096
    $region17: #{tpu_custom_call.1} parent=1 // pred_fallthru
      _
    // Predicated region
    $region18: #{tpu_custom_call.1} parent=1 // pred_check
      _
    $region19: #{tpu_custom_call.1} parent=1 // pred_check_branch
      %48 = sbr.rel (0) target = $region21
    $region20: #{tpu_custom_call.1} parent=1 // pred_region
      %49 = dma.done [#allocation5], 16
    $region21: #{tpu_custom_call.1} parent=1 // pred_fallthru
      _
    // Predicated region
    $region22: #{tpu_custom_call.1} parent=1 // pred_check
      _
    $region23: #{tpu_custom_call.1} parent=1 // pred_check_branch
      %51 = sbr.rel (0) target = $region25
    $region24: #{tpu_custom_call.1} parent=1 // pred_region
      %52 = dma.done [#allocation8], 16
    $region25: #{tpu_custom_call.1} parent=1 // pred_fallthru
      _
    %53 = sfence
    %s54 = sld [smem:[#allocation7]]
    %v55 = vstv %s54
    %s56 = sld [smem:[#allocation6]]
    %v57 = vld [vmem:[#allocation2] sm:$0xff]
    %v58 = vld [vmem:[#allocation2 + $0x8] sm:$0xf]
    %v59 = vld [vmem:[#allocation2 + $0x10] sm:$0xff]
    %v60 = vld [vmem:[#allocation2 + $0x18] sm:$0xf]
    %v61 = vld [vmem:[#allocation2 + $0x20] sm:$0xff]
    %v62 = vld [vmem:[#allocation2 + $0x28] sm:$0xf]
    %v63 = vld [vmem:[#allocation2 + $0x30] sm:$0xff]
    %v64 = vld [vmem:[#allocation2 + $0x38] sm:$0xf]
    %v65 = vld [vmem:[#allocation2 + $0x40] sm:$0xff]
    %v66 = vld [vmem:[#allocation2 + $0x48] sm:$0xf]
    %v67 = vld [vmem:[#allocation2 + $0x50] sm:$0xff]
    %v68 = vld [vmem:[#allocation2 + $0x58] sm:$0xf]
    %v69 = vld [vmem:[#allocation2 + $0x60] sm:$0xff]
    %v70 = vld [vmem:[#allocation2 + $0x68] sm:$0xf]
    %v71 = vld [vmem:[#allocation2 + $0x70] sm:$0xff]
    %v72 = vld [vmem:[#allocation2 + $0x78] sm:$0xf]
    %v73 = vld [vmem:[#allocation2 + $0x80] sm:$0xff]
    %v74 = vld [vmem:[#allocation2 + $0x88] sm:$0xf]
    %v75 = vld [vmem:[#allocation2 + $0x90] sm:$0xff]
    %v76 = vld [vmem:[#allocation2 + $0x98] sm:$0xf]
    %v77 = vld [vmem:[#allocation2 + $0xa0] sm:$0xff]
    %v78 = vld [vmem:[#allocation2 + $0xa8] sm:$0xf]
    %v79 = vld [vmem:[#allocation2 + $0xb0] sm:$0xff]
    %v80 = vld [vmem:[#allocation2 + $0xb8] sm:$0xf]
    %v81 = vstv %s56
    %v82 = vmul.f32 %v81, %v57
    %v83 = vmul.f32 %v81, %v58
    %v84 = vmul.f32 %v81, %v59
    %v85 = vmul.f32 %v81, %v60
    %v86 = vmul.f32 %v81, %v61
    %v87 = vmul.f32 %v81, %v62
    %v88 = vmul.f32 %v81, %v63
    %v89 = vmul.f32 %v81, %v64
    %v90 = vmul.f32 %v81, %v65
    %v91 = vmul.f32 %v81, %v66
    %v92 = vmul.f32 %v81, %v67
    %v93 = vmul.f32 %v81, %v68
    %v94 = vmul.f32 %v81, %v69
    %v95 = vmul.f32 %v81, %v70
    %v96 = vmul.f32 %v81, %v71
    %v97 = vmul.f32 %v81, %v72
    %v98 = vmul.f32 %v81, %v73
    %v99 = vmul.f32 %v81, %v74
    %v100 = vmul.f32 %v81, %v75
    %v101 = vmul.f32 %v81, %v76
    %v102 = vmul.f32 %v81, %v77
    %v103 = vmul.f32 %v81, %v78
    %v104 = vmul.f32 %v81, %v79
    %v105 = vmul.f32 %v81, %v80
    %v106 = vadd.f32 %v55, %v82
    %v107 = vadd.f32 %v55, %v83
    %v108 = vadd.f32 %v55, %v84
    %v109 = vadd.f32 %v55, %v85
    %v110 = vadd.f32 %v55, %v86
    %v111 = vadd.f32 %v55, %v87
    %v112 = vadd.f32 %v55, %v88
    %v113 = vadd.f32 %v55, %v89
    %v114 = vadd.f32 %v55, %v90
    %v115 = vadd.f32 %v55, %v91
    %v116 = vadd.f32 %v55, %v92
    %v117 = vadd.f32 %v55, %v93
    %v118 = vadd.f32 %v55, %v94
    %v119 = vadd.f32 %v55, %v95
    %v120 = vadd.f32 %v55, %v96
    %v121 = vadd.f32 %v55, %v97
    %v122 = vadd.f32 %v55, %v98
    %v123 = vadd.f32 %v55, %v99
    %v124 = vadd.f32 %v55, %v100
    %v125 = vadd.f32 %v55, %v101
    %v126 = vadd.f32 %v55, %v102
    %v127 = vadd.f32 %v55, %v103
    %v128 = vadd.f32 %v55, %v104
    %v129 = vadd.f32 %v55, %v105
    %s130 = sld [smem:[#allocation6 + $0x1]]
    %v131 = vld [vmem:[#allocation2 + $0x1] sm:$0xff]
    %v132 = vld [vmem:[#allocation2 + $0x9] sm:$0xf]
    %v133 = vld [vmem:[#allocation2 + $0x11] sm:$0xff]
    %v134 = vld [vmem:[#allocation2 + $0x19] sm:$0xf]
    %v135 = vld [vmem:[#allocation2 + $0x21] sm:$0xff]
    %v136 = vld [vmem:[#allocation2 + $0x29] sm:$0xf]
    %v137 = vld [vmem:[#allocation2 + $0x31] sm:$0xff]
    %v138 = vld [vmem:[#allocation2 + $0x39] sm:$0xf]
    %v139 = vld [vmem:[#allocation2 + $0x41] sm:$0xff]
    %v140 = vld [vmem:[#allocation2 + $0x49] sm:$0xf]
    %v141 = vld [vmem:[#allocation2 + $0x51] sm:$0xff]
    %v142 = vld [vmem:[#allocation2 + $0x59] sm:$0xf]
    %v143 = vld [vmem:[#allocation2 + $0x61] sm:$0xff]
    %v144 = vld [vmem:[#allocation2 + $0x69] sm:$0xf]
    %v145 = vld [vmem:[#allocation2 + $0x71] sm:$0xff]
    %v146 = vld [vmem:[#allocation2 + $0x79] sm:$0xf]
    %v147 = vld [vmem:[#allocation2 + $0x81] sm:$0xff]
    %v148 = vld [vmem:[#allocation2 + $0x89] sm:$0xf]
    %v149 = vld [vmem:[#allocation2 + $0x91] sm:$0xff]
    %v150 = vld [vmem:[#allocation2 + $0x99] sm:$0xf]
    %v151 = vld [vmem:[#allocation2 + $0xa1] sm:$0xff]
    %v152 = vld [vmem:[#allocation2 + $0xa9] sm:$0xf]
    %v153 = vld [vmem:[#allocation2 + $0xb1] sm:$0xff]
    %v154 = vld [vmem:[#allocation2 + $0xb9] sm:$0xf]
    %v155 = vstv %s130
    %v156 = vmul.f32 %v155, %v131
    %v157 = vmul.f32 %v155, %v132
    %v158 = vmul.f32 %v155, %v133
    %v159 = vmul.f32 %v155, %v134
    %v160 = vmul.f32 %v155, %v135
    %v161 = vmul.f32 %v155, %v136
    %v162 = vmul.f32 %v155, %v137
    %v163 = vmul.f32 %v155, %v138
    %v164 = vmul.f32 %v155, %v139
    %v165 = vmul.f32 %v155, %v140
    %v166 = vmul.f32 %v155, %v141
    %v167 = vmul.f32 %v155, %v142
    %v168 = vmul.f32 %v155, %v143
    %v169 = vmul.f32 %v155, %v144
    %v170 = vmul.f32 %v155, %v145
    %v171 = vmul.f32 %v155, %v146
    %v172 = vmul.f32 %v155, %v147
    %v173 = vmul.f32 %v155, %v148
    %v174 = vmul.f32 %v155, %v149
    %v175 = vmul.f32 %v155, %v150
    %v176 = vmul.f32 %v155, %v151
    %v177 = vmul.f32 %v155, %v152
    %v178 = vmul.f32 %v155, %v153
    %v179 = vmul.f32 %v155, %v154
    %v180 = vadd.f32 %v106, %v156
    %v181 = vadd.f32 %v107, %v157
    %v182 = vadd.f32 %v108, %v158
    %v183 = vadd.f32 %v109, %v159
    %v184 = vadd.f32 %v110, %v160
    %v185 = vadd.f32 %v111, %v161
    %v186 = vadd.f32 %v112, %v162
    %v187 = vadd.f32 %v113, %v163
    %v188 = vadd.f32 %v114, %v164
    %v189 = vadd.f32 %v115, %v165
    %v190 = vadd.f32 %v116, %v166
    %v191 = vadd.f32 %v117, %v167
    %v192 = vadd.f32 %v118, %v168
    %v193 = vadd.f32 %v119, %v169
    %v194 = vadd.f32 %v120, %v170
    %v195 = vadd.f32 %v121, %v171
    %v196 = vadd.f32 %v122, %v172
    %v197 = vadd.f32 %v123, %v173
    %v198 = vadd.f32 %v124, %v174
    %v199 = vadd.f32 %v125, %v175
    %v200 = vadd.f32 %v126, %v176
    %v201 = vadd.f32 %v127, %v177
    %v202 = vadd.f32 %v128, %v178
    %v203 = vadd.f32 %v129, %v179
    %s204 = sld [smem:[#allocation6 + $0x2]]
    %v205 = vld [vmem:[#allocation2 + $0x2] sm:$0xff]
    %v206 = vld [vmem:[#allocation2 + $0xa] sm:$0xf]
    %v207 = vld [vmem:[#allocation2 + $0x12] sm:$0xff]
    %v208 = vld [vmem:[#allocation2 + $0x1a] sm:$0xf]
    %v209 = vld [vmem:[#allocation2 + $0x22] sm:$0xff]
    %v210 = vld [vmem:[#allocation2 + $0x2a] sm:$0xf]
    %v211 = vld [vmem:[#allocation2 + $0x32] sm:$0xff]
    %v212 = vld [vmem:[#allocation2 + $0x3a] sm:$0xf]
    %v213 = vld [vmem:[#allocation2 + $0x42] sm:$0xff]
    %v214 = vld [vmem:[#allocation2 + $0x4a] sm:$0xf]
    %v215 = vld [vmem:[#allocation2 + $0x52] sm:$0xff]
    %v216 = vld [vmem:[#allocation2 + $0x5a] sm:$0xf]
    %v217 = vld [vmem:[#allocation2 + $0x62] sm:$0xff]
    %v218 = vld [vmem:[#allocation2 + $0x6a] sm:$0xf]
    %v219 = vld [vmem:[#allocation2 + $0x72] sm:$0xff]
    %v220 = vld [vmem:[#allocation2 + $0x7a] sm:$0xf]
    %v221 = vld [vmem:[#allocation2 + $0x82] sm:$0xff]
    %v222 = vld [vmem:[#allocation2 + $0x8a] sm:$0xf]
    %v223 = vld [vmem:[#allocation2 + $0x92] sm:$0xff]
    %v224 = vld [vmem:[#allocation2 + $0x9a] sm:$0xf]
    %v225 = vld [vmem:[#allocation2 + $0xa2] sm:$0xff]
    %v226 = vld [vmem:[#allocation2 + $0xaa] sm:$0xf]
    %v227 = vld [vmem:[#allocation2 + $0xb2] sm:$0xff]
    %v228 = vld [vmem:[#allocation2 + $0xba] sm:$0xf]
    %v229 = vstv %s204
    %v230 = vmul.f32 %v229, %v205
    %v231 = vmul.f32 %v229, %v206
    %v232 = vmul.f32 %v229, %v207
    %v233 = vmul.f32 %v229, %v208
    %v234 = vmul.f32 %v229, %v209
    %v235 = vmul.f32 %v229, %v210
    %v236 = vmul.f32 %v229, %v211
    %v237 = vmul.f32 %v229, %v212
    %v238 = vmul.f32 %v229, %v213
    %v239 = vmul.f32 %v229, %v214
    %v240 = vmul.f32 %v229, %v215
    %v241 = vmul.f32 %v229, %v216
    %v242 = vmul.f32 %v229, %v217
    %v243 = vmul.f32 %v229, %v218
    %v244 = vmul.f32 %v229, %v219
    %v245 = vmul.f32 %v229, %v220
    %v246 = vmul.f32 %v229, %v221
    %v247 = vmul.f32 %v229, %v222
    %v248 = vmul.f32 %v229, %v223
    %v249 = vmul.f32 %v229, %v224
    %v250 = vmul.f32 %v229, %v225
    %v251 = vmul.f32 %v229, %v226
    %v252 = vmul.f32 %v229, %v227
    %v253 = vmul.f32 %v229, %v228
    %v254 = vadd.f32 %v180, %v230
    %v255 = vadd.f32 %v181, %v231
    %v256 = vadd.f32 %v182, %v232
    %v257 = vadd.f32 %v183, %v233
    %v258 = vadd.f32 %v184, %v234
    %v259 = vadd.f32 %v185, %v235
    %v260 = vadd.f32 %v186, %v236
    %v261 = vadd.f32 %v187, %v237
    %v262 = vadd.f32 %v188, %v238
    %v263 = vadd.f32 %v189, %v239
    %v264 = vadd.f32 %v190, %v240
    %v265 = vadd.f32 %v191, %v241
    %v266 = vadd.f32 %v192, %v242
    %v267 = vadd.f32 %v193, %v243
    %v268 = vadd.f32 %v194, %v244
    %v269 = vadd.f32 %v195, %v245
    %v270 = vadd.f32 %v196, %v246
    %v271 = vadd.f32 %v197, %v247
    %v272 = vadd.f32 %v198, %v248
    %v273 = vadd.f32 %v199, %v249
    %v274 = vadd.f32 %v200, %v250
    %v275 = vadd.f32 %v201, %v251
    %v276 = vadd.f32 %v202, %v252
    %v277 = vadd.f32 %v203, %v253
    %s278 = sld [smem:[#allocation6 + $0x3]]
    %v279 = vld [vmem:[#allocation2 + $0x3] sm:$0xff]
    %v280 = vld [vmem:[#allocation2 + $0xb] sm:$0xf]
    %v281 = vld [vmem:[#allocation2 + $0x13] sm:$0xff]
    %v282 = vld [vmem:[#allocation2 + $0x1b] sm:$0xf]
    %v283 = vld [vmem:[#allocation2 + $0x23] sm:$0xff]
    %v284 = vld [vmem:[#allocation2 + $0x2b] sm:$0xf]
    %v285 = vld [vmem:[#allocation2 + $0x33] sm:$0xff]
    %v286 = vld [vmem:[#allocation2 + $0x3b] sm:$0xf]
    %v287 = vld [vmem:[#allocation2 + $0x43] sm:$0xff]
    %v288 = vld [vmem:[#allocation2 + $0x4b] sm:$0xf]
    %v289 = vld [vmem:[#allocation2 + $0x53] sm:$0xff]
    %v290 = vld [vmem:[#allocation2 + $0x5b] sm:$0xf]
    %v291 = vld [vmem:[#allocation2 + $0x63] sm:$0xff]
    %v292 = vld [vmem:[#allocation2 + $0x6b] sm:$0xf]
    %v293 = vld [vmem:[#allocation2 + $0x73] sm:$0xff]
    %v294 = vld [vmem:[#allocation2 + $0x7b] sm:$0xf]
    %v295 = vld [vmem:[#allocation2 + $0x83] sm:$0xff]
    %v296 = vld [vmem:[#allocation2 + $0x8b] sm:$0xf]
    %v297 = vld [vmem:[#allocation2 + $0x93] sm:$0xff]
    %v298 = vld [vmem:[#allocation2 + $0x9b] sm:$0xf]
    %v299 = vld [vmem:[#allocation2 + $0xa3] sm:$0xff]
    %v300 = vld [vmem:[#allocation2 + $0xab] sm:$0xf]
    %v301 = vld [vmem:[#allocation2 + $0xb3] sm:$0xff]
    %v302 = vld [vmem:[#allocation2 + $0xbb] sm:$0xf]
    %v303 = vstv %s278
    %v304 = vmul.f32 %v303, %v279
    %v305 = vmul.f32 %v303, %v280
    %v306 = vmul.f32 %v303, %v281
    %v307 = vmul.f32 %v303, %v282
    %v308 = vmul.f32 %v303, %v283
    %v309 = vmul.f32 %v303, %v284
    %v310 = vmul.f32 %v303, %v285
    %v311 = vmul.f32 %v303, %v286
    %v312 = vmul.f32 %v303, %v287
    %v313 = vmul.f32 %v303, %v288
    %v314 = vmul.f32 %v303, %v289
    %v315 = vmul.f32 %v303, %v290
    %v316 = vmul.f32 %v303, %v291
    %v317 = vmul.f32 %v303, %v292
    %v318 = vmul.f32 %v303, %v293
    %v319 = vmul.f32 %v303, %v294
    %v320 = vmul.f32 %v303, %v295
    %v321 = vmul.f32 %v303, %v296
    %v322 = vmul.f32 %v303, %v297
    %v323 = vmul.f32 %v303, %v298
    %v324 = vmul.f32 %v303, %v299
    %v325 = vmul.f32 %v303, %v300
    %v326 = vmul.f32 %v303, %v301
    %v327 = vmul.f32 %v303, %v302
    %v328 = vadd.f32 %v254, %v304
    %v329 = vadd.f32 %v255, %v305
    %v330 = vadd.f32 %v256, %v306
    %v331 = vadd.f32 %v257, %v307
    %v332 = vadd.f32 %v258, %v308
    %v333 = vadd.f32 %v259, %v309
    %v334 = vadd.f32 %v260, %v310
    %v335 = vadd.f32 %v261, %v311
    %v336 = vadd.f32 %v262, %v312
    %v337 = vadd.f32 %v263, %v313
    %v338 = vadd.f32 %v264, %v314
    %v339 = vadd.f32 %v265, %v315
    %v340 = vadd.f32 %v266, %v316
    %v341 = vadd.f32 %v267, %v317
    %v342 = vadd.f32 %v268, %v318
    %v343 = vadd.f32 %v269, %v319
    %v344 = vadd.f32 %v270, %v320
    %v345 = vadd.f32 %v271, %v321
    %v346 = vadd.f32 %v272, %v322
    %v347 = vadd.f32 %v273, %v323
    %v348 = vadd.f32 %v274, %v324
    %v349 = vadd.f32 %v275, %v325
    %v350 = vadd.f32 %v276, %v326
    %v351 = vadd.f32 %v277, %v327
    %s352 = sld [smem:[#allocation6 + $0x4]]
    %v353 = vld [vmem:[#allocation2 + $0x4] sm:$0xff]
    %v354 = vld [vmem:[#allocation2 + $0xc] sm:$0xf]
    %v355 = vld [vmem:[#allocation2 + $0x14] sm:$0xff]
    %v356 = vld [vmem:[#allocation2 + $0x1c] sm:$0xf]
    %v357 = vld [vmem:[#allocation2 + $0x24] sm:$0xff]
    %v358 = vld [vmem:[#allocation2 + $0x2c] sm:$0xf]
    %v359 = vld [vmem:[#allocation2 + $0x34] sm:$0xff]
    %v360 = vld [vmem:[#allocation2 + $0x3c] sm:$0xf]
    %v361 = vld [vmem:[#allocation2 + $0x44] sm:$0xff]
    %v362 = vld [vmem:[#allocation2 + $0x4c] sm:$0xf]
    %v363 = vld [vmem:[#allocation2 + $0x54] sm:$0xff]
    %v364 = vld [vmem:[#allocation2 + $0x5c] sm:$0xf]
    %v365 = vld [vmem:[#allocation2 + $0x64] sm:$0xff]
    %v366 = vld [vmem:[#allocation2 + $0x6c] sm:$0xf]
    %v367 = vld [vmem:[#allocation2 + $0x74] sm:$0xff]
    %v368 = vld [vmem:[#allocation2 + $0x7c] sm:$0xf]
    %v369 = vld [vmem:[#allocation2 + $0x84] sm:$0xff]
    %v370 = vld [vmem:[#allocation2 + $0x8c] sm:$0xf]
    %v371 = vld [vmem:[#allocation2 + $0x94] sm:$0xff]
    %v372 = vld [vmem:[#allocation2 + $0x9c] sm:$0xf]
    %v373 = vld [vmem:[#allocation2 + $0xa4] sm:$0xff]
    %v374 = vld [vmem:[#allocation2 + $0xac] sm:$0xf]
    %v375 = vld [vmem:[#allocation2 + $0xb4] sm:$0xff]
    %v376 = vld [vmem:[#allocation2 + $0xbc] sm:$0xf]
    %v377 = vstv %s352
    %v378 = vmul.f32 %v377, %v353
    %v379 = vmul.f32 %v377, %v354
    %v380 = vmul.f32 %v377, %v355
    %v381 = vmul.f32 %v377, %v356
    %v382 = vmul.f32 %v377, %v357
    %v383 = vmul.f32 %v377, %v358
    %v384 = vmul.f32 %v377, %v359
    %v385 = vmul.f32 %v377, %v360
    %v386 = vmul.f32 %v377, %v361
    %v387 = vmul.f32 %v377, %v362
    %v388 = vmul.f32 %v377, %v363
    %v389 = vmul.f32 %v377, %v364
    %v390 = vmul.f32 %v377, %v365
    %v391 = vmul.f32 %v377, %v366
    %v392 = vmul.f32 %v377, %v367
    %v393 = vmul.f32 %v377, %v368
    %v394 = vmul.f32 %v377, %v369
    %v395 = vmul.f32 %v377, %v370
    %v396 = vmul.f32 %v377, %v371
    %v397 = vmul.f32 %v377, %v372
    %v398 = vmul.f32 %v377, %v373
    %v399 = vmul.f32 %v377, %v374
    %v400 = vmul.f32 %v377, %v375
    %v401 = vmul.f32 %v377, %v376
    %v402 = vadd.f32 %v328, %v378
    %v403 = vadd.f32 %v329, %v379
    %v404 = vadd.f32 %v330, %v380
    %v405 = vadd.f32 %v331, %v381
    %v406 = vadd.f32 %v332, %v382
    %v407 = vadd.f32 %v333, %v383
    %v408 = vadd.f32 %v334, %v384
    %v409 = vadd.f32 %v335, %v385
    %v410 = vadd.f32 %v336, %v386
    %v411 = vadd.f32 %v337, %v387
    %v412 = vadd.f32 %v338, %v388
    %v413 = vadd.f32 %v339, %v389
    %v414 = vadd.f32 %v340, %v390
    %v415 = vadd.f32 %v341, %v391
    %v416 = vadd.f32 %v342, %v392
    %v417 = vadd.f32 %v343, %v393
    %v418 = vadd.f32 %v344, %v394
    %v419 = vadd.f32 %v345, %v395
    %v420 = vadd.f32 %v346, %v396
    %v421 = vadd.f32 %v347, %v397
    %v422 = vadd.f32 %v348, %v398
    %v423 = vadd.f32 %v349, %v399
    %v424 = vadd.f32 %v350, %v400
    %v425 = vadd.f32 %v351, %v401
    %s426 = sld [smem:[#allocation6 + $0x5]]
    %s427 = scalar_lea.vmem [#allocation2], 16
    %v428 = vld [vmem:[%s427] sm:$0xff]
    %v429 = vld [vmem:[%s427 + $0x8] sm:$0xf]
    %v430 = vld [vmem:[%s427 + $0x10] sm:$0xff]
    %v431 = vld [vmem:[%s427 + $0x18] sm:$0xf]
    %v432 = vld [vmem:[%s427 + $0x20] sm:$0xff]
    %v433 = vld [vmem:[%s427 + $0x28] sm:$0xf]
    %v434 = vld [vmem:[%s427 + $0x30] sm:$0xff]
    %v435 = vld [vmem:[%s427 + $0x38] sm:$0xf]
    %v436 = vld [vmem:[%s427 + $0x40] sm:$0xff]
    %v437 = vld [vmem:[%s427 + $0x48] sm:$0xf]
    %v438 = vld [vmem:[%s427 + $0x50] sm:$0xff]
    %v439 = vld [vmem:[%s427 + $0x58] sm:$0xf]
    %v440 = vld [vmem:[%s427 + $0x60] sm:$0xff]
    %v441 = vld [vmem:[%s427 + $0x68] sm:$0xf]
    %v442 = vld [vmem:[%s427 + $0x70] sm:$0xff]
    %v443 = vld [vmem:[%s427 + $0x78] sm:$0xf]
    %v444 = vld [vmem:[%s427 + $0x80] sm:$0xff]
    %v445 = vld [vmem:[%s427 + $0x88] sm:$0xf]
    %v446 = vld [vmem:[%s427 + $0x90] sm:$0xff]
    %v447 = vld [vmem:[%s427 + $0x98] sm:$0xf]
    %v448 = vld [vmem:[%s427 + $0xa0] sm:$0xff]
    %v449 = vld [vmem:[%s427 + $0xa8] sm:$0xf]
    %v450 = vld [vmem:[%s427 + $0xb0] sm:$0xff]
    %v451 = vld [vmem:[%s427 + $0xb8] sm:$0xf]
    %v452 = vstv %s426
    %v453 = vmul.f32 %v452, %v428
    %v454 = vmul.f32 %v452, %v429
    %v455 = vmul.f32 %v452, %v430
    %v456 = vmul.f32 %v452, %v431
    %v457 = vmul.f32 %v452, %v432
    %v458 = vmul.f32 %v452, %v433
    %v459 = vmul.f32 %v452, %v434
    %v460 = vmul.f32 %v452, %v435
    %v461 = vmul.f32 %v452, %v436
    %v462 = vmul.f32 %v452, %v437
    %v463 = vmul.f32 %v452, %v438
    %v464 = vmul.f32 %v452, %v439
    %v465 = vmul.f32 %v452, %v440
    %v466 = vmul.f32 %v452, %v441
    %v467 = vmul.f32 %v452, %v442
    %v468 = vmul.f32 %v452, %v443
    %v469 = vmul.f32 %v452, %v444
    %v470 = vmul.f32 %v452, %v445
    %v471 = vmul.f32 %v452, %v446
    %v472 = vmul.f32 %v452, %v447
    %v473 = vmul.f32 %v452, %v448
    %v474 = vmul.f32 %v452, %v449
    %v475 = vmul.f32 %v452, %v450
    %v476 = vmul.f32 %v452, %v451
    %v477 = vadd.f32 %v402, %v453
    %v478 = vadd.f32 %v403, %v454
    %v479 = vadd.f32 %v404, %v455
    %v480 = vadd.f32 %v405, %v456
    %v481 = vadd.f32 %v406, %v457
    %v482 = vadd.f32 %v407, %v458
    %v483 = vadd.f32 %v408, %v459
    %v484 = vadd.f32 %v409, %v460
    %v485 = vadd.f32 %v410, %v461
    %v486 = vadd.f32 %v411, %v462
    %v487 = vadd.f32 %v412, %v463
    %v488 = vadd.f32 %v413, %v464
    %v489 = vadd.f32 %v414, %v465
    %v490 = vadd.f32 %v415, %v466
    %v491 = vadd.f32 %v416, %v467
    %v492 = vadd.f32 %v417, %v468
    %v493 = vadd.f32 %v418, %v469
    %v494 = vadd.f32 %v419, %v470
    %v495 = vadd.f32 %v420, %v471
    %v496 = vadd.f32 %v421, %v472
    %v497 = vadd.f32 %v422, %v473
    %v498 = vadd.f32 %v423, %v474
    %v499 = vadd.f32 %v424, %v475
    %v500 = vadd.f32 %v425, %v476
    %s501 = sld [smem:[#allocation6 + $0x6]]
    %v502 = vld [vmem:[%s427 + $0x1] sm:$0xff]
    %v503 = vld [vmem:[%s427 + $0x9] sm:$0xf]
    %v504 = vld [vmem:[%s427 + $0x11] sm:$0xff]
    %v505 = vld [vmem:[%s427 + $0x19] sm:$0xf]
    %v506 = vld [vmem:[%s427 + $0x21] sm:$0xff]
    %v507 = vld [vmem:[%s427 + $0x29] sm:$0xf]
    %v508 = vld [vmem:[%s427 + $0x31] sm:$0xff]
    %v509 = vld [vmem:[%s427 + $0x39] sm:$0xf]
    %v510 = vld [vmem:[%s427 + $0x41] sm:$0xff]
    %v511 = vld [vmem:[%s427 + $0x49] sm:$0xf]
    %v512 = vld [vmem:[%s427 + $0x51] sm:$0xff]
    %v513 = vld [vmem:[%s427 + $0x59] sm:$0xf]
    %v514 = vld [vmem:[%s427 + $0x61] sm:$0xff]
    %v515 = vld [vmem:[%s427 + $0x69] sm:$0xf]
    %v516 = vld [vmem:[%s427 + $0x71] sm:$0xff]
    %v517 = vld [vmem:[%s427 + $0x79] sm:$0xf]
    %v518 = vld [vmem:[%s427 + $0x81] sm:$0xff]
    %v519 = vld [vmem:[%s427 + $0x89] sm:$0xf]
    %v520 = vld [vmem:[%s427 + $0x91] sm:$0xff]
    %v521 = vld [vmem:[%s427 + $0x99] sm:$0xf]
    %v522 = vld [vmem:[%s427 + $0xa1] sm:$0xff]
    %v523 = vld [vmem:[%s427 + $0xa9] sm:$0xf]
    %v524 = vld [vmem:[%s427 + $0xb1] sm:$0xff]
    %v525 = vld [vmem:[%s427 + $0xb9] sm:$0xf]
    %v526 = vstv %s501
    %v527 = vmul.f32 %v526, %v502
    %v528 = vmul.f32 %v526, %v503
    %v529 = vmul.f32 %v526, %v504
    %v530 = vmul.f32 %v526, %v505
    %v531 = vmul.f32 %v526, %v506
    %v532 = vmul.f32 %v526, %v507
    %v533 = vmul.f32 %v526, %v508
    %v534 = vmul.f32 %v526, %v509
    %v535 = vmul.f32 %v526, %v510
    %v536 = vmul.f32 %v526, %v511
    %v537 = vmul.f32 %v526, %v512
    %v538 = vmul.f32 %v526, %v513
    %v539 = vmul.f32 %v526, %v514
    %v540 = vmul.f32 %v526, %v515
    %v541 = vmul.f32 %v526, %v516
    %v542 = vmul.f32 %v526, %v517
    %v543 = vmul.f32 %v526, %v518
    %v544 = vmul.f32 %v526, %v519
    %v545 = vmul.f32 %v526, %v520
    %v546 = vmul.f32 %v526, %v521
    %v547 = vmul.f32 %v526, %v522
    %v548 = vmul.f32 %v526, %v523
    %v549 = vmul.f32 %v526, %v524
    %v550 = vmul.f32 %v526, %v525
    %v551 = vadd.f32 %v477, %v527
    %v552 = vadd.f32 %v478, %v528
    %v553 = vadd.f32 %v479, %v529
    %v554 = vadd.f32 %v480, %v530
    %v555 = vadd.f32 %v481, %v531
    %v556 = vadd.f32 %v482, %v532
    %v557 = vadd.f32 %v483, %v533
    %v558 = vadd.f32 %v484, %v534
    %v559 = vadd.f32 %v485, %v535
    %v560 = vadd.f32 %v486, %v536
    %v561 = vadd.f32 %v487, %v537
    %v562 = vadd.f32 %v488, %v538
    %v563 = vadd.f32 %v489, %v539
    %v564 = vadd.f32 %v490, %v540
    %v565 = vadd.f32 %v491, %v541
    %v566 = vadd.f32 %v492, %v542
    %v567 = vadd.f32 %v493, %v543
    %v568 = vadd.f32 %v494, %v544
    %v569 = vadd.f32 %v495, %v545
    %v570 = vadd.f32 %v496, %v546
    %v571 = vadd.f32 %v497, %v547
    %v572 = vadd.f32 %v498, %v548
    %v573 = vadd.f32 %v499, %v549
    %v574 = vadd.f32 %v500, %v550
    %s575 = sld [smem:[#allocation6 + $0x7]]
    %v576 = vld [vmem:[%s427 + $0x2] sm:$0xff]
    %v577 = vld [vmem:[%s427 + $0xa] sm:$0xf]
    %v578 = vld [vmem:[%s427 + $0x12] sm:$0xff]
    %v579 = vld [vmem:[%s427 + $0x1a] sm:$0xf]
    %v580 = vld [vmem:[%s427 + $0x22] sm:$0xff]
    %v581 = vld [vmem:[%s427 + $0x2a] sm:$0xf]
    %v582 = vld [vmem:[%s427 + $0x32] sm:$0xff]
    %v583 = vld [vmem:[%s427 + $0x3a] sm:$0xf]
    %v584 = vld [vmem:[%s427 + $0x42] sm:$0xff]
    %v585 = vld [vmem:[%s427 + $0x4a] sm:$0xf]
    %v586 = vld [vmem:[%s427 + $0x52] sm:$0xff]
    %v587 = vld [vmem:[%s427 + $0x5a] sm:$0xf]
    %v588 = vld [vmem:[%s427 + $0x62] sm:$0xff]
    %v589 = vld [vmem:[%s427 + $0x6a] sm:$0xf]
    %v590 = vld [vmem:[%s427 + $0x72] sm:$0xff]
    %v591 = vld [vmem:[%s427 + $0x7a] sm:$0xf]
    %v592 = vld [vmem:[%s427 + $0x82] sm:$0xff]
    %v593 = vld [vmem:[%s427 + $0x8a] sm:$0xf]
    %v594 = vld [vmem:[%s427 + $0x92] sm:$0xff]
    %v595 = vld [vmem:[%s427 + $0x9a] sm:$0xf]
    %v596 = vld [vmem:[%s427 + $0xa2] sm:$0xff]
    %v597 = vld [vmem:[%s427 + $0xaa] sm:$0xf]
    %v598 = vld [vmem:[%s427 + $0xb2] sm:$0xff]
    %v599 = vld [vmem:[%s427 + $0xba] sm:$0xf]
    %v600 = vstv %s575
    %v601 = vmul.f32 %v600, %v576
    %v602 = vmul.f32 %v600, %v577
    %v603 = vmul.f32 %v600, %v578
    %v604 = vmul.f32 %v600, %v579
    %v605 = vmul.f32 %v600, %v580
    %v606 = vmul.f32 %v600, %v581
    %v607 = vmul.f32 %v600, %v582
    %v608 = vmul.f32 %v600, %v583
    %v609 = vmul.f32 %v600, %v584
    %v610 = vmul.f32 %v600, %v585
    %v611 = vmul.f32 %v600, %v586
    %v612 = vmul.f32 %v600, %v587
    %v613 = vmul.f32 %v600, %v588
    %v614 = vmul.f32 %v600, %v589
    %v615 = vmul.f32 %v600, %v590
    %v616 = vmul.f32 %v600, %v591
    %v617 = vmul.f32 %v600, %v592
    %v618 = vmul.f32 %v600, %v593
    %v619 = vmul.f32 %v600, %v594
    %v620 = vmul.f32 %v600, %v595
    %v621 = vmul.f32 %v600, %v596
    %v622 = vmul.f32 %v600, %v597
    %v623 = vmul.f32 %v600, %v598
    %v624 = vmul.f32 %v600, %v599
    %v625 = vadd.f32 %v551, %v601
    %v626 = vadd.f32 %v552, %v602
    %v627 = vadd.f32 %v553, %v603
    %v628 = vadd.f32 %v554, %v604
    %v629 = vadd.f32 %v555, %v605
    %v630 = vadd.f32 %v556, %v606
    %v631 = vadd.f32 %v557, %v607
    %v632 = vadd.f32 %v558, %v608
    %v633 = vadd.f32 %v559, %v609
    %v634 = vadd.f32 %v560, %v610
    %v635 = vadd.f32 %v561, %v611
    %v636 = vadd.f32 %v562, %v612
    %v637 = vadd.f32 %v563, %v613
    %v638 = vadd.f32 %v564, %v614
    %v639 = vadd.f32 %v565, %v615
    %v640 = vadd.f32 %v566, %v616
    %v641 = vadd.f32 %v567, %v617
    %v642 = vadd.f32 %v568, %v618
    %v643 = vadd.f32 %v569, %v619
    %v644 = vadd.f32 %v570, %v620
    %v645 = vadd.f32 %v571, %v621
    %v646 = vadd.f32 %v572, %v622
    %v647 = vadd.f32 %v573, %v623
    %v648 = vadd.f32 %v574, %v624
    %s649 = sld [smem:[#allocation6 + $0x8]]
    %v650 = vld [vmem:[%s427 + $0x3] sm:$0xff]
    %v651 = vld [vmem:[%s427 + $0xb] sm:$0xf]
    %v652 = vld [vmem:[%s427 + $0x13] sm:$0xff]
    %v653 = vld [vmem:[%s427 + $0x1b] sm:$0xf]
    %v654 = vld [vmem:[%s427 + $0x23] sm:$0xff]
    %v655 = vld [vmem:[%s427 + $0x2b] sm:$0xf]
    %v656 = vld [vmem:[%s427 + $0x33] sm:$0xff]
    %v657 = vld [vmem:[%s427 + $0x3b] sm:$0xf]
    %v658 = vld [vmem:[%s427 + $0x43] sm:$0xff]
    %v659 = vld [vmem:[%s427 + $0x4b] sm:$0xf]
    %v660 = vld [vmem:[%s427 + $0x53] sm:$0xff]
    %v661 = vld [vmem:[%s427 + $0x5b] sm:$0xf]
    %v662 = vld [vmem:[%s427 + $0x63] sm:$0xff]
    %v663 = vld [vmem:[%s427 + $0x6b] sm:$0xf]
    %v664 = vld [vmem:[%s427 + $0x73] sm:$0xff]
    %v665 = vld [vmem:[%s427 + $0x7b] sm:$0xf]
    %v666 = vld [vmem:[%s427 + $0x83] sm:$0xff]
    %v667 = vld [vmem:[%s427 + $0x8b] sm:$0xf]
    %v668 = vld [vmem:[%s427 + $0x93] sm:$0xff]
    %v669 = vld [vmem:[%s427 + $0x9b] sm:$0xf]
    %v670 = vld [vmem:[%s427 + $0xa3] sm:$0xff]
    %v671 = vld [vmem:[%s427 + $0xab] sm:$0xf]
    %v672 = vld [vmem:[%s427 + $0xb3] sm:$0xff]
    %v673 = vld [vmem:[%s427 + $0xbb] sm:$0xf]
    %v674 = vstv %s649
    %v675 = vmul.f32 %v674, %v650
    %v676 = vmul.f32 %v674, %v651
    %v677 = vmul.f32 %v674, %v652
    %v678 = vmul.f32 %v674, %v653
    %v679 = vmul.f32 %v674, %v654
    %v680 = vmul.f32 %v674, %v655
    %v681 = vmul.f32 %v674, %v656
    %v682 = vmul.f32 %v674, %v657
    %v683 = vmul.f32 %v674, %v658
    %v684 = vmul.f32 %v674, %v659
    %v685 = vmul.f32 %v674, %v660
    %v686 = vmul.f32 %v674, %v661
    %v687 = vmul.f32 %v674, %v662
    %v688 = vmul.f32 %v674, %v663
    %v689 = vmul.f32 %v674, %v664
    %v690 = vmul.f32 %v674, %v665
    %v691 = vmul.f32 %v674, %v666
    %v692 = vmul.f32 %v674, %v667
    %v693 = vmul.f32 %v674, %v668
    %v694 = vmul.f32 %v674, %v669
    %v695 = vmul.f32 %v674, %v670
    %v696 = vmul.f32 %v674, %v671
    %v697 = vmul.f32 %v674, %v672
    %v698 = vmul.f32 %v674, %v673
    %v699 = vadd.f32 %v625, %v675
    %v700 = vadd.f32 %v626, %v676
    %v701 = vadd.f32 %v627, %v677
    %v702 = vadd.f32 %v628, %v678
    %v703 = vadd.f32 %v629, %v679
    %v704 = vadd.f32 %v630, %v680
    %v705 = vadd.f32 %v631, %v681
    %v706 = vadd.f32 %v632, %v682
    %v707 = vadd.f32 %v633, %v683
    %v708 = vadd.f32 %v634, %v684
    %v709 = vadd.f32 %v635, %v685
    %v710 = vadd.f32 %v636, %v686
    %v711 = vadd.f32 %v637, %v687
    %v712 = vadd.f32 %v638, %v688
    %v713 = vadd.f32 %v639, %v689
    %v714 = vadd.f32 %v640, %v690
    %v715 = vadd.f32 %v641, %v691
    %v716 = vadd.f32 %v642, %v692
    %v717 = vadd.f32 %v643, %v693
    %v718 = vadd.f32 %v644, %v694
    %v719 = vadd.f32 %v645, %v695
    %v720 = vadd.f32 %v646, %v696
    %v721 = vadd.f32 %v647, %v697
    %v722 = vadd.f32 %v648, %v698
    %s723 = sld [smem:[#allocation6 + $0x9]]
    %v724 = vld [vmem:[%s427 + $0x4] sm:$0xff]
    %v725 = vld [vmem:[%s427 + $0xc] sm:$0xf]
    %v726 = vld [vmem:[%s427 + $0x14] sm:$0xff]
    %v727 = vld [vmem:[%s427 + $0x1c] sm:$0xf]
    %v728 = vld [vmem:[%s427 + $0x24] sm:$0xff]
    %v729 = vld [vmem:[%s427 + $0x2c] sm:$0xf]
    %v730 = vld [vmem:[%s427 + $0x34] sm:$0xff]
    %v731 = vld [vmem:[%s427 + $0x3c] sm:$0xf]
    %v732 = vld [vmem:[%s427 + $0x44] sm:$0xff]
    %v733 = vld [vmem:[%s427 + $0x4c] sm:$0xf]
    %v734 = vld [vmem:[%s427 + $0x54] sm:$0xff]
    %v735 = vld [vmem:[%s427 + $0x5c] sm:$0xf]
    %v736 = vld [vmem:[%s427 + $0x64] sm:$0xff]
    %v737 = vld [vmem:[%s427 + $0x6c] sm:$0xf]
    %v738 = vld [vmem:[%s427 + $0x74] sm:$0xff]
    %v739 = vld [vmem:[%s427 + $0x7c] sm:$0xf]
    %v740 = vld [vmem:[%s427 + $0x84] sm:$0xff]
    %v741 = vld [vmem:[%s427 + $0x8c] sm:$0xf]
    %v742 = vld [vmem:[%s427 + $0x94] sm:$0xff]
    %v743 = vld [vmem:[%s427 + $0x9c] sm:$0xf]
    %v744 = vld [vmem:[%s427 + $0xa4] sm:$0xff]
    %v745 = vld [vmem:[%s427 + $0xac] sm:$0xf]
    %v746 = vld [vmem:[%s427 + $0xb4] sm:$0xff]
    %v747 = vld [vmem:[%s427 + $0xbc] sm:$0xf]
    %v748 = vstv %s723
    %v749 = vmul.f32 %v748, %v724
    %v750 = vmul.f32 %v748, %v725
    %v751 = vmul.f32 %v748, %v726
    %v752 = vmul.f32 %v748, %v727
    %v753 = vmul.f32 %v748, %v728
    %v754 = vmul.f32 %v748, %v729
    %v755 = vmul.f32 %v748, %v730
    %v756 = vmul.f32 %v748, %v731
    %v757 = vmul.f32 %v748, %v732
    %v758 = vmul.f32 %v748, %v733
    %v759 = vmul.f32 %v748, %v734
    %v760 = vmul.f32 %v748, %v735
    %v761 = vmul.f32 %v748, %v736
    %v762 = vmul.f32 %v748, %v737
    %v763 = vmul.f32 %v748, %v738
    %v764 = vmul.f32 %v748, %v739
    %v765 = vmul.f32 %v748, %v740
    %v766 = vmul.f32 %v748, %v741
    %v767 = vmul.f32 %v748, %v742
    %v768 = vmul.f32 %v748, %v743
    %v769 = vmul.f32 %v748, %v744
    %v770 = vmul.f32 %v748, %v745
    %v771 = vmul.f32 %v748, %v746
    %v772 = vmul.f32 %v748, %v747
    %v773 = vadd.f32 %v699, %v749
    %v774 = vadd.f32 %v700, %v750
    %v775 = vadd.f32 %v701, %v751
    %v776 = vadd.f32 %v702, %v752
    %v777 = vadd.f32 %v703, %v753
    %v778 = vadd.f32 %v704, %v754
    %v779 = vadd.f32 %v705, %v755
    %v780 = vadd.f32 %v706, %v756
    %v781 = vadd.f32 %v707, %v757
    %v782 = vadd.f32 %v708, %v758
    %v783 = vadd.f32 %v709, %v759
    %v784 = vadd.f32 %v710, %v760
    %v785 = vadd.f32 %v711, %v761
    %v786 = vadd.f32 %v712, %v762
    %v787 = vadd.f32 %v713, %v763
    %v788 = vadd.f32 %v714, %v764
    %v789 = vadd.f32 %v715, %v765
    %v790 = vadd.f32 %v716, %v766
    %v791 = vadd.f32 %v717, %v767
    %v792 = vadd.f32 %v718, %v768
    %v793 = vadd.f32 %v719, %v769
    %v794 = vadd.f32 %v720, %v770
    %v795 = vadd.f32 %v721, %v771
    %v796 = vadd.f32 %v722, %v772
    %s797 = sld [smem:[#allocation6 + $0xa]]
    %s798 = scalar_lea.vmem [#allocation2], 32
    %v799 = vld [vmem:[%s798] sm:$0xff]
    %v800 = vld [vmem:[%s798 + $0x8] sm:$0xf]
    %v801 = vld [vmem:[%s798 + $0x10] sm:$0xff]
    %v802 = vld [vmem:[%s798 + $0x18] sm:$0xf]
    %v803 = vld [vmem:[%s798 + $0x20] sm:$0xff]
    %v804 = vld [vmem:[%s798 + $0x28] sm:$0xf]
    %v805 = vld [vmem:[%s798 + $0x30] sm:$0xff]
    %v806 = vld [vmem:[%s798 + $0x38] sm:$0xf]
    %v807 = vld [vmem:[%s798 + $0x40] sm:$0xff]
    %v808 = vld [vmem:[%s798 + $0x48] sm:$0xf]
    %v809 = vld [vmem:[%s798 + $0x50] sm:$0xff]
    %v810 = vld [vmem:[%s798 + $0x58] sm:$0xf]
    %v811 = vld [vmem:[%s798 + $0x60] sm:$0xff]
    %v812 = vld [vmem:[%s798 + $0x68] sm:$0xf]
    %v813 = vld [vmem:[%s798 + $0x70] sm:$0xff]
    %v814 = vld [vmem:[%s798 + $0x78] sm:$0xf]
    %v815 = vld [vmem:[%s798 + $0x80] sm:$0xff]
    %v816 = vld [vmem:[%s798 + $0x88] sm:$0xf]
    %v817 = vld [vmem:[%s798 + $0x90] sm:$0xff]
    %v818 = vld [vmem:[%s798 + $0x98] sm:$0xf]
    %v819 = vld [vmem:[%s798 + $0xa0] sm:$0xff]
    %v820 = vld [vmem:[%s798 + $0xa8] sm:$0xf]
    %v821 = vld [vmem:[%s798 + $0xb0] sm:$0xff]
    %v822 = vld [vmem:[%s798 + $0xb8] sm:$0xf]
    %v823 = vstv %s797
    %v824 = vmul.f32 %v823, %v799
    %v825 = vmul.f32 %v823, %v800
    %v826 = vmul.f32 %v823, %v801
    %v827 = vmul.f32 %v823, %v802
    %v828 = vmul.f32 %v823, %v803
    %v829 = vmul.f32 %v823, %v804
    %v830 = vmul.f32 %v823, %v805
    %v831 = vmul.f32 %v823, %v806
    %v832 = vmul.f32 %v823, %v807
    %v833 = vmul.f32 %v823, %v808
    %v834 = vmul.f32 %v823, %v809
    %v835 = vmul.f32 %v823, %v810
    %v836 = vmul.f32 %v823, %v811
    %v837 = vmul.f32 %v823, %v812
    %v838 = vmul.f32 %v823, %v813
    %v839 = vmul.f32 %v823, %v814
    %v840 = vmul.f32 %v823, %v815
    %v841 = vmul.f32 %v823, %v816
    %v842 = vmul.f32 %v823, %v817
    %v843 = vmul.f32 %v823, %v818
    %v844 = vmul.f32 %v823, %v819
    %v845 = vmul.f32 %v823, %v820
    %v846 = vmul.f32 %v823, %v821
    %v847 = vmul.f32 %v823, %v822
    %v848 = vadd.f32 %v773, %v824
    %v849 = vadd.f32 %v774, %v825
    %v850 = vadd.f32 %v775, %v826
    %v851 = vadd.f32 %v776, %v827
    %v852 = vadd.f32 %v777, %v828
    %v853 = vadd.f32 %v778, %v829
    %v854 = vadd.f32 %v779, %v830
    %v855 = vadd.f32 %v780, %v831
    %v856 = vadd.f32 %v781, %v832
    %v857 = vadd.f32 %v782, %v833
    %v858 = vadd.f32 %v783, %v834
    %v859 = vadd.f32 %v784, %v835
    %v860 = vadd.f32 %v785, %v836
    %v861 = vadd.f32 %v786, %v837
    %v862 = vadd.f32 %v787, %v838
    %v863 = vadd.f32 %v788, %v839
    %v864 = vadd.f32 %v789, %v840
    %v865 = vadd.f32 %v790, %v841
    %v866 = vadd.f32 %v791, %v842
    %v867 = vadd.f32 %v792, %v843
    %v868 = vadd.f32 %v793, %v844
    %v869 = vadd.f32 %v794, %v845
    %v870 = vadd.f32 %v795, %v846
    %v871 = vadd.f32 %v796, %v847
    %s872 = sld [smem:[#allocation6 + $0xb]]
    %v873 = vld [vmem:[%s798 + $0x1] sm:$0xff]
    %v874 = vld [vmem:[%s798 + $0x9] sm:$0xf]
    %v875 = vld [vmem:[%s798 + $0x11] sm:$0xff]
    %v876 = vld [vmem:[%s798 + $0x19] sm:$0xf]
    %v877 = vld [vmem:[%s798 + $0x21] sm:$0xff]
    %v878 = vld [vmem:[%s798 + $0x29] sm:$0xf]
    %v879 = vld [vmem:[%s798 + $0x31] sm:$0xff]
    %v880 = vld [vmem:[%s798 + $0x39] sm:$0xf]
    %v881 = vld [vmem:[%s798 + $0x41] sm:$0xff]
    %v882 = vld [vmem:[%s798 + $0x49] sm:$0xf]
    %v883 = vld [vmem:[%s798 + $0x51] sm:$0xff]
    %v884 = vld [vmem:[%s798 + $0x59] sm:$0xf]
    %v885 = vld [vmem:[%s798 + $0x61] sm:$0xff]
    %v886 = vld [vmem:[%s798 + $0x69] sm:$0xf]
    %v887 = vld [vmem:[%s798 + $0x71] sm:$0xff]
    %v888 = vld [vmem:[%s798 + $0x79] sm:$0xf]
    %v889 = vld [vmem:[%s798 + $0x81] sm:$0xff]
    %v890 = vld [vmem:[%s798 + $0x89] sm:$0xf]
    %v891 = vld [vmem:[%s798 + $0x91] sm:$0xff]
    %v892 = vld [vmem:[%s798 + $0x99] sm:$0xf]
    %v893 = vld [vmem:[%s798 + $0xa1] sm:$0xff]
    %v894 = vld [vmem:[%s798 + $0xa9] sm:$0xf]
    %v895 = vld [vmem:[%s798 + $0xb1] sm:$0xff]
    %v896 = vld [vmem:[%s798 + $0xb9] sm:$0xf]
    %v897 = vstv %s872
    %v898 = vmul.f32 %v897, %v873
    %v899 = vmul.f32 %v897, %v874
    %v900 = vmul.f32 %v897, %v875
    %v901 = vmul.f32 %v897, %v876
    %v902 = vmul.f32 %v897, %v877
    %v903 = vmul.f32 %v897, %v878
    %v904 = vmul.f32 %v897, %v879
    %v905 = vmul.f32 %v897, %v880
    %v906 = vmul.f32 %v897, %v881
    %v907 = vmul.f32 %v897, %v882
    %v908 = vmul.f32 %v897, %v883
    %v909 = vmul.f32 %v897, %v884
    %v910 = vmul.f32 %v897, %v885
    %v911 = vmul.f32 %v897, %v886
    %v912 = vmul.f32 %v897, %v887
    %v913 = vmul.f32 %v897, %v888
    %v914 = vmul.f32 %v897, %v889
    %v915 = vmul.f32 %v897, %v890
    %v916 = vmul.f32 %v897, %v891
    %v917 = vmul.f32 %v897, %v892
    %v918 = vmul.f32 %v897, %v893
    %v919 = vmul.f32 %v897, %v894
    %v920 = vmul.f32 %v897, %v895
    %v921 = vmul.f32 %v897, %v896
    %v922 = vadd.f32 %v848, %v898
    %v923 = vadd.f32 %v849, %v899
    %v924 = vadd.f32 %v850, %v900
    %v925 = vadd.f32 %v851, %v901
    %v926 = vadd.f32 %v852, %v902
    %v927 = vadd.f32 %v853, %v903
    %v928 = vadd.f32 %v854, %v904
    %v929 = vadd.f32 %v855, %v905
    %v930 = vadd.f32 %v856, %v906
    %v931 = vadd.f32 %v857, %v907
    %v932 = vadd.f32 %v858, %v908
    %v933 = vadd.f32 %v859, %v909
    %v934 = vadd.f32 %v860, %v910
    %v935 = vadd.f32 %v861, %v911
    %v936 = vadd.f32 %v862, %v912
    %v937 = vadd.f32 %v863, %v913
    %v938 = vadd.f32 %v864, %v914
    %v939 = vadd.f32 %v865, %v915
    %v940 = vadd.f32 %v866, %v916
    %v941 = vadd.f32 %v867, %v917
    %v942 = vadd.f32 %v868, %v918
    %v943 = vadd.f32 %v869, %v919
    %v944 = vadd.f32 %v870, %v920
    %v945 = vadd.f32 %v871, %v921
    %s946 = sld [smem:[#allocation6 + $0xc]]
    %v947 = vld [vmem:[%s798 + $0x2] sm:$0xff]
    %v948 = vld [vmem:[%s798 + $0xa] sm:$0xf]
    %v949 = vld [vmem:[%s798 + $0x12] sm:$0xff]
    %v950 = vld [vmem:[%s798 + $0x1a] sm:$0xf]
    %v951 = vld [vmem:[%s798 + $0x22] sm:$0xff]
    %v952 = vld [vmem:[%s798 + $0x2a] sm:$0xf]
    %v953 = vld [vmem:[%s798 + $0x32] sm:$0xff]
    %v954 = vld [vmem:[%s798 + $0x3a] sm:$0xf]
    %v955 = vld [vmem:[%s798 + $0x42] sm:$0xff]
    %v956 = vld [vmem:[%s798 + $0x4a] sm:$0xf]
    %v957 = vld [vmem:[%s798 + $0x52] sm:$0xff]
    %v958 = vld [vmem:[%s798 + $0x5a] sm:$0xf]
    %v959 = vld [vmem:[%s798 + $0x62] sm:$0xff]
    %v960 = vld [vmem:[%s798 + $0x6a] sm:$0xf]
    %v961 = vld [vmem:[%s798 + $0x72] sm:$0xff]
    %v962 = vld [vmem:[%s798 + $0x7a] sm:$0xf]
    %v963 = vld [vmem:[%s798 + $0x82] sm:$0xff]
    %v964 = vld [vmem:[%s798 + $0x8a] sm:$0xf]
    %v965 = vld [vmem:[%s798 + $0x92] sm:$0xff]
    %v966 = vld [vmem:[%s798 + $0x9a] sm:$0xf]
    %v967 = vld [vmem:[%s798 + $0xa2] sm:$0xff]
    %v968 = vld [vmem:[%s798 + $0xaa] sm:$0xf]
    %v969 = vld [vmem:[%s798 + $0xb2] sm:$0xff]
    %v970 = vld [vmem:[%s798 + $0xba] sm:$0xf]
    %v971 = vstv %s946
    %v972 = vmul.f32 %v971, %v947
    %v973 = vmul.f32 %v971, %v948
    %v974 = vmul.f32 %v971, %v949
    %v975 = vmul.f32 %v971, %v950
    %v976 = vmul.f32 %v971, %v951
    %v977 = vmul.f32 %v971, %v952
    %v978 = vmul.f32 %v971, %v953
    %v979 = vmul.f32 %v971, %v954
    %v980 = vmul.f32 %v971, %v955
    %v981 = vmul.f32 %v971, %v956
    %v982 = vmul.f32 %v971, %v957
    %v983 = vmul.f32 %v971, %v958
    %v984 = vmul.f32 %v971, %v959
    %v985 = vmul.f32 %v971, %v960
    %v986 = vmul.f32 %v971, %v961
    %v987 = vmul.f32 %v971, %v962
    %v988 = vmul.f32 %v971, %v963
    %v989 = vmul.f32 %v971, %v964
    %v990 = vmul.f32 %v971, %v965
    %v991 = vmul.f32 %v971, %v966
    %v992 = vmul.f32 %v971, %v967
    %v993 = vmul.f32 %v971, %v968
    %v994 = vmul.f32 %v971, %v969
    %v995 = vmul.f32 %v971, %v970
    %v996 = vadd.f32 %v922, %v972
    %v997 = vadd.f32 %v923, %v973
    %v998 = vadd.f32 %v924, %v974
    %v999 = vadd.f32 %v925, %v975
    %v1000 = vadd.f32 %v926, %v976
    %v1001 = vadd.f32 %v927, %v977
    %v1002 = vadd.f32 %v928, %v978
    %v1003 = vadd.f32 %v929, %v979
    %v1004 = vadd.f32 %v930, %v980
    %v1005 = vadd.f32 %v931, %v981
    %v1006 = vadd.f32 %v932, %v982
    %v1007 = vadd.f32 %v933, %v983
    %v1008 = vadd.f32 %v934, %v984
    %v1009 = vadd.f32 %v935, %v985
    %v1010 = vadd.f32 %v936, %v986
    %v1011 = vadd.f32 %v937, %v987
    %v1012 = vadd.f32 %v938, %v988
    %v1013 = vadd.f32 %v939, %v989
    %v1014 = vadd.f32 %v940, %v990
    %v1015 = vadd.f32 %v941, %v991
    %v1016 = vadd.f32 %v942, %v992
    %v1017 = vadd.f32 %v943, %v993
    %v1018 = vadd.f32 %v944, %v994
    %v1019 = vadd.f32 %v945, %v995
    %s1020 = sld [smem:[#allocation6 + $0xd]]
    %v1021 = vld [vmem:[%s798 + $0x3] sm:$0xff]
    %v1022 = vld [vmem:[%s798 + $0xb] sm:$0xf]
    %v1023 = vld [vmem:[%s798 + $0x13] sm:$0xff]
    %v1024 = vld [vmem:[%s798 + $0x1b] sm:$0xf]
    %v1025 = vld [vmem:[%s798 + $0x23] sm:$0xff]
    %v1026 = vld [vmem:[%s798 + $0x2b] sm:$0xf]
    %v1027 = vld [vmem:[%s798 + $0x33] sm:$0xff]
    %v1028 = vld [vmem:[%s798 + $0x3b] sm:$0xf]
    %v1029 = vld [vmem:[%s798 + $0x43] sm:$0xff]
    %v1030 = vld [vmem:[%s798 + $0x4b] sm:$0xf]
    %v1031 = vld [vmem:[%s798 + $0x53] sm:$0xff]
    %v1032 = vld [vmem:[%s798 + $0x5b] sm:$0xf]
    %v1033 = vld [vmem:[%s798 + $0x63] sm:$0xff]
    %v1034 = vld [vmem:[%s798 + $0x6b] sm:$0xf]
    %v1035 = vld [vmem:[%s798 + $0x73] sm:$0xff]
    %v1036 = vld [vmem:[%s798 + $0x7b] sm:$0xf]
    %v1037 = vld [vmem:[%s798 + $0x83] sm:$0xff]
    %v1038 = vld [vmem:[%s798 + $0x8b] sm:$0xf]
    %v1039 = vld [vmem:[%s798 + $0x93] sm:$0xff]
    %v1040 = vld [vmem:[%s798 + $0x9b] sm:$0xf]
    %v1041 = vld [vmem:[%s798 + $0xa3] sm:$0xff]
    %v1042 = vld [vmem:[%s798 + $0xab] sm:$0xf]
    %v1043 = vld [vmem:[%s798 + $0xb3] sm:$0xff]
    %v1044 = vld [vmem:[%s798 + $0xbb] sm:$0xf]
    %v1045 = vstv %s1020
    %v1046 = vmul.f32 %v1045, %v1021
    %v1047 = vmul.f32 %v1045, %v1022
    %v1048 = vmul.f32 %v1045, %v1023
    %v1049 = vmul.f32 %v1045, %v1024
    %v1050 = vmul.f32 %v1045, %v1025
    %v1051 = vmul.f32 %v1045, %v1026
    %v1052 = vmul.f32 %v1045, %v1027
    %v1053 = vmul.f32 %v1045, %v1028
    %v1054 = vmul.f32 %v1045, %v1029
    %v1055 = vmul.f32 %v1045, %v1030
    %v1056 = vmul.f32 %v1045, %v1031
    %v1057 = vmul.f32 %v1045, %v1032
    %v1058 = vmul.f32 %v1045, %v1033
    %v1059 = vmul.f32 %v1045, %v1034
    %v1060 = vmul.f32 %v1045, %v1035
    %v1061 = vmul.f32 %v1045, %v1036
    %v1062 = vmul.f32 %v1045, %v1037
    %v1063 = vmul.f32 %v1045, %v1038
    %v1064 = vmul.f32 %v1045, %v1039
    %v1065 = vmul.f32 %v1045, %v1040
    %v1066 = vmul.f32 %v1045, %v1041
    %v1067 = vmul.f32 %v1045, %v1042
    %v1068 = vmul.f32 %v1045, %v1043
    %v1069 = vmul.f32 %v1045, %v1044
    %v1070 = vadd.f32 %v996, %v1046
    %v1071 = vadd.f32 %v997, %v1047
    %v1072 = vadd.f32 %v998, %v1048
    %v1073 = vadd.f32 %v999, %v1049
    %v1074 = vadd.f32 %v1000, %v1050
    %v1075 = vadd.f32 %v1001, %v1051
    %v1076 = vadd.f32 %v1002, %v1052
    %v1077 = vadd.f32 %v1003, %v1053
    %v1078 = vadd.f32 %v1004, %v1054
    %v1079 = vadd.f32 %v1005, %v1055
    %v1080 = vadd.f32 %v1006, %v1056
    %v1081 = vadd.f32 %v1007, %v1057
    %v1082 = vadd.f32 %v1008, %v1058
    %v1083 = vadd.f32 %v1009, %v1059
    %v1084 = vadd.f32 %v1010, %v1060
    %v1085 = vadd.f32 %v1011, %v1061
    %v1086 = vadd.f32 %v1012, %v1062
    %v1087 = vadd.f32 %v1013, %v1063
    %v1088 = vadd.f32 %v1014, %v1064
    %v1089 = vadd.f32 %v1015, %v1065
    %v1090 = vadd.f32 %v1016, %v1066
    %v1091 = vadd.f32 %v1017, %v1067
    %v1092 = vadd.f32 %v1018, %v1068
    %v1093 = vadd.f32 %v1019, %v1069
    %s1094 = sld [smem:[#allocation6 + $0xe]]
    %v1095 = vld [vmem:[%s798 + $0x4] sm:$0xff]
    %v1096 = vld [vmem:[%s798 + $0xc] sm:$0xf]
    %v1097 = vld [vmem:[%s798 + $0x14] sm:$0xff]
    %v1098 = vld [vmem:[%s798 + $0x1c] sm:$0xf]
    %v1099 = vld [vmem:[%s798 + $0x24] sm:$0xff]
    %v1100 = vld [vmem:[%s798 + $0x2c] sm:$0xf]
    %v1101 = vld [vmem:[%s798 + $0x34] sm:$0xff]
    %v1102 = vld [vmem:[%s798 + $0x3c] sm:$0xf]
    %v1103 = vld [vmem:[%s798 + $0x44] sm:$0xff]
    %v1104 = vld [vmem:[%s798 + $0x4c] sm:$0xf]
    %v1105 = vld [vmem:[%s798 + $0x54] sm:$0xff]
    %v1106 = vld [vmem:[%s798 + $0x5c] sm:$0xf]
    %v1107 = vld [vmem:[%s798 + $0x64] sm:$0xff]
    %v1108 = vld [vmem:[%s798 + $0x6c] sm:$0xf]
    %v1109 = vld [vmem:[%s798 + $0x74] sm:$0xff]
    %v1110 = vld [vmem:[%s798 + $0x7c] sm:$0xf]
    %v1111 = vld [vmem:[%s798 + $0x84] sm:$0xff]
    %v1112 = vld [vmem:[%s798 + $0x8c] sm:$0xf]
    %v1113 = vld [vmem:[%s798 + $0x94] sm:$0xff]
    %v1114 = vld [vmem:[%s798 + $0x9c] sm:$0xf]
    %v1115 = vld [vmem:[%s798 + $0xa4] sm:$0xff]
    %v1116 = vld [vmem:[%s798 + $0xac] sm:$0xf]
    %v1117 = vld [vmem:[%s798 + $0xb4] sm:$0xff]
    %v1118 = vld [vmem:[%s798 + $0xbc] sm:$0xf]
    %v1119 = vstv %s1094
    %v1120 = vmul.f32 %v1119, %v1095
    %v1121 = vmul.f32 %v1119, %v1096
    %v1122 = vmul.f32 %v1119, %v1097
    %v1123 = vmul.f32 %v1119, %v1098
    %v1124 = vmul.f32 %v1119, %v1099
    %v1125 = vmul.f32 %v1119, %v1100
    %v1126 = vmul.f32 %v1119, %v1101
    %v1127 = vmul.f32 %v1119, %v1102
    %v1128 = vmul.f32 %v1119, %v1103
    %v1129 = vmul.f32 %v1119, %v1104
    %v1130 = vmul.f32 %v1119, %v1105
    %v1131 = vmul.f32 %v1119, %v1106
    %v1132 = vmul.f32 %v1119, %v1107
    %v1133 = vmul.f32 %v1119, %v1108
    %v1134 = vmul.f32 %v1119, %v1109
    %v1135 = vmul.f32 %v1119, %v1110
    %v1136 = vmul.f32 %v1119, %v1111
    %v1137 = vmul.f32 %v1119, %v1112
    %v1138 = vmul.f32 %v1119, %v1113
    %v1139 = vmul.f32 %v1119, %v1114
    %v1140 = vmul.f32 %v1119, %v1115
    %v1141 = vmul.f32 %v1119, %v1116
    %v1142 = vmul.f32 %v1119, %v1117
    %v1143 = vmul.f32 %v1119, %v1118
    %v1144 = vadd.f32 %v1070, %v1120
    %v1145 = vadd.f32 %v1071, %v1121
    %v1146 = vadd.f32 %v1072, %v1122
    %v1147 = vadd.f32 %v1073, %v1123
    %v1148 = vadd.f32 %v1074, %v1124
    %v1149 = vadd.f32 %v1075, %v1125
    %v1150 = vadd.f32 %v1076, %v1126
    %v1151 = vadd.f32 %v1077, %v1127
    %v1152 = vadd.f32 %v1078, %v1128
    %v1153 = vadd.f32 %v1079, %v1129
    %v1154 = vadd.f32 %v1080, %v1130
    %v1155 = vadd.f32 %v1081, %v1131
    %v1156 = vadd.f32 %v1082, %v1132
    %v1157 = vadd.f32 %v1083, %v1133
    %v1158 = vadd.f32 %v1084, %v1134
    %v1159 = vadd.f32 %v1085, %v1135
    %v1160 = vadd.f32 %v1086, %v1136
    %v1161 = vadd.f32 %v1087, %v1137
    %v1162 = vadd.f32 %v1088, %v1138
    %v1163 = vadd.f32 %v1089, %v1139
    %v1164 = vadd.f32 %v1090, %v1140
    %v1165 = vadd.f32 %v1091, %v1141
    %v1166 = vadd.f32 %v1092, %v1142
    %v1167 = vadd.f32 %v1093, %v1143
    %s1168 = sld [smem:[#allocation6 + $0xf]]
    %s1169 = scalar_lea.vmem [#allocation2], 48
    %v1170 = vld [vmem:[%s1169] sm:$0xff]
    %v1171 = vld [vmem:[%s1169 + $0x8] sm:$0xf]
    %v1172 = vld [vmem:[%s1169 + $0x10] sm:$0xff]
    %v1173 = vld [vmem:[%s1169 + $0x18] sm:$0xf]
    %v1174 = vld [vmem:[%s1169 + $0x20] sm:$0xff]
    %v1175 = vld [vmem:[%s1169 + $0x28] sm:$0xf]
    %v1176 = vld [vmem:[%s1169 + $0x30] sm:$0xff]
    %v1177 = vld [vmem:[%s1169 + $0x38] sm:$0xf]
    %v1178 = vld [vmem:[%s1169 + $0x40] sm:$0xff]
    %v1179 = vld [vmem:[%s1169 + $0x48] sm:$0xf]
    %v1180 = vld [vmem:[%s1169 + $0x50] sm:$0xff]
    %v1181 = vld [vmem:[%s1169 + $0x58] sm:$0xf]
    %v1182 = vld [vmem:[%s1169 + $0x60] sm:$0xff]
    %v1183 = vld [vmem:[%s1169 + $0x68] sm:$0xf]
    %v1184 = vld [vmem:[%s1169 + $0x70] sm:$0xff]
    %v1185 = vld [vmem:[%s1169 + $0x78] sm:$0xf]
    %v1186 = vld [vmem:[%s1169 + $0x80] sm:$0xff]
    %v1187 = vld [vmem:[%s1169 + $0x88] sm:$0xf]
    %v1188 = vld [vmem:[%s1169 + $0x90] sm:$0xff]
    %v1189 = vld [vmem:[%s1169 + $0x98] sm:$0xf]
    %v1190 = vld [vmem:[%s1169 + $0xa0] sm:$0xff]
    %v1191 = vld [vmem:[%s1169 + $0xa8] sm:$0xf]
    %v1192 = vld [vmem:[%s1169 + $0xb0] sm:$0xff]
    %v1193 = vld [vmem:[%s1169 + $0xb8] sm:$0xf]
    %v1194 = vstv %s1168
    %v1195 = vmul.f32 %v1194, %v1170
    %v1196 = vmul.f32 %v1194, %v1171
    %v1197 = vmul.f32 %v1194, %v1172
    %v1198 = vmul.f32 %v1194, %v1173
    %v1199 = vmul.f32 %v1194, %v1174
    %v1200 = vmul.f32 %v1194, %v1175
    %v1201 = vmul.f32 %v1194, %v1176
    %v1202 = vmul.f32 %v1194, %v1177
    %v1203 = vmul.f32 %v1194, %v1178
    %v1204 = vmul.f32 %v1194, %v1179
    %v1205 = vmul.f32 %v1194, %v1180
    %v1206 = vmul.f32 %v1194, %v1181
    %v1207 = vmul.f32 %v1194, %v1182
    %v1208 = vmul.f32 %v1194, %v1183
    %v1209 = vmul.f32 %v1194, %v1184
    %v1210 = vmul.f32 %v1194, %v1185
    %v1211 = vmul.f32 %v1194, %v1186
    %v1212 = vmul.f32 %v1194, %v1187
    %v1213 = vmul.f32 %v1194, %v1188
    %v1214 = vmul.f32 %v1194, %v1189
    %v1215 = vmul.f32 %v1194, %v1190
    %v1216 = vmul.f32 %v1194, %v1191
    %v1217 = vmul.f32 %v1194, %v1192
    %v1218 = vmul.f32 %v1194, %v1193
    %v1219 = vadd.f32 %v1144, %v1195
    %v1220 = vadd.f32 %v1145, %v1196
    %v1221 = vadd.f32 %v1146, %v1197
    %v1222 = vadd.f32 %v1147, %v1198
    %v1223 = vadd.f32 %v1148, %v1199
    %v1224 = vadd.f32 %v1149, %v1200
    %v1225 = vadd.f32 %v1150, %v1201
    %v1226 = vadd.f32 %v1151, %v1202
    %v1227 = vadd.f32 %v1152, %v1203
    %v1228 = vadd.f32 %v1153, %v1204
    %v1229 = vadd.f32 %v1154, %v1205
    %v1230 = vadd.f32 %v1155, %v1206
    %v1231 = vadd.f32 %v1156, %v1207
    %v1232 = vadd.f32 %v1157, %v1208
    %v1233 = vadd.f32 %v1158, %v1209
    %v1234 = vadd.f32 %v1159, %v1210
    %v1235 = vadd.f32 %v1160, %v1211
    %v1236 = vadd.f32 %v1161, %v1212
    %v1237 = vadd.f32 %v1162, %v1213
    %v1238 = vadd.f32 %v1163, %v1214
    %v1239 = vadd.f32 %v1164, %v1215
    %v1240 = vadd.f32 %v1165, %v1216
    %v1241 = vadd.f32 %v1166, %v1217
    %v1242 = vadd.f32 %v1167, %v1218
    %s1243 = sld [smem:[#allocation6 + $0x10]]
    %v1244 = vld [vmem:[%s1169 + $0x1] sm:$0xff]
    %v1245 = vld [vmem:[%s1169 + $0x9] sm:$0xf]
    %v1246 = vld [vmem:[%s1169 + $0x11] sm:$0xff]
    %v1247 = vld [vmem:[%s1169 + $0x19] sm:$0xf]
    %v1248 = vld [vmem:[%s1169 + $0x21] sm:$0xff]
    %v1249 = vld [vmem:[%s1169 + $0x29] sm:$0xf]
    %v1250 = vld [vmem:[%s1169 + $0x31] sm:$0xff]
    %v1251 = vld [vmem:[%s1169 + $0x39] sm:$0xf]
    %v1252 = vld [vmem:[%s1169 + $0x41] sm:$0xff]
    %v1253 = vld [vmem:[%s1169 + $0x49] sm:$0xf]
    %v1254 = vld [vmem:[%s1169 + $0x51] sm:$0xff]
    %v1255 = vld [vmem:[%s1169 + $0x59] sm:$0xf]
    %v1256 = vld [vmem:[%s1169 + $0x61] sm:$0xff]
    %v1257 = vld [vmem:[%s1169 + $0x69] sm:$0xf]
    %v1258 = vld [vmem:[%s1169 + $0x71] sm:$0xff]
    %v1259 = vld [vmem:[%s1169 + $0x79] sm:$0xf]
    %v1260 = vld [vmem:[%s1169 + $0x81] sm:$0xff]
    %v1261 = vld [vmem:[%s1169 + $0x89] sm:$0xf]
    %v1262 = vld [vmem:[%s1169 + $0x91] sm:$0xff]
    %v1263 = vld [vmem:[%s1169 + $0x99] sm:$0xf]
    %v1264 = vld [vmem:[%s1169 + $0xa1] sm:$0xff]
    %v1265 = vld [vmem:[%s1169 + $0xa9] sm:$0xf]
    %v1266 = vld [vmem:[%s1169 + $0xb1] sm:$0xff]
    %v1267 = vld [vmem:[%s1169 + $0xb9] sm:$0xf]
    %v1268 = vstv %s1243
    %v1269 = vmul.f32 %v1268, %v1244
    %v1270 = vmul.f32 %v1268, %v1245
    %v1271 = vmul.f32 %v1268, %v1246
    %v1272 = vmul.f32 %v1268, %v1247
    %v1273 = vmul.f32 %v1268, %v1248
    %v1274 = vmul.f32 %v1268, %v1249
    %v1275 = vmul.f32 %v1268, %v1250
    %v1276 = vmul.f32 %v1268, %v1251
    %v1277 = vmul.f32 %v1268, %v1252
    %v1278 = vmul.f32 %v1268, %v1253
    %v1279 = vmul.f32 %v1268, %v1254
    %v1280 = vmul.f32 %v1268, %v1255
    %v1281 = vmul.f32 %v1268, %v1256
    %v1282 = vmul.f32 %v1268, %v1257
    %v1283 = vmul.f32 %v1268, %v1258
    %v1284 = vmul.f32 %v1268, %v1259
    %v1285 = vmul.f32 %v1268, %v1260
    %v1286 = vmul.f32 %v1268, %v1261
    %v1287 = vmul.f32 %v1268, %v1262
    %v1288 = vmul.f32 %v1268, %v1263
    %v1289 = vmul.f32 %v1268, %v1264
    %v1290 = vmul.f32 %v1268, %v1265
    %v1291 = vmul.f32 %v1268, %v1266
    %v1292 = vmul.f32 %v1268, %v1267
    %v1293 = vadd.f32 %v1219, %v1269
    %v1294 = vadd.f32 %v1220, %v1270
    %v1295 = vadd.f32 %v1221, %v1271
    %v1296 = vadd.f32 %v1222, %v1272
    %v1297 = vadd.f32 %v1223, %v1273
    %v1298 = vadd.f32 %v1224, %v1274
    %v1299 = vadd.f32 %v1225, %v1275
    %v1300 = vadd.f32 %v1226, %v1276
    %v1301 = vadd.f32 %v1227, %v1277
    %v1302 = vadd.f32 %v1228, %v1278
    %v1303 = vadd.f32 %v1229, %v1279
    %v1304 = vadd.f32 %v1230, %v1280
    %v1305 = vadd.f32 %v1231, %v1281
    %v1306 = vadd.f32 %v1232, %v1282
    %v1307 = vadd.f32 %v1233, %v1283
    %v1308 = vadd.f32 %v1234, %v1284
    %v1309 = vadd.f32 %v1235, %v1285
    %v1310 = vadd.f32 %v1236, %v1286
    %v1311 = vadd.f32 %v1237, %v1287
    %v1312 = vadd.f32 %v1238, %v1288
    %v1313 = vadd.f32 %v1239, %v1289
    %v1314 = vadd.f32 %v1240, %v1290
    %v1315 = vadd.f32 %v1241, %v1291
    %v1316 = vadd.f32 %v1242, %v1292
    %s1317 = sld [smem:[#allocation6 + $0x11]]
    %v1318 = vld [vmem:[%s1169 + $0x2] sm:$0xff]
    %v1319 = vld [vmem:[%s1169 + $0xa] sm:$0xf]
    %v1320 = vld [vmem:[%s1169 + $0x12] sm:$0xff]
    %v1321 = vld [vmem:[%s1169 + $0x1a] sm:$0xf]
    %v1322 = vld [vmem:[%s1169 + $0x22] sm:$0xff]
    %v1323 = vld [vmem:[%s1169 + $0x2a] sm:$0xf]
    %v1324 = vld [vmem:[%s1169 + $0x32] sm:$0xff]
    %v1325 = vld [vmem:[%s1169 + $0x3a] sm:$0xf]
    %v1326 = vld [vmem:[%s1169 + $0x42] sm:$0xff]
    %v1327 = vld [vmem:[%s1169 + $0x4a] sm:$0xf]
    %v1328 = vld [vmem:[%s1169 + $0x52] sm:$0xff]
    %v1329 = vld [vmem:[%s1169 + $0x5a] sm:$0xf]
    %v1330 = vld [vmem:[%s1169 + $0x62] sm:$0xff]
    %v1331 = vld [vmem:[%s1169 + $0x6a] sm:$0xf]
    %v1332 = vld [vmem:[%s1169 + $0x72] sm:$0xff]
    %v1333 = vld [vmem:[%s1169 + $0x7a] sm:$0xf]
    %v1334 = vld [vmem:[%s1169 + $0x82] sm:$0xff]
    %v1335 = vld [vmem:[%s1169 + $0x8a] sm:$0xf]
    %v1336 = vld [vmem:[%s1169 + $0x92] sm:$0xff]
    %v1337 = vld [vmem:[%s1169 + $0x9a] sm:$0xf]
    %v1338 = vld [vmem:[%s1169 + $0xa2] sm:$0xff]
    %v1339 = vld [vmem:[%s1169 + $0xaa] sm:$0xf]
    %v1340 = vld [vmem:[%s1169 + $0xb2] sm:$0xff]
    %v1341 = vld [vmem:[%s1169 + $0xba] sm:$0xf]
    %v1342 = vstv %s1317
    %v1343 = vmul.f32 %v1342, %v1318
    %v1344 = vmul.f32 %v1342, %v1319
    %v1345 = vmul.f32 %v1342, %v1320
    %v1346 = vmul.f32 %v1342, %v1321
    %v1347 = vmul.f32 %v1342, %v1322
    %v1348 = vmul.f32 %v1342, %v1323
    %v1349 = vmul.f32 %v1342, %v1324
    %v1350 = vmul.f32 %v1342, %v1325
    %v1351 = vmul.f32 %v1342, %v1326
    %v1352 = vmul.f32 %v1342, %v1327
    %v1353 = vmul.f32 %v1342, %v1328
    %v1354 = vmul.f32 %v1342, %v1329
    %v1355 = vmul.f32 %v1342, %v1330
    %v1356 = vmul.f32 %v1342, %v1331
    %v1357 = vmul.f32 %v1342, %v1332
    %v1358 = vmul.f32 %v1342, %v1333
    %v1359 = vmul.f32 %v1342, %v1334
    %v1360 = vmul.f32 %v1342, %v1335
    %v1361 = vmul.f32 %v1342, %v1336
    %v1362 = vmul.f32 %v1342, %v1337
    %v1363 = vmul.f32 %v1342, %v1338
    %v1364 = vmul.f32 %v1342, %v1339
    %v1365 = vmul.f32 %v1342, %v1340
    %v1366 = vmul.f32 %v1342, %v1341
    %v1367 = vadd.f32 %v1293, %v1343
    %v1368 = vadd.f32 %v1294, %v1344
    %v1369 = vadd.f32 %v1295, %v1345
    %v1370 = vadd.f32 %v1296, %v1346
    %v1371 = vadd.f32 %v1297, %v1347
    %v1372 = vadd.f32 %v1298, %v1348
    %v1373 = vadd.f32 %v1299, %v1349
    %v1374 = vadd.f32 %v1300, %v1350
    %v1375 = vadd.f32 %v1301, %v1351
    %v1376 = vadd.f32 %v1302, %v1352
    %v1377 = vadd.f32 %v1303, %v1353
    %v1378 = vadd.f32 %v1304, %v1354
    %v1379 = vadd.f32 %v1305, %v1355
    %v1380 = vadd.f32 %v1306, %v1356
    %v1381 = vadd.f32 %v1307, %v1357
    %v1382 = vadd.f32 %v1308, %v1358
    %v1383 = vadd.f32 %v1309, %v1359
    %v1384 = vadd.f32 %v1310, %v1360
    %v1385 = vadd.f32 %v1311, %v1361
    %v1386 = vadd.f32 %v1312, %v1362
    %v1387 = vadd.f32 %v1313, %v1363
    %v1388 = vadd.f32 %v1314, %v1364
    %v1389 = vadd.f32 %v1315, %v1365
    %v1390 = vadd.f32 %v1316, %v1366
    %s1391 = sld [smem:[#allocation6 + $0x12]]
    %v1392 = vld [vmem:[%s1169 + $0x3] sm:$0xff]
    %v1393 = vld [vmem:[%s1169 + $0xb] sm:$0xf]
    %v1394 = vld [vmem:[%s1169 + $0x13] sm:$0xff]
    %v1395 = vld [vmem:[%s1169 + $0x1b] sm:$0xf]
    %v1396 = vld [vmem:[%s1169 + $0x23] sm:$0xff]
    %v1397 = vld [vmem:[%s1169 + $0x2b] sm:$0xf]
    %v1398 = vld [vmem:[%s1169 + $0x33] sm:$0xff]
    %v1399 = vld [vmem:[%s1169 + $0x3b] sm:$0xf]
    %v1400 = vld [vmem:[%s1169 + $0x43] sm:$0xff]
    %v1401 = vld [vmem:[%s1169 + $0x4b] sm:$0xf]
    %v1402 = vld [vmem:[%s1169 + $0x53] sm:$0xff]
    %v1403 = vld [vmem:[%s1169 + $0x5b] sm:$0xf]
    %v1404 = vld [vmem:[%s1169 + $0x63] sm:$0xff]
    %v1405 = vld [vmem:[%s1169 + $0x6b] sm:$0xf]
    %v1406 = vld [vmem:[%s1169 + $0x73] sm:$0xff]
    %v1407 = vld [vmem:[%s1169 + $0x7b] sm:$0xf]
    %v1408 = vld [vmem:[%s1169 + $0x83] sm:$0xff]
    %v1409 = vld [vmem:[%s1169 + $0x8b] sm:$0xf]
    %v1410 = vld [vmem:[%s1169 + $0x93] sm:$0xff]
    %v1411 = vld [vmem:[%s1169 + $0x9b] sm:$0xf]
    %v1412 = vld [vmem:[%s1169 + $0xa3] sm:$0xff]
    %v1413 = vld [vmem:[%s1169 + $0xab] sm:$0xf]
    %v1414 = vld [vmem:[%s1169 + $0xb3] sm:$0xff]
    %v1415 = vld [vmem:[%s1169 + $0xbb] sm:$0xf]
    %v1416 = vstv %s1391
    %v1417 = vmul.f32 %v1416, %v1392
    %v1418 = vmul.f32 %v1416, %v1393
    %v1419 = vmul.f32 %v1416, %v1394
    %v1420 = vmul.f32 %v1416, %v1395
    %v1421 = vmul.f32 %v1416, %v1396
    %v1422 = vmul.f32 %v1416, %v1397
    %v1423 = vmul.f32 %v1416, %v1398
    %v1424 = vmul.f32 %v1416, %v1399
    %v1425 = vmul.f32 %v1416, %v1400
    %v1426 = vmul.f32 %v1416, %v1401
    %v1427 = vmul.f32 %v1416, %v1402
    %v1428 = vmul.f32 %v1416, %v1403
    %v1429 = vmul.f32 %v1416, %v1404
    %v1430 = vmul.f32 %v1416, %v1405
    %v1431 = vmul.f32 %v1416, %v1406
    %v1432 = vmul.f32 %v1416, %v1407
    %v1433 = vmul.f32 %v1416, %v1408
    %v1434 = vmul.f32 %v1416, %v1409
    %v1435 = vmul.f32 %v1416, %v1410
    %v1436 = vmul.f32 %v1416, %v1411
    %v1437 = vmul.f32 %v1416, %v1412
    %v1438 = vmul.f32 %v1416, %v1413
    %v1439 = vmul.f32 %v1416, %v1414
    %v1440 = vmul.f32 %v1416, %v1415
    %v1441 = vadd.f32 %v1367, %v1417
    %v1442 = vadd.f32 %v1368, %v1418
    %v1443 = vadd.f32 %v1369, %v1419
    %v1444 = vadd.f32 %v1370, %v1420
    %v1445 = vadd.f32 %v1371, %v1421
    %v1446 = vadd.f32 %v1372, %v1422
    %v1447 = vadd.f32 %v1373, %v1423
    %v1448 = vadd.f32 %v1374, %v1424
    %v1449 = vadd.f32 %v1375, %v1425
    %v1450 = vadd.f32 %v1376, %v1426
    %v1451 = vadd.f32 %v1377, %v1427
    %v1452 = vadd.f32 %v1378, %v1428
    %v1453 = vadd.f32 %v1379, %v1429
    %v1454 = vadd.f32 %v1380, %v1430
    %v1455 = vadd.f32 %v1381, %v1431
    %v1456 = vadd.f32 %v1382, %v1432
    %v1457 = vadd.f32 %v1383, %v1433
    %v1458 = vadd.f32 %v1384, %v1434
    %v1459 = vadd.f32 %v1385, %v1435
    %v1460 = vadd.f32 %v1386, %v1436
    %v1461 = vadd.f32 %v1387, %v1437
    %v1462 = vadd.f32 %v1388, %v1438
    %v1463 = vadd.f32 %v1389, %v1439
    %v1464 = vadd.f32 %v1390, %v1440
    %s1465 = sld [smem:[#allocation6 + $0x13]]
    %v1466 = vld [vmem:[%s1169 + $0x4] sm:$0xff]
    %v1467 = vld [vmem:[%s1169 + $0xc] sm:$0xf]
    %v1468 = vld [vmem:[%s1169 + $0x14] sm:$0xff]
    %v1469 = vld [vmem:[%s1169 + $0x1c] sm:$0xf]
    %v1470 = vld [vmem:[%s1169 + $0x24] sm:$0xff]
    %v1471 = vld [vmem:[%s1169 + $0x2c] sm:$0xf]
    %v1472 = vld [vmem:[%s1169 + $0x34] sm:$0xff]
    %v1473 = vld [vmem:[%s1169 + $0x3c] sm:$0xf]
    %v1474 = vld [vmem:[%s1169 + $0x44] sm:$0xff]
    %v1475 = vld [vmem:[%s1169 + $0x4c] sm:$0xf]
    %v1476 = vld [vmem:[%s1169 + $0x54] sm:$0xff]
    %v1477 = vld [vmem:[%s1169 + $0x5c] sm:$0xf]
    %v1478 = vld [vmem:[%s1169 + $0x64] sm:$0xff]
    %v1479 = vld [vmem:[%s1169 + $0x6c] sm:$0xf]
    %v1480 = vld [vmem:[%s1169 + $0x74] sm:$0xff]
    %v1481 = vld [vmem:[%s1169 + $0x7c] sm:$0xf]
    %v1482 = vld [vmem:[%s1169 + $0x84] sm:$0xff]
    %v1483 = vld [vmem:[%s1169 + $0x8c] sm:$0xf]
    %v1484 = vld [vmem:[%s1169 + $0x94] sm:$0xff]
    %v1485 = vld [vmem:[%s1169 + $0x9c] sm:$0xf]
    %v1486 = vld [vmem:[%s1169 + $0xa4] sm:$0xff]
    %v1487 = vld [vmem:[%s1169 + $0xac] sm:$0xf]
    %v1488 = vld [vmem:[%s1169 + $0xb4] sm:$0xff]
    %v1489 = vld [vmem:[%s1169 + $0xbc] sm:$0xf]
    %v1490 = vstv %s1465
    %v1491 = vmul.f32 %v1490, %v1466
    %v1492 = vmul.f32 %v1490, %v1467
    %v1493 = vmul.f32 %v1490, %v1468
    %v1494 = vmul.f32 %v1490, %v1469
    %v1495 = vmul.f32 %v1490, %v1470
    %v1496 = vmul.f32 %v1490, %v1471
    %v1497 = vmul.f32 %v1490, %v1472
    %v1498 = vmul.f32 %v1490, %v1473
    %v1499 = vmul.f32 %v1490, %v1474
    %v1500 = vmul.f32 %v1490, %v1475
    %v1501 = vmul.f32 %v1490, %v1476
    %v1502 = vmul.f32 %v1490, %v1477
    %v1503 = vmul.f32 %v1490, %v1478
    %v1504 = vmul.f32 %v1490, %v1479
    %v1505 = vmul.f32 %v1490, %v1480
    %v1506 = vmul.f32 %v1490, %v1481
    %v1507 = vmul.f32 %v1490, %v1482
    %v1508 = vmul.f32 %v1490, %v1483
    %v1509 = vmul.f32 %v1490, %v1484
    %v1510 = vmul.f32 %v1490, %v1485
    %v1511 = vmul.f32 %v1490, %v1486
    %v1512 = vmul.f32 %v1490, %v1487
    %v1513 = vmul.f32 %v1490, %v1488
    %v1514 = vmul.f32 %v1490, %v1489
    %v1515 = vadd.f32 %v1441, %v1491
    %v1516 = vadd.f32 %v1442, %v1492
    %v1517 = vadd.f32 %v1443, %v1493
    %v1518 = vadd.f32 %v1444, %v1494
    %v1519 = vadd.f32 %v1445, %v1495
    %v1520 = vadd.f32 %v1446, %v1496
    %v1521 = vadd.f32 %v1447, %v1497
    %v1522 = vadd.f32 %v1448, %v1498
    %v1523 = vadd.f32 %v1449, %v1499
    %v1524 = vadd.f32 %v1450, %v1500
    %v1525 = vadd.f32 %v1451, %v1501
    %v1526 = vadd.f32 %v1452, %v1502
    %v1527 = vadd.f32 %v1453, %v1503
    %v1528 = vadd.f32 %v1454, %v1504
    %v1529 = vadd.f32 %v1455, %v1505
    %v1530 = vadd.f32 %v1456, %v1506
    %v1531 = vadd.f32 %v1457, %v1507
    %v1532 = vadd.f32 %v1458, %v1508
    %v1533 = vadd.f32 %v1459, %v1509
    %v1534 = vadd.f32 %v1460, %v1510
    %v1535 = vadd.f32 %v1461, %v1511
    %v1536 = vadd.f32 %v1462, %v1512
    %v1537 = vadd.f32 %v1463, %v1513
    %v1538 = vadd.f32 %v1464, %v1514
    %s1539 = sld [smem:[#allocation6 + $0x14]]
    %s1540 = scalar_lea.vmem [#allocation2], 64
    %v1541 = vld [vmem:[%s1540] sm:$0xff]
    %v1542 = vld [vmem:[%s1540 + $0x8] sm:$0xf]
    %v1543 = vld [vmem:[%s1540 + $0x10] sm:$0xff]
    %v1544 = vld [vmem:[%s1540 + $0x18] sm:$0xf]
    %v1545 = vld [vmem:[%s1540 + $0x20] sm:$0xff]
    %v1546 = vld [vmem:[%s1540 + $0x28] sm:$0xf]
    %v1547 = vld [vmem:[%s1540 + $0x30] sm:$0xff]
    %v1548 = vld [vmem:[%s1540 + $0x38] sm:$0xf]
    %v1549 = vld [vmem:[%s1540 + $0x40] sm:$0xff]
    %v1550 = vld [vmem:[%s1540 + $0x48] sm:$0xf]
    %v1551 = vld [vmem:[%s1540 + $0x50] sm:$0xff]
    %v1552 = vld [vmem:[%s1540 + $0x58] sm:$0xf]
    %v1553 = vld [vmem:[%s1540 + $0x60] sm:$0xff]
    %v1554 = vld [vmem:[%s1540 + $0x68] sm:$0xf]
    %v1555 = vld [vmem:[%s1540 + $0x70] sm:$0xff]
    %v1556 = vld [vmem:[%s1540 + $0x78] sm:$0xf]
    %v1557 = vld [vmem:[%s1540 + $0x80] sm:$0xff]
    %v1558 = vld [vmem:[%s1540 + $0x88] sm:$0xf]
    %v1559 = vld [vmem:[%s1540 + $0x90] sm:$0xff]
    %v1560 = vld [vmem:[%s1540 + $0x98] sm:$0xf]
    %v1561 = vld [vmem:[%s1540 + $0xa0] sm:$0xff]
    %v1562 = vld [vmem:[%s1540 + $0xa8] sm:$0xf]
    %v1563 = vld [vmem:[%s1540 + $0xb0] sm:$0xff]
    %v1564 = vld [vmem:[%s1540 + $0xb8] sm:$0xf]
    %v1565 = vstv %s1539
    %v1566 = vmul.f32 %v1565, %v1541
    %v1567 = vmul.f32 %v1565, %v1542
    %v1568 = vmul.f32 %v1565, %v1543
    %v1569 = vmul.f32 %v1565, %v1544
    %v1570 = vmul.f32 %v1565, %v1545
    %v1571 = vmul.f32 %v1565, %v1546
    %v1572 = vmul.f32 %v1565, %v1547
    %v1573 = vmul.f32 %v1565, %v1548
    %v1574 = vmul.f32 %v1565, %v1549
    %v1575 = vmul.f32 %v1565, %v1550
    %v1576 = vmul.f32 %v1565, %v1551
    %v1577 = vmul.f32 %v1565, %v1552
    %v1578 = vmul.f32 %v1565, %v1553
    %v1579 = vmul.f32 %v1565, %v1554
    %v1580 = vmul.f32 %v1565, %v1555
    %v1581 = vmul.f32 %v1565, %v1556
    %v1582 = vmul.f32 %v1565, %v1557
    %v1583 = vmul.f32 %v1565, %v1558
    %v1584 = vmul.f32 %v1565, %v1559
    %v1585 = vmul.f32 %v1565, %v1560
    %v1586 = vmul.f32 %v1565, %v1561
    %v1587 = vmul.f32 %v1565, %v1562
    %v1588 = vmul.f32 %v1565, %v1563
    %v1589 = vmul.f32 %v1565, %v1564
    %v1590 = vadd.f32 %v1515, %v1566
    %v1591 = vadd.f32 %v1516, %v1567
    %v1592 = vadd.f32 %v1517, %v1568
    %v1593 = vadd.f32 %v1518, %v1569
    %v1594 = vadd.f32 %v1519, %v1570
    %v1595 = vadd.f32 %v1520, %v1571
    %v1596 = vadd.f32 %v1521, %v1572
    %v1597 = vadd.f32 %v1522, %v1573
    %v1598 = vadd.f32 %v1523, %v1574
    %v1599 = vadd.f32 %v1524, %v1575
    %v1600 = vadd.f32 %v1525, %v1576
    %v1601 = vadd.f32 %v1526, %v1577
    %v1602 = vadd.f32 %v1527, %v1578
    %v1603 = vadd.f32 %v1528, %v1579
    %v1604 = vadd.f32 %v1529, %v1580
    %v1605 = vadd.f32 %v1530, %v1581
    %v1606 = vadd.f32 %v1531, %v1582
    %v1607 = vadd.f32 %v1532, %v1583
    %v1608 = vadd.f32 %v1533, %v1584
    %v1609 = vadd.f32 %v1534, %v1585
    %v1610 = vadd.f32 %v1535, %v1586
    %v1611 = vadd.f32 %v1536, %v1587
    %v1612 = vadd.f32 %v1537, %v1588
    %v1613 = vadd.f32 %v1538, %v1589
    %s1614 = sld [smem:[#allocation6 + $0x15]]
    %v1615 = vld [vmem:[%s1540 + $0x1] sm:$0xff]
    %v1616 = vld [vmem:[%s1540 + $0x9] sm:$0xf]
    %v1617 = vld [vmem:[%s1540 + $0x11] sm:$0xff]
    %v1618 = vld [vmem:[%s1540 + $0x19] sm:$0xf]
    %v1619 = vld [vmem:[%s1540 + $0x21] sm:$0xff]
    %v1620 = vld [vmem:[%s1540 + $0x29] sm:$0xf]
    %v1621 = vld [vmem:[%s1540 + $0x31] sm:$0xff]
    %v1622 = vld [vmem:[%s1540 + $0x39] sm:$0xf]
    %v1623 = vld [vmem:[%s1540 + $0x41] sm:$0xff]
    %v1624 = vld [vmem:[%s1540 + $0x49] sm:$0xf]
    %v1625 = vld [vmem:[%s1540 + $0x51] sm:$0xff]
    %v1626 = vld [vmem:[%s1540 + $0x59] sm:$0xf]
    %v1627 = vld [vmem:[%s1540 + $0x61] sm:$0xff]
    %v1628 = vld [vmem:[%s1540 + $0x69] sm:$0xf]
    %v1629 = vld [vmem:[%s1540 + $0x71] sm:$0xff]
    %v1630 = vld [vmem:[%s1540 + $0x79] sm:$0xf]
    %v1631 = vld [vmem:[%s1540 + $0x81] sm:$0xff]
    %v1632 = vld [vmem:[%s1540 + $0x89] sm:$0xf]
    %v1633 = vld [vmem:[%s1540 + $0x91] sm:$0xff]
    %v1634 = vld [vmem:[%s1540 + $0x99] sm:$0xf]
    %v1635 = vld [vmem:[%s1540 + $0xa1] sm:$0xff]
    %v1636 = vld [vmem:[%s1540 + $0xa9] sm:$0xf]
    %v1637 = vld [vmem:[%s1540 + $0xb1] sm:$0xff]
    %v1638 = vld [vmem:[%s1540 + $0xb9] sm:$0xf]
    %v1639 = vstv %s1614
    %v1640 = vmul.f32 %v1639, %v1615
    %v1641 = vmul.f32 %v1639, %v1616
    %v1642 = vmul.f32 %v1639, %v1617
    %v1643 = vmul.f32 %v1639, %v1618
    %v1644 = vmul.f32 %v1639, %v1619
    %v1645 = vmul.f32 %v1639, %v1620
    %v1646 = vmul.f32 %v1639, %v1621
    %v1647 = vmul.f32 %v1639, %v1622
    %v1648 = vmul.f32 %v1639, %v1623
    %v1649 = vmul.f32 %v1639, %v1624
    %v1650 = vmul.f32 %v1639, %v1625
    %v1651 = vmul.f32 %v1639, %v1626
    %v1652 = vmul.f32 %v1639, %v1627
    %v1653 = vmul.f32 %v1639, %v1628
    %v1654 = vmul.f32 %v1639, %v1629
    %v1655 = vmul.f32 %v1639, %v1630
    %v1656 = vmul.f32 %v1639, %v1631
    %v1657 = vmul.f32 %v1639, %v1632
    %v1658 = vmul.f32 %v1639, %v1633
    %v1659 = vmul.f32 %v1639, %v1634
    %v1660 = vmul.f32 %v1639, %v1635
    %v1661 = vmul.f32 %v1639, %v1636
    %v1662 = vmul.f32 %v1639, %v1637
    %v1663 = vmul.f32 %v1639, %v1638
    %v1664 = vadd.f32 %v1590, %v1640
    %v1665 = vadd.f32 %v1591, %v1641
    %v1666 = vadd.f32 %v1592, %v1642
    %v1667 = vadd.f32 %v1593, %v1643
    %v1668 = vadd.f32 %v1594, %v1644
    %v1669 = vadd.f32 %v1595, %v1645
    %v1670 = vadd.f32 %v1596, %v1646
    %v1671 = vadd.f32 %v1597, %v1647
    %v1672 = vadd.f32 %v1598, %v1648
    %v1673 = vadd.f32 %v1599, %v1649
    %v1674 = vadd.f32 %v1600, %v1650
    %v1675 = vadd.f32 %v1601, %v1651
    %v1676 = vadd.f32 %v1602, %v1652
    %v1677 = vadd.f32 %v1603, %v1653
    %v1678 = vadd.f32 %v1604, %v1654
    %v1679 = vadd.f32 %v1605, %v1655
    %v1680 = vadd.f32 %v1606, %v1656
    %v1681 = vadd.f32 %v1607, %v1657
    %v1682 = vadd.f32 %v1608, %v1658
    %v1683 = vadd.f32 %v1609, %v1659
    %v1684 = vadd.f32 %v1610, %v1660
    %v1685 = vadd.f32 %v1611, %v1661
    %v1686 = vadd.f32 %v1612, %v1662
    %v1687 = vadd.f32 %v1613, %v1663
    %s1688 = sld [smem:[#allocation6 + $0x16]]
    %v1689 = vld [vmem:[%s1540 + $0x2] sm:$0xff]
    %v1690 = vld [vmem:[%s1540 + $0xa] sm:$0xf]
    %v1691 = vld [vmem:[%s1540 + $0x12] sm:$0xff]
    %v1692 = vld [vmem:[%s1540 + $0x1a] sm:$0xf]
    %v1693 = vld [vmem:[%s1540 + $0x22] sm:$0xff]
    %v1694 = vld [vmem:[%s1540 + $0x2a] sm:$0xf]
    %v1695 = vld [vmem:[%s1540 + $0x32] sm:$0xff]
    %v1696 = vld [vmem:[%s1540 + $0x3a] sm:$0xf]
    %v1697 = vld [vmem:[%s1540 + $0x42] sm:$0xff]
    %v1698 = vld [vmem:[%s1540 + $0x4a] sm:$0xf]
    %v1699 = vld [vmem:[%s1540 + $0x52] sm:$0xff]
    %v1700 = vld [vmem:[%s1540 + $0x5a] sm:$0xf]
    %v1701 = vld [vmem:[%s1540 + $0x62] sm:$0xff]
    %v1702 = vld [vmem:[%s1540 + $0x6a] sm:$0xf]
    %v1703 = vld [vmem:[%s1540 + $0x72] sm:$0xff]
    %v1704 = vld [vmem:[%s1540 + $0x7a] sm:$0xf]
    %v1705 = vld [vmem:[%s1540 + $0x82] sm:$0xff]
    %v1706 = vld [vmem:[%s1540 + $0x8a] sm:$0xf]
    %v1707 = vld [vmem:[%s1540 + $0x92] sm:$0xff]
    %v1708 = vld [vmem:[%s1540 + $0x9a] sm:$0xf]
    %v1709 = vld [vmem:[%s1540 + $0xa2] sm:$0xff]
    %v1710 = vld [vmem:[%s1540 + $0xaa] sm:$0xf]
    %v1711 = vld [vmem:[%s1540 + $0xb2] sm:$0xff]
    %v1712 = vld [vmem:[%s1540 + $0xba] sm:$0xf]
    %v1713 = vstv %s1688
    %v1714 = vmul.f32 %v1713, %v1689
    %v1715 = vmul.f32 %v1713, %v1690
    %v1716 = vmul.f32 %v1713, %v1691
    %v1717 = vmul.f32 %v1713, %v1692
    %v1718 = vmul.f32 %v1713, %v1693
    %v1719 = vmul.f32 %v1713, %v1694
    %v1720 = vmul.f32 %v1713, %v1695
    %v1721 = vmul.f32 %v1713, %v1696
    %v1722 = vmul.f32 %v1713, %v1697
    %v1723 = vmul.f32 %v1713, %v1698
    %v1724 = vmul.f32 %v1713, %v1699
    %v1725 = vmul.f32 %v1713, %v1700
    %v1726 = vmul.f32 %v1713, %v1701
    %v1727 = vmul.f32 %v1713, %v1702
    %v1728 = vmul.f32 %v1713, %v1703
    %v1729 = vmul.f32 %v1713, %v1704
    %v1730 = vmul.f32 %v1713, %v1705
    %v1731 = vmul.f32 %v1713, %v1706
    %v1732 = vmul.f32 %v1713, %v1707
    %v1733 = vmul.f32 %v1713, %v1708
    %v1734 = vmul.f32 %v1713, %v1709
    %v1735 = vmul.f32 %v1713, %v1710
    %v1736 = vmul.f32 %v1713, %v1711
    %v1737 = vmul.f32 %v1713, %v1712
    %v1738 = vadd.f32 %v1664, %v1714
    %v1739 = vadd.f32 %v1665, %v1715
    %v1740 = vadd.f32 %v1666, %v1716
    %v1741 = vadd.f32 %v1667, %v1717
    %v1742 = vadd.f32 %v1668, %v1718
    %v1743 = vadd.f32 %v1669, %v1719
    %v1744 = vadd.f32 %v1670, %v1720
    %v1745 = vadd.f32 %v1671, %v1721
    %v1746 = vadd.f32 %v1672, %v1722
    %v1747 = vadd.f32 %v1673, %v1723
    %v1748 = vadd.f32 %v1674, %v1724
    %v1749 = vadd.f32 %v1675, %v1725
    %v1750 = vadd.f32 %v1676, %v1726
    %v1751 = vadd.f32 %v1677, %v1727
    %v1752 = vadd.f32 %v1678, %v1728
    %v1753 = vadd.f32 %v1679, %v1729
    %v1754 = vadd.f32 %v1680, %v1730
    %v1755 = vadd.f32 %v1681, %v1731
    %v1756 = vadd.f32 %v1682, %v1732
    %v1757 = vadd.f32 %v1683, %v1733
    %v1758 = vadd.f32 %v1684, %v1734
    %v1759 = vadd.f32 %v1685, %v1735
    %v1760 = vadd.f32 %v1686, %v1736
    %v1761 = vadd.f32 %v1687, %v1737
    %s1762 = sld [smem:[#allocation6 + $0x17]]
    %v1763 = vld [vmem:[%s1540 + $0x3] sm:$0xff]
    %v1764 = vld [vmem:[%s1540 + $0xb] sm:$0xf]
    %v1765 = vld [vmem:[%s1540 + $0x13] sm:$0xff]
    %v1766 = vld [vmem:[%s1540 + $0x1b] sm:$0xf]
    %v1767 = vld [vmem:[%s1540 + $0x23] sm:$0xff]
    %v1768 = vld [vmem:[%s1540 + $0x2b] sm:$0xf]
    %v1769 = vld [vmem:[%s1540 + $0x33] sm:$0xff]
    %v1770 = vld [vmem:[%s1540 + $0x3b] sm:$0xf]
    %v1771 = vld [vmem:[%s1540 + $0x43] sm:$0xff]
    %v1772 = vld [vmem:[%s1540 + $0x4b] sm:$0xf]
    %v1773 = vld [vmem:[%s1540 + $0x53] sm:$0xff]
    %v1774 = vld [vmem:[%s1540 + $0x5b] sm:$0xf]
    %v1775 = vld [vmem:[%s1540 + $0x63] sm:$0xff]
    %v1776 = vld [vmem:[%s1540 + $0x6b] sm:$0xf]
    %v1777 = vld [vmem:[%s1540 + $0x73] sm:$0xff]
    %v1778 = vld [vmem:[%s1540 + $0x7b] sm:$0xf]
    %v1779 = vld [vmem:[%s1540 + $0x83] sm:$0xff]
    %v1780 = vld [vmem:[%s1540 + $0x8b] sm:$0xf]
    %v1781 = vld [vmem:[%s1540 + $0x93] sm:$0xff]
    %v1782 = vld [vmem:[%s1540 + $0x9b] sm:$0xf]
    %v1783 = vld [vmem:[%s1540 + $0xa3] sm:$0xff]
    %v1784 = vld [vmem:[%s1540 + $0xab] sm:$0xf]
    %v1785 = vld [vmem:[%s1540 + $0xb3] sm:$0xff]
    %v1786 = vld [vmem:[%s1540 + $0xbb] sm:$0xf]
    %v1787 = vstv %s1762
    %v1788 = vmul.f32 %v1787, %v1763
    %v1789 = vmul.f32 %v1787, %v1764
    %v1790 = vmul.f32 %v1787, %v1765
    %v1791 = vmul.f32 %v1787, %v1766
    %v1792 = vmul.f32 %v1787, %v1767
    %v1793 = vmul.f32 %v1787, %v1768
    %v1794 = vmul.f32 %v1787, %v1769
    %v1795 = vmul.f32 %v1787, %v1770
    %v1796 = vmul.f32 %v1787, %v1771
    %v1797 = vmul.f32 %v1787, %v1772
    %v1798 = vmul.f32 %v1787, %v1773
    %v1799 = vmul.f32 %v1787, %v1774
    %v1800 = vmul.f32 %v1787, %v1775
    %v1801 = vmul.f32 %v1787, %v1776
    %v1802 = vmul.f32 %v1787, %v1777
    %v1803 = vmul.f32 %v1787, %v1778
    %v1804 = vmul.f32 %v1787, %v1779
    %v1805 = vmul.f32 %v1787, %v1780
    %v1806 = vmul.f32 %v1787, %v1781
    %v1807 = vmul.f32 %v1787, %v1782
    %v1808 = vmul.f32 %v1787, %v1783
    %v1809 = vmul.f32 %v1787, %v1784
    %v1810 = vmul.f32 %v1787, %v1785
    %v1811 = vmul.f32 %v1787, %v1786
    %v1812 = vadd.f32 %v1738, %v1788
    %v1813 = vadd.f32 %v1739, %v1789
    %v1814 = vadd.f32 %v1740, %v1790
    %v1815 = vadd.f32 %v1741, %v1791
    %v1816 = vadd.f32 %v1742, %v1792
    %v1817 = vadd.f32 %v1743, %v1793
    %v1818 = vadd.f32 %v1744, %v1794
    %v1819 = vadd.f32 %v1745, %v1795
    %v1820 = vadd.f32 %v1746, %v1796
    %v1821 = vadd.f32 %v1747, %v1797
    %v1822 = vadd.f32 %v1748, %v1798
    %v1823 = vadd.f32 %v1749, %v1799
    %v1824 = vadd.f32 %v1750, %v1800
    %v1825 = vadd.f32 %v1751, %v1801
    %v1826 = vadd.f32 %v1752, %v1802
    %v1827 = vadd.f32 %v1753, %v1803
    %v1828 = vadd.f32 %v1754, %v1804
    %v1829 = vadd.f32 %v1755, %v1805
    %v1830 = vadd.f32 %v1756, %v1806
    %v1831 = vadd.f32 %v1757, %v1807
    %v1832 = vadd.f32 %v1758, %v1808
    %v1833 = vadd.f32 %v1759, %v1809
    %v1834 = vadd.f32 %v1760, %v1810
    %v1835 = vadd.f32 %v1761, %v1811
    %s1836 = sld [smem:[#allocation6 + $0x18]]
    %v1837 = vld [vmem:[%s1540 + $0x4] sm:$0xff]
    %v1838 = vld [vmem:[%s1540 + $0xc] sm:$0xf]
    %v1839 = vld [vmem:[%s1540 + $0x14] sm:$0xff]
    %v1840 = vld [vmem:[%s1540 + $0x1c] sm:$0xf]
    %v1841 = vld [vmem:[%s1540 + $0x24] sm:$0xff]
    %v1842 = vld [vmem:[%s1540 + $0x2c] sm:$0xf]
    %v1843 = vld [vmem:[%s1540 + $0x34] sm:$0xff]
    %v1844 = vld [vmem:[%s1540 + $0x3c] sm:$0xf]
    %v1845 = vld [vmem:[%s1540 + $0x44] sm:$0xff]
    %v1846 = vld [vmem:[%s1540 + $0x4c] sm:$0xf]
    %v1847 = vld [vmem:[%s1540 + $0x54] sm:$0xff]
    %v1848 = vld [vmem:[%s1540 + $0x5c] sm:$0xf]
    %v1849 = vld [vmem:[%s1540 + $0x64] sm:$0xff]
    %v1850 = vld [vmem:[%s1540 + $0x6c] sm:$0xf]
    %v1851 = vld [vmem:[%s1540 + $0x74] sm:$0xff]
    %v1852 = vld [vmem:[%s1540 + $0x7c] sm:$0xf]
    %v1853 = vld [vmem:[%s1540 + $0x84] sm:$0xff]
    %v1854 = vld [vmem:[%s1540 + $0x8c] sm:$0xf]
    %v1855 = vld [vmem:[%s1540 + $0x94] sm:$0xff]
    %v1856 = vld [vmem:[%s1540 + $0x9c] sm:$0xf]
    %v1857 = vld [vmem:[%s1540 + $0xa4] sm:$0xff]
    %v1858 = vld [vmem:[%s1540 + $0xac] sm:$0xf]
    %v1859 = vld [vmem:[%s1540 + $0xb4] sm:$0xff]
    %v1860 = vld [vmem:[%s1540 + $0xbc] sm:$0xf]
    %v1861 = vstv %s1836
    %v1862 = vmul.f32 %v1861, %v1837
    %v1863 = vmul.f32 %v1861, %v1838
    %v1864 = vmul.f32 %v1861, %v1839
    %v1865 = vmul.f32 %v1861, %v1840
    %v1866 = vmul.f32 %v1861, %v1841
    %v1867 = vmul.f32 %v1861, %v1842
    %v1868 = vmul.f32 %v1861, %v1843
    %v1869 = vmul.f32 %v1861, %v1844
    %v1870 = vmul.f32 %v1861, %v1845
    %v1871 = vmul.f32 %v1861, %v1846
    %v1872 = vmul.f32 %v1861, %v1847
    %v1873 = vmul.f32 %v1861, %v1848
    %v1874 = vmul.f32 %v1861, %v1849
    %v1875 = vmul.f32 %v1861, %v1850
    %v1876 = vmul.f32 %v1861, %v1851
    %v1877 = vmul.f32 %v1861, %v1852
    %v1878 = vmul.f32 %v1861, %v1853
    %v1879 = vmul.f32 %v1861, %v1854
    %v1880 = vmul.f32 %v1861, %v1855
    %v1881 = vmul.f32 %v1861, %v1856
    %v1882 = vmul.f32 %v1861, %v1857
    %v1883 = vmul.f32 %v1861, %v1858
    %v1884 = vmul.f32 %v1861, %v1859
    %v1885 = vmul.f32 %v1861, %v1860
    %v1886 = vadd.f32 %v1812, %v1862
    %v1887 = vadd.f32 %v1813, %v1863
    %v1888 = vadd.f32 %v1814, %v1864
    %v1889 = vadd.f32 %v1815, %v1865
    %v1890 = vadd.f32 %v1816, %v1866
    %v1891 = vadd.f32 %v1817, %v1867
    %v1892 = vadd.f32 %v1818, %v1868
    %v1893 = vadd.f32 %v1819, %v1869
    %v1894 = vadd.f32 %v1820, %v1870
    %v1895 = vadd.f32 %v1821, %v1871
    %v1896 = vadd.f32 %v1822, %v1872
    %v1897 = vadd.f32 %v1823, %v1873
    %v1898 = vadd.f32 %v1824, %v1874
    %v1899 = vadd.f32 %v1825, %v1875
    %v1900 = vadd.f32 %v1826, %v1876
    %v1901 = vadd.f32 %v1827, %v1877
    %v1902 = vadd.f32 %v1828, %v1878
    %v1903 = vadd.f32 %v1829, %v1879
    %v1904 = vadd.f32 %v1830, %v1880
    %v1905 = vadd.f32 %v1831, %v1881
    %v1906 = vadd.f32 %v1832, %v1882
    %v1907 = vadd.f32 %v1833, %v1883
    %v1908 = vadd.f32 %v1834, %v1884
    %v1909 = vadd.f32 %v1835, %v1885
    %v1910 = vtanh.pop %v1886
    %v1911 = vtanh.pop %v1887
    %v1912 = vtanh.pop %v1888
    %v1913 = vtanh.pop %v1889
    %v1914 = vtanh.pop %v1890
    %v1915 = vtanh.pop %v1891
    %v1916 = vtanh.pop %v1892
    %v1917 = vtanh.pop %v1893
    %v1918 = vtanh.pop %v1894
    %v1919 = vtanh.pop %v1895
    %v1920 = vtanh.pop %v1896
    %v1921 = vtanh.pop %v1897
    %v1922 = vtanh.pop %v1898
    %v1923 = vtanh.pop %v1899
    %v1924 = vtanh.pop %v1900
    %v1925 = vtanh.pop %v1901
    %v1926 = vtanh.pop %v1902
    %v1927 = vtanh.pop %v1903
    %v1928 = vtanh.pop %v1904
    %v1929 = vtanh.pop %v1905
    %v1930 = vtanh.pop %v1906
    %v1931 = vtanh.pop %v1907
    %v1932 = vtanh.pop %v1908
    %v1933 = vtanh.pop %v1909
    %v1934 = vmax.f32 %v1910, %v1914
    %v1935 = vmax.f32 %v1912, %v1916
    %v1936 = vmax.f32 %v1934, %v1918
    %v1937 = vmax.f32 %v1935, %v1920
    %v1938 = vmax.f32 %v1936, %v1922
    %v1939 = vmax.f32 %v1937, %v1924
    %v1940 = vmax.f32 %v1938, %v1926
    %v1941 = vmax.f32 %v1939, %v1928
    %v1942 = vmax.f32 %v1940, %v1930
    %v1943 = vmax.f32 %v1941, %v1932
    %v1944 = vmax.f32 %v1942, %v1943
    %vm1945 = vcmask 1043456
    %v1946 = vsel %vm1945, %v1911, -inf
    %v1947 = vsel %vm1945, %v1913, -inf
    %v1948 = vsel %vm1945, %v1915, -inf
    %v1949 = vmax.f32 %v1946, %v1948
    %v1950 = vsel %vm1945, %v1917, -inf
    %v1951 = vmax.f32 %v1947, %v1950
    %v1952 = vsel %vm1945, %v1919, -inf
    %v1953 = vmax.f32 %v1949, %v1952
    %v1954 = vsel %vm1945, %v1921, -inf
    %v1955 = vmax.f32 %v1951, %v1954
    %v1956 = vsel %vm1945, %v1923, -inf
    %v1957 = vmax.f32 %v1953, %v1956
    %v1958 = vsel %vm1945, %v1925, -inf
    %v1959 = vmax.f32 %v1955, %v1958
    %v1960 = vsel %vm1945, %v1927, -inf
    %v1961 = vmax.f32 %v1957, %v1960
    %v1962 = vsel %vm1945, %v1929, -inf
    %v1963 = vmax.f32 %v1959, %v1962
    %v1964 = vsel %vm1945, %v1931, -inf
    %v1965 = vmax.f32 %v1961, %v1964
    %v1966 = vsel %vm1945, %v1933, -inf
    %v1967 = vmax.f32 %v1963, %v1966
    %v1968 = vmax.f32 %v1965, %v1967
    %v1969 = vsel %vm1945, %v1968, -inf
    %v1970 = vmax.f32 %v1944, %v1969
    %v1971 = vrot.slane %v1970, 4
    %v1972 = vmax.f32 %v1970, %v1971
    %v1973 = vrot.slane %v1972, 2
    %v1974 = vmax.f32 %v1972, %v1973
    %v1975 = vrot.slane %v1974, 1
    %v1976 = vmax.f32 %v1974, %v1975
    %s1977 = sld [smem:[#allocation7 + $0x1]]
    %v1978 = vstv %s1977
    %s1979 = sld [smem:[#allocation6 + $0x19]]
    %v1980 = vstv %s1979
    %v1981 = vmul.f32 %v1980, %v57
    %v1982 = vmul.f32 %v1980, %v58
    %v1983 = vmul.f32 %v1980, %v59
    %v1984 = vmul.f32 %v1980, %v60
    %v1985 = vmul.f32 %v1980, %v61
    %v1986 = vmul.f32 %v1980, %v62
    %v1987 = vmul.f32 %v1980, %v63
    %v1988 = vmul.f32 %v1980, %v64
    %v1989 = vmul.f32 %v1980, %v65
    %v1990 = vmul.f32 %v1980, %v66
    %v1991 = vmul.f32 %v1980, %v67
    %v1992 = vmul.f32 %v1980, %v68
    %v1993 = vmul.f32 %v1980, %v69
    %v1994 = vmul.f32 %v1980, %v70
    %v1995 = vmul.f32 %v1980, %v71
    %v1996 = vmul.f32 %v1980, %v72
    %v1997 = vmul.f32 %v1980, %v73
    %v1998 = vmul.f32 %v1980, %v74
    %v1999 = vmul.f32 %v1980, %v75
    %v2000 = vmul.f32 %v1980, %v76
    %v2001 = vmul.f32 %v1980, %v77
    %v2002 = vmul.f32 %v1980, %v78
    %v2003 = vmul.f32 %v1980, %v79
    %v2004 = vmul.f32 %v1980, %v80
    %v2005 = vadd.f32 %v1978, %v1981
    %v2006 = vadd.f32 %v1978, %v1982
    %v2007 = vadd.f32 %v1978, %v1983
    %v2008 = vadd.f32 %v1978, %v1984
    %v2009 = vadd.f32 %v1978, %v1985
    %v2010 = vadd.f32 %v1978, %v1986
    %v2011 = vadd.f32 %v1978, %v1987
    %v2012 = vadd.f32 %v1978, %v1988
    %v2013 = vadd.f32 %v1978, %v1989
    %v2014 = vadd.f32 %v1978, %v1990
    %v2015 = vadd.f32 %v1978, %v1991
    %v2016 = vadd.f32 %v1978, %v1992
    %v2017 = vadd.f32 %v1978, %v1993
    %v2018 = vadd.f32 %v1978, %v1994
    %v2019 = vadd.f32 %v1978, %v1995
    %v2020 = vadd.f32 %v1978, %v1996
    %v2021 = vadd.f32 %v1978, %v1997
    %v2022 = vadd.f32 %v1978, %v1998
    %v2023 = vadd.f32 %v1978, %v1999
    %v2024 = vadd.f32 %v1978, %v2000
    %v2025 = vadd.f32 %v1978, %v2001
    %v2026 = vadd.f32 %v1978, %v2002
    %v2027 = vadd.f32 %v1978, %v2003
    %v2028 = vadd.f32 %v1978, %v2004
    %s2029 = sld [smem:[#allocation6 + $0x1a]]
    %v2030 = vstv %s2029
    %v2031 = vmul.f32 %v2030, %v131
    %v2032 = vmul.f32 %v2030, %v132
    %v2033 = vmul.f32 %v2030, %v133
    %v2034 = vmul.f32 %v2030, %v134
    %v2035 = vmul.f32 %v2030, %v135
    %v2036 = vmul.f32 %v2030, %v136
    %v2037 = vmul.f32 %v2030, %v137
    %v2038 = vmul.f32 %v2030, %v138
    %v2039 = vmul.f32 %v2030, %v139
    %v2040 = vmul.f32 %v2030, %v140
    %v2041 = vmul.f32 %v2030, %v141
    %v2042 = vmul.f32 %v2030, %v142
    %v2043 = vmul.f32 %v2030, %v143
    %v2044 = vmul.f32 %v2030, %v144
    %v2045 = vmul.f32 %v2030, %v145
    %v2046 = vmul.f32 %v2030, %v146
    %v2047 = vmul.f32 %v2030, %v147
    %v2048 = vmul.f32 %v2030, %v148
    %v2049 = vmul.f32 %v2030, %v149
    %v2050 = vmul.f32 %v2030, %v150
    %v2051 = vmul.f32 %v2030, %v151
    %v2052 = vmul.f32 %v2030, %v152
    %v2053 = vmul.f32 %v2030, %v153
    %v2054 = vmul.f32 %v2030, %v154
    %v2055 = vadd.f32 %v2005, %v2031
    %v2056 = vadd.f32 %v2006, %v2032
    %v2057 = vadd.f32 %v2007, %v2033
    %v2058 = vadd.f32 %v2008, %v2034
    %v2059 = vadd.f32 %v2009, %v2035
    %v2060 = vadd.f32 %v2010, %v2036
    %v2061 = vadd.f32 %v2011, %v2037
    %v2062 = vadd.f32 %v2012, %v2038
    %v2063 = vadd.f32 %v2013, %v2039
    %v2064 = vadd.f32 %v2014, %v2040
    %v2065 = vadd.f32 %v2015, %v2041
    %v2066 = vadd.f32 %v2016, %v2042
    %v2067 = vadd.f32 %v2017, %v2043
    %v2068 = vadd.f32 %v2018, %v2044
    %v2069 = vadd.f32 %v2019, %v2045
    %v2070 = vadd.f32 %v2020, %v2046
    %v2071 = vadd.f32 %v2021, %v2047
    %v2072 = vadd.f32 %v2022, %v2048
    %v2073 = vadd.f32 %v2023, %v2049
    %v2074 = vadd.f32 %v2024, %v2050
    %v2075 = vadd.f32 %v2025, %v2051
    %v2076 = vadd.f32 %v2026, %v2052
    %v2077 = vadd.f32 %v2027, %v2053
    %v2078 = vadd.f32 %v2028, %v2054
    %s2079 = sld [smem:[#allocation6 + $0x1b]]
    %v2080 = vstv %s2079
    %v2081 = vmul.f32 %v2080, %v205
    %v2082 = vmul.f32 %v2080, %v206
    %v2083 = vmul.f32 %v2080, %v207
    %v2084 = vmul.f32 %v2080, %v208
    %v2085 = vmul.f32 %v2080, %v209
    %v2086 = vmul.f32 %v2080, %v210
    %v2087 = vmul.f32 %v2080, %v211
    %v2088 = vmul.f32 %v2080, %v212
    %v2089 = vmul.f32 %v2080, %v213
    %v2090 = vmul.f32 %v2080, %v214
    %v2091 = vmul.f32 %v2080, %v215
    %v2092 = vmul.f32 %v2080, %v216
    %v2093 = vmul.f32 %v2080, %v217
    %v2094 = vmul.f32 %v2080, %v218
    %v2095 = vmul.f32 %v2080, %v219
    %v2096 = vmul.f32 %v2080, %v220
    %v2097 = vmul.f32 %v2080, %v221
    %v2098 = vmul.f32 %v2080, %v222
    %v2099 = vmul.f32 %v2080, %v223
    %v2100 = vmul.f32 %v2080, %v224
    %v2101 = vmul.f32 %v2080, %v225
    %v2102 = vmul.f32 %v2080, %v226
    %v2103 = vmul.f32 %v2080, %v227
    %v2104 = vmul.f32 %v2080, %v228
    %v2105 = vadd.f32 %v2055, %v2081
    %v2106 = vadd.f32 %v2056, %v2082
    %v2107 = vadd.f32 %v2057, %v2083
    %v2108 = vadd.f32 %v2058, %v2084
    %v2109 = vadd.f32 %v2059, %v2085
    %v2110 = vadd.f32 %v2060, %v2086
    %v2111 = vadd.f32 %v2061, %v2087
    %v2112 = vadd.f32 %v2062, %v2088
    %v2113 = vadd.f32 %v2063, %v2089
    %v2114 = vadd.f32 %v2064, %v2090
    %v2115 = vadd.f32 %v2065, %v2091
    %v2116 = vadd.f32 %v2066, %v2092
    %v2117 = vadd.f32 %v2067, %v2093
    %v2118 = vadd.f32 %v2068, %v2094
    %v2119 = vadd.f32 %v2069, %v2095
    %v2120 = vadd.f32 %v2070, %v2096
    %v2121 = vadd.f32 %v2071, %v2097
    %v2122 = vadd.f32 %v2072, %v2098
    %v2123 = vadd.f32 %v2073, %v2099
    %v2124 = vadd.f32 %v2074, %v2100
    %v2125 = vadd.f32 %v2075, %v2101
    %v2126 = vadd.f32 %v2076, %v2102
    %v2127 = vadd.f32 %v2077, %v2103
    %v2128 = vadd.f32 %v2078, %v2104
    %s2129 = sld [smem:[#allocation6 + $0x1c]]
    %v2130 = vstv %s2129
    %v2131 = vmul.f32 %v2130, %v279
    %v2132 = vmul.f32 %v2130, %v280
    %v2133 = vmul.f32 %v2130, %v281
    %v2134 = vmul.f32 %v2130, %v282
    %v2135 = vmul.f32 %v2130, %v283
    %v2136 = vmul.f32 %v2130, %v284
    %v2137 = vmul.f32 %v2130, %v285
    %v2138 = vmul.f32 %v2130, %v286
    %v2139 = vmul.f32 %v2130, %v287
    %v2140 = vmul.f32 %v2130, %v288
    %v2141 = vmul.f32 %v2130, %v289
    %v2142 = vmul.f32 %v2130, %v290
    %v2143 = vmul.f32 %v2130, %v291
    %v2144 = vmul.f32 %v2130, %v292
    %v2145 = vmul.f32 %v2130, %v293
    %v2146 = vmul.f32 %v2130, %v294
    %v2147 = vmul.f32 %v2130, %v295
    %v2148 = vmul.f32 %v2130, %v296
    %v2149 = vmul.f32 %v2130, %v297
    %v2150 = vmul.f32 %v2130, %v298
    %v2151 = vmul.f32 %v2130, %v299
    %v2152 = vmul.f32 %v2130, %v300
    %v2153 = vmul.f32 %v2130, %v301
    %v2154 = vmul.f32 %v2130, %v302
    %v2155 = vadd.f32 %v2105, %v2131
    %v2156 = vadd.f32 %v2106, %v2132
    %v2157 = vadd.f32 %v2107, %v2133
    %v2158 = vadd.f32 %v2108, %v2134
    %v2159 = vadd.f32 %v2109, %v2135
    %v2160 = vadd.f32 %v2110, %v2136
    %v2161 = vadd.f32 %v2111, %v2137
    %v2162 = vadd.f32 %v2112, %v2138
    %v2163 = vadd.f32 %v2113, %v2139
    %v2164 = vadd.f32 %v2114, %v2140
    %v2165 = vadd.f32 %v2115, %v2141
    %v2166 = vadd.f32 %v2116, %v2142
    %v2167 = vadd.f32 %v2117, %v2143
    %v2168 = vadd.f32 %v2118, %v2144
    %v2169 = vadd.f32 %v2119, %v2145
    %v2170 = vadd.f32 %v2120, %v2146
    %v2171 = vadd.f32 %v2121, %v2147
    %v2172 = vadd.f32 %v2122, %v2148
    %v2173 = vadd.f32 %v2123, %v2149
    %v2174 = vadd.f32 %v2124, %v2150
    %v2175 = vadd.f32 %v2125, %v2151
    %v2176 = vadd.f32 %v2126, %v2152
    %v2177 = vadd.f32 %v2127, %v2153
    %v2178 = vadd.f32 %v2128, %v2154
    %s2179 = sld [smem:[#allocation6 + $0x1d]]
    %v2180 = vstv %s2179
    %v2181 = vmul.f32 %v2180, %v353
    %v2182 = vmul.f32 %v2180, %v354
    %v2183 = vmul.f32 %v2180, %v355
    %v2184 = vmul.f32 %v2180, %v356
    %v2185 = vmul.f32 %v2180, %v357
    %v2186 = vmul.f32 %v2180, %v358
    %v2187 = vmul.f32 %v2180, %v359
    %v2188 = vmul.f32 %v2180, %v360
    %v2189 = vmul.f32 %v2180, %v361
    %v2190 = vmul.f32 %v2180, %v362
    %v2191 = vmul.f32 %v2180, %v363
    %v2192 = vmul.f32 %v2180, %v364
    %v2193 = vmul.f32 %v2180, %v365
    %v2194 = vmul.f32 %v2180, %v366
    %v2195 = vmul.f32 %v2180, %v367
    %v2196 = vmul.f32 %v2180, %v368
    %v2197 = vmul.f32 %v2180, %v369
    %v2198 = vmul.f32 %v2180, %v370
    %v2199 = vmul.f32 %v2180, %v371
    %v2200 = vmul.f32 %v2180, %v372
    %v2201 = vmul.f32 %v2180, %v373
    %v2202 = vmul.f32 %v2180, %v374
    %v2203 = vmul.f32 %v2180, %v375
    %v2204 = vmul.f32 %v2180, %v376
    %v2205 = vadd.f32 %v2155, %v2181
    %v2206 = vadd.f32 %v2156, %v2182
    %v2207 = vadd.f32 %v2157, %v2183
    %v2208 = vadd.f32 %v2158, %v2184
    %v2209 = vadd.f32 %v2159, %v2185
    %v2210 = vadd.f32 %v2160, %v2186
    %v2211 = vadd.f32 %v2161, %v2187
    %v2212 = vadd.f32 %v2162, %v2188
    %v2213 = vadd.f32 %v2163, %v2189
    %v2214 = vadd.f32 %v2164, %v2190
    %v2215 = vadd.f32 %v2165, %v2191
    %v2216 = vadd.f32 %v2166, %v2192
    %v2217 = vadd.f32 %v2167, %v2193
    %v2218 = vadd.f32 %v2168, %v2194
    %v2219 = vadd.f32 %v2169, %v2195
    %v2220 = vadd.f32 %v2170, %v2196
    %v2221 = vadd.f32 %v2171, %v2197
    %v2222 = vadd.f32 %v2172, %v2198
    %v2223 = vadd.f32 %v2173, %v2199
    %v2224 = vadd.f32 %v2174, %v2200
    %v2225 = vadd.f32 %v2175, %v2201
    %v2226 = vadd.f32 %v2176, %v2202
    %v2227 = vadd.f32 %v2177, %v2203
    %v2228 = vadd.f32 %v2178, %v2204
    %s2229 = sld [smem:[#allocation6 + $0x1e]]
    %v2230 = vstv %s2229
    %v2231 = vmul.f32 %v2230, %v428
    %v2232 = vmul.f32 %v2230, %v429
    %v2233 = vmul.f32 %v2230, %v430
    %v2234 = vmul.f32 %v2230, %v431
    %v2235 = vmul.f32 %v2230, %v432
    %v2236 = vmul.f32 %v2230, %v433
    %v2237 = vmul.f32 %v2230, %v434
    %v2238 = vmul.f32 %v2230, %v435
    %v2239 = vmul.f32 %v2230, %v436
    %v2240 = vmul.f32 %v2230, %v437
    %v2241 = vmul.f32 %v2230, %v438
    %v2242 = vmul.f32 %v2230, %v439
    %v2243 = vmul.f32 %v2230, %v440
    %v2244 = vmul.f32 %v2230, %v441
    %v2245 = vmul.f32 %v2230, %v442
    %v2246 = vmul.f32 %v2230, %v443
    %v2247 = vmul.f32 %v2230, %v444
    %v2248 = vmul.f32 %v2230, %v445
    %v2249 = vmul.f32 %v2230, %v446
    %v2250 = vmul.f32 %v2230, %v447
    %v2251 = vmul.f32 %v2230, %v448
    %v2252 = vmul.f32 %v2230, %v449
    %v2253 = vmul.f32 %v2230, %v450
    %v2254 = vmul.f32 %v2230, %v451
    %v2255 = vadd.f32 %v2205, %v2231
    %v2256 = vadd.f32 %v2206, %v2232
    %v2257 = vadd.f32 %v2207, %v2233
    %v2258 = vadd.f32 %v2208, %v2234
    %v2259 = vadd.f32 %v2209, %v2235
    %v2260 = vadd.f32 %v2210, %v2236
    %v2261 = vadd.f32 %v2211, %v2237
    %v2262 = vadd.f32 %v2212, %v2238
    %v2263 = vadd.f32 %v2213, %v2239
    %v2264 = vadd.f32 %v2214, %v2240
    %v2265 = vadd.f32 %v2215, %v2241
    %v2266 = vadd.f32 %v2216, %v2242
    %v2267 = vadd.f32 %v2217, %v2243
    %v2268 = vadd.f32 %v2218, %v2244
    %v2269 = vadd.f32 %v2219, %v2245
    %v2270 = vadd.f32 %v2220, %v2246
    %v2271 = vadd.f32 %v2221, %v2247
    %v2272 = vadd.f32 %v2222, %v2248
    %v2273 = vadd.f32 %v2223, %v2249
    %v2274 = vadd.f32 %v2224, %v2250
    %v2275 = vadd.f32 %v2225, %v2251
    %v2276 = vadd.f32 %v2226, %v2252
    %v2277 = vadd.f32 %v2227, %v2253
    %v2278 = vadd.f32 %v2228, %v2254
    %s2279 = sld [smem:[#allocation6 + $0x1f]]
    %v2280 = vstv %s2279
    %v2281 = vmul.f32 %v2280, %v502
    %v2282 = vmul.f32 %v2280, %v503
    %v2283 = vmul.f32 %v2280, %v504
    %v2284 = vmul.f32 %v2280, %v505
    %v2285 = vmul.f32 %v2280, %v506
    %v2286 = vmul.f32 %v2280, %v507
    %v2287 = vmul.f32 %v2280, %v508
    %v2288 = vmul.f32 %v2280, %v509
    %v2289 = vmul.f32 %v2280, %v510
    %v2290 = vmul.f32 %v2280, %v511
    %v2291 = vmul.f32 %v2280, %v512
    %v2292 = vmul.f32 %v2280, %v513
    %v2293 = vmul.f32 %v2280, %v514
    %v2294 = vmul.f32 %v2280, %v515
    %v2295 = vmul.f32 %v2280, %v516
    %v2296 = vmul.f32 %v2280, %v517
    %v2297 = vmul.f32 %v2280, %v518
    %v2298 = vmul.f32 %v2280, %v519
    %v2299 = vmul.f32 %v2280, %v520
    %v2300 = vmul.f32 %v2280, %v521
    %v2301 = vmul.f32 %v2280, %v522
    %v2302 = vmul.f32 %v2280, %v523
    %v2303 = vmul.f32 %v2280, %v524
    %v2304 = vmul.f32 %v2280, %v525
    %v2305 = vadd.f32 %v2255, %v2281
    %v2306 = vadd.f32 %v2256, %v2282
    %v2307 = vadd.f32 %v2257, %v2283
    %v2308 = vadd.f32 %v2258, %v2284
    %v2309 = vadd.f32 %v2259, %v2285
    %v2310 = vadd.f32 %v2260, %v2286
    %v2311 = vadd.f32 %v2261, %v2287
    %v2312 = vadd.f32 %v2262, %v2288
    %v2313 = vadd.f32 %v2263, %v2289
    %v2314 = vadd.f32 %v2264, %v2290
    %v2315 = vadd.f32 %v2265, %v2291
    %v2316 = vadd.f32 %v2266, %v2292
    %v2317 = vadd.f32 %v2267, %v2293
    %v2318 = vadd.f32 %v2268, %v2294
    %v2319 = vadd.f32 %v2269, %v2295
    %v2320 = vadd.f32 %v2270, %v2296
    %v2321 = vadd.f32 %v2271, %v2297
    %v2322 = vadd.f32 %v2272, %v2298
    %v2323 = vadd.f32 %v2273, %v2299
    %v2324 = vadd.f32 %v2274, %v2300
    %v2325 = vadd.f32 %v2275, %v2301
    %v2326 = vadd.f32 %v2276, %v2302
    %v2327 = vadd.f32 %v2277, %v2303
    %v2328 = vadd.f32 %v2278, %v2304
    %s2329 = sld [smem:[#allocation6 + $0x20]]
    %v2330 = vstv %s2329
    %v2331 = vmul.f32 %v2330, %v576
    %v2332 = vmul.f32 %v2330, %v577
    %v2333 = vmul.f32 %v2330, %v578
    %v2334 = vmul.f32 %v2330, %v579
    %v2335 = vmul.f32 %v2330, %v580
    %v2336 = vmul.f32 %v2330, %v581
    %v2337 = vmul.f32 %v2330, %v582
    %v2338 = vmul.f32 %v2330, %v583
    %v2339 = vmul.f32 %v2330, %v584
    %v2340 = vmul.f32 %v2330, %v585
    %v2341 = vmul.f32 %v2330, %v586
    %v2342 = vmul.f32 %v2330, %v587
    %v2343 = vmul.f32 %v2330, %v588
    %v2344 = vmul.f32 %v2330, %v589
    %v2345 = vmul.f32 %v2330, %v590
    %v2346 = vmul.f32 %v2330, %v591
    %v2347 = vmul.f32 %v2330, %v592
    %v2348 = vmul.f32 %v2330, %v593
    %v2349 = vmul.f32 %v2330, %v594
    %v2350 = vmul.f32 %v2330, %v595
    %v2351 = vmul.f32 %v2330, %v596
    %v2352 = vmul.f32 %v2330, %v597
    %v2353 = vmul.f32 %v2330, %v598
    %v2354 = vmul.f32 %v2330, %v599
    %v2355 = vadd.f32 %v2305, %v2331
    %v2356 = vadd.f32 %v2306, %v2332
    %v2357 = vadd.f32 %v2307, %v2333
    %v2358 = vadd.f32 %v2308, %v2334
    %v2359 = vadd.f32 %v2309, %v2335
    %v2360 = vadd.f32 %v2310, %v2336
    %v2361 = vadd.f32 %v2311, %v2337
    %v2362 = vadd.f32 %v2312, %v2338
    %v2363 = vadd.f32 %v2313, %v2339
    %v2364 = vadd.f32 %v2314, %v2340
    %v2365 = vadd.f32 %v2315, %v2341
    %v2366 = vadd.f32 %v2316, %v2342
    %v2367 = vadd.f32 %v2317, %v2343
    %v2368 = vadd.f32 %v2318, %v2344
    %v2369 = vadd.f32 %v2319, %v2345
    %v2370 = vadd.f32 %v2320, %v2346
    %v2371 = vadd.f32 %v2321, %v2347
    %v2372 = vadd.f32 %v2322, %v2348
    %v2373 = vadd.f32 %v2323, %v2349
    %v2374 = vadd.f32 %v2324, %v2350
    %v2375 = vadd.f32 %v2325, %v2351
    %v2376 = vadd.f32 %v2326, %v2352
    %v2377 = vadd.f32 %v2327, %v2353
    %v2378 = vadd.f32 %v2328, %v2354
    %s2379 = sld [smem:[#allocation6 + $0x21]]
    %v2380 = vstv %s2379
    %v2381 = vmul.f32 %v2380, %v650
    %v2382 = vmul.f32 %v2380, %v651
    %v2383 = vmul.f32 %v2380, %v652
    %v2384 = vmul.f32 %v2380, %v653
    %v2385 = vmul.f32 %v2380, %v654
    %v2386 = vmul.f32 %v2380, %v655
    %v2387 = vmul.f32 %v2380, %v656
    %v2388 = vmul.f32 %v2380, %v657
    %v2389 = vmul.f32 %v2380, %v658
    %v2390 = vmul.f32 %v2380, %v659
    %v2391 = vmul.f32 %v2380, %v660
    %v2392 = vmul.f32 %v2380, %v661
    %v2393 = vmul.f32 %v2380, %v662
    %v2394 = vmul.f32 %v2380, %v663
    %v2395 = vmul.f32 %v2380, %v664
    %v2396 = vmul.f32 %v2380, %v665
    %v2397 = vmul.f32 %v2380, %v666
    %v2398 = vmul.f32 %v2380, %v667
    %v2399 = vmul.f32 %v2380, %v668
    %v2400 = vmul.f32 %v2380, %v669
    %v2401 = vmul.f32 %v2380, %v670
    %v2402 = vmul.f32 %v2380, %v671
    %v2403 = vmul.f32 %v2380, %v672
    %v2404 = vmul.f32 %v2380, %v673
    %v2405 = vadd.f32 %v2355, %v2381
    %v2406 = vadd.f32 %v2356, %v2382
    %v2407 = vadd.f32 %v2357, %v2383
    %v2408 = vadd.f32 %v2358, %v2384
    %v2409 = vadd.f32 %v2359, %v2385
    %v2410 = vadd.f32 %v2360, %v2386
    %v2411 = vadd.f32 %v2361, %v2387
    %v2412 = vadd.f32 %v2362, %v2388
    %v2413 = vadd.f32 %v2363, %v2389
    %v2414 = vadd.f32 %v2364, %v2390
    %v2415 = vadd.f32 %v2365, %v2391
    %v2416 = vadd.f32 %v2366, %v2392
    %v2417 = vadd.f32 %v2367, %v2393
    %v2418 = vadd.f32 %v2368, %v2394
    %v2419 = vadd.f32 %v2369, %v2395
    %v2420 = vadd.f32 %v2370, %v2396
    %v2421 = vadd.f32 %v2371, %v2397
    %v2422 = vadd.f32 %v2372, %v2398
    %v2423 = vadd.f32 %v2373, %v2399
    %v2424 = vadd.f32 %v2374, %v2400
    %v2425 = vadd.f32 %v2375, %v2401
    %v2426 = vadd.f32 %v2376, %v2402
    %v2427 = vadd.f32 %v2377, %v2403
    %v2428 = vadd.f32 %v2378, %v2404
    %s2429 = sld [smem:[#allocation6 + $0x22]]
    %v2430 = vstv %s2429
    %v2431 = vmul.f32 %v2430, %v724
    %v2432 = vmul.f32 %v2430, %v725
    %v2433 = vmul.f32 %v2430, %v726
    %v2434 = vmul.f32 %v2430, %v727
    %v2435 = vmul.f32 %v2430, %v728
    %v2436 = vmul.f32 %v2430, %v729
    %v2437 = vmul.f32 %v2430, %v730
    %v2438 = vmul.f32 %v2430, %v731
    %v2439 = vmul.f32 %v2430, %v732
    %v2440 = vmul.f32 %v2430, %v733
    %v2441 = vmul.f32 %v2430, %v734
    %v2442 = vmul.f32 %v2430, %v735
    %v2443 = vmul.f32 %v2430, %v736
    %v2444 = vmul.f32 %v2430, %v737
    %v2445 = vmul.f32 %v2430, %v738
    %v2446 = vmul.f32 %v2430, %v739
    %v2447 = vmul.f32 %v2430, %v740
    %v2448 = vmul.f32 %v2430, %v741
    %v2449 = vmul.f32 %v2430, %v742
    %v2450 = vmul.f32 %v2430, %v743
    %v2451 = vmul.f32 %v2430, %v744
    %v2452 = vmul.f32 %v2430, %v745
    %v2453 = vmul.f32 %v2430, %v746
    %v2454 = vmul.f32 %v2430, %v747
    %v2455 = vadd.f32 %v2405, %v2431
    %v2456 = vadd.f32 %v2406, %v2432
    %v2457 = vadd.f32 %v2407, %v2433
    %v2458 = vadd.f32 %v2408, %v2434
    %v2459 = vadd.f32 %v2409, %v2435
    %v2460 = vadd.f32 %v2410, %v2436
    %v2461 = vadd.f32 %v2411, %v2437
    %v2462 = vadd.f32 %v2412, %v2438
    %v2463 = vadd.f32 %v2413, %v2439
    %v2464 = vadd.f32 %v2414, %v2440
    %v2465 = vadd.f32 %v2415, %v2441
    %v2466 = vadd.f32 %v2416, %v2442
    %v2467 = vadd.f32 %v2417, %v2443
    %v2468 = vadd.f32 %v2418, %v2444
    %v2469 = vadd.f32 %v2419, %v2445
    %v2470 = vadd.f32 %v2420, %v2446
    %v2471 = vadd.f32 %v2421, %v2447
    %v2472 = vadd.f32 %v2422, %v2448
    %v2473 = vadd.f32 %v2423, %v2449
    %v2474 = vadd.f32 %v2424, %v2450
    %v2475 = vadd.f32 %v2425, %v2451
    %v2476 = vadd.f32 %v2426, %v2452
    %v2477 = vadd.f32 %v2427, %v2453
    %v2478 = vadd.f32 %v2428, %v2454
    %s2479 = sld [smem:[#allocation6 + $0x23]]
    %v2480 = vstv %s2479
    %v2481 = vmul.f32 %v2480, %v799
    %v2482 = vmul.f32 %v2480, %v800
    %v2483 = vmul.f32 %v2480, %v801
    %v2484 = vmul.f32 %v2480, %v802
    %v2485 = vmul.f32 %v2480, %v803
    %v2486 = vmul.f32 %v2480, %v804
    %v2487 = vmul.f32 %v2480, %v805
    %v2488 = vmul.f32 %v2480, %v806
    %v2489 = vmul.f32 %v2480, %v807
    %v2490 = vmul.f32 %v2480, %v808
    %v2491 = vmul.f32 %v2480, %v809
    %v2492 = vmul.f32 %v2480, %v810
    %v2493 = vmul.f32 %v2480, %v811
    %v2494 = vmul.f32 %v2480, %v812
    %v2495 = vmul.f32 %v2480, %v813
    %v2496 = vmul.f32 %v2480, %v814
    %v2497 = vmul.f32 %v2480, %v815
    %v2498 = vmul.f32 %v2480, %v816
    %v2499 = vmul.f32 %v2480, %v817
    %v2500 = vmul.f32 %v2480, %v818
    %v2501 = vmul.f32 %v2480, %v819
    %v2502 = vmul.f32 %v2480, %v820
    %v2503 = vmul.f32 %v2480, %v821
    %v2504 = vmul.f32 %v2480, %v822
    %v2505 = vadd.f32 %v2455, %v2481
    %v2506 = vadd.f32 %v2456, %v2482
    %v2507 = vadd.f32 %v2457, %v2483
    %v2508 = vadd.f32 %v2458, %v2484
    %v2509 = vadd.f32 %v2459, %v2485
    %v2510 = vadd.f32 %v2460, %v2486
    %v2511 = vadd.f32 %v2461, %v2487
    %v2512 = vadd.f32 %v2462, %v2488
    %v2513 = vadd.f32 %v2463, %v2489
    %v2514 = vadd.f32 %v2464, %v2490
    %v2515 = vadd.f32 %v2465, %v2491
    %v2516 = vadd.f32 %v2466, %v2492
    %v2517 = vadd.f32 %v2467, %v2493
    %v2518 = vadd.f32 %v2468, %v2494
    %v2519 = vadd.f32 %v2469, %v2495
    %v2520 = vadd.f32 %v2470, %v2496
    %v2521 = vadd.f32 %v2471, %v2497
    %v2522 = vadd.f32 %v2472, %v2498
    %v2523 = vadd.f32 %v2473, %v2499
    %v2524 = vadd.f32 %v2474, %v2500
    %v2525 = vadd.f32 %v2475, %v2501
    %v2526 = vadd.f32 %v2476, %v2502
    %v2527 = vadd.f32 %v2477, %v2503
    %v2528 = vadd.f32 %v2478, %v2504
    %s2529 = sld [smem:[#allocation6 + $0x24]]
    %v2530 = vstv %s2529
    %v2531 = vmul.f32 %v2530, %v873
    %v2532 = vmul.f32 %v2530, %v874
    %v2533 = vmul.f32 %v2530, %v875
    %v2534 = vmul.f32 %v2530, %v876
    %v2535 = vmul.f32 %v2530, %v877
    %v2536 = vmul.f32 %v2530, %v878
    %v2537 = vmul.f32 %v2530, %v879
    %v2538 = vmul.f32 %v2530, %v880
    %v2539 = vmul.f32 %v2530, %v881
    %v2540 = vmul.f32 %v2530, %v882
    %v2541 = vmul.f32 %v2530, %v883
    %v2542 = vmul.f32 %v2530, %v884
    %v2543 = vmul.f32 %v2530, %v885
    %v2544 = vmul.f32 %v2530, %v886
    %v2545 = vmul.f32 %v2530, %v887
    %v2546 = vmul.f32 %v2530, %v888
    %v2547 = vmul.f32 %v2530, %v889
    %v2548 = vmul.f32 %v2530, %v890
    %v2549 = vmul.f32 %v2530, %v891
    %v2550 = vmul.f32 %v2530, %v892
    %v2551 = vmul.f32 %v2530, %v893
    %v2552 = vmul.f32 %v2530, %v894
    %v2553 = vmul.f32 %v2530, %v895
    %v2554 = vmul.f32 %v2530, %v896
    %v2555 = vadd.f32 %v2505, %v2531
    %v2556 = vadd.f32 %v2506, %v2532
    %v2557 = vadd.f32 %v2507, %v2533
    %v2558 = vadd.f32 %v2508, %v2534
    %v2559 = vadd.f32 %v2509, %v2535
    %v2560 = vadd.f32 %v2510, %v2536
    %v2561 = vadd.f32 %v2511, %v2537
    %v2562 = vadd.f32 %v2512, %v2538
    %v2563 = vadd.f32 %v2513, %v2539
    %v2564 = vadd.f32 %v2514, %v2540
    %v2565 = vadd.f32 %v2515, %v2541
    %v2566 = vadd.f32 %v2516, %v2542
    %v2567 = vadd.f32 %v2517, %v2543
    %v2568 = vadd.f32 %v2518, %v2544
    %v2569 = vadd.f32 %v2519, %v2545
    %v2570 = vadd.f32 %v2520, %v2546
    %v2571 = vadd.f32 %v2521, %v2547
    %v2572 = vadd.f32 %v2522, %v2548
    %v2573 = vadd.f32 %v2523, %v2549
    %v2574 = vadd.f32 %v2524, %v2550
    %v2575 = vadd.f32 %v2525, %v2551
    %v2576 = vadd.f32 %v2526, %v2552
    %v2577 = vadd.f32 %v2527, %v2553
    %v2578 = vadd.f32 %v2528, %v2554
    %s2579 = sld [smem:[#allocation6 + $0x25]]
    %v2580 = vstv %s2579
    %v2581 = vmul.f32 %v2580, %v947
    %v2582 = vmul.f32 %v2580, %v948
    %v2583 = vmul.f32 %v2580, %v949
    %v2584 = vmul.f32 %v2580, %v950
    %v2585 = vmul.f32 %v2580, %v951
    %v2586 = vmul.f32 %v2580, %v952
    %v2587 = vmul.f32 %v2580, %v953
    %v2588 = vmul.f32 %v2580, %v954
    %v2589 = vmul.f32 %v2580, %v955
    %v2590 = vmul.f32 %v2580, %v956
    %v2591 = vmul.f32 %v2580, %v957
    %v2592 = vmul.f32 %v2580, %v958
    %v2593 = vmul.f32 %v2580, %v959
    %v2594 = vmul.f32 %v2580, %v960
    %v2595 = vmul.f32 %v2580, %v961
    %v2596 = vmul.f32 %v2580, %v962
    %v2597 = vmul.f32 %v2580, %v963
    %v2598 = vmul.f32 %v2580, %v964
    %v2599 = vmul.f32 %v2580, %v965
    %v2600 = vmul.f32 %v2580, %v966
    %v2601 = vmul.f32 %v2580, %v967
    %v2602 = vmul.f32 %v2580, %v968
    %v2603 = vmul.f32 %v2580, %v969
    %v2604 = vmul.f32 %v2580, %v970
    %v2605 = vadd.f32 %v2555, %v2581
    %v2606 = vadd.f32 %v2556, %v2582
    %v2607 = vadd.f32 %v2557, %v2583
    %v2608 = vadd.f32 %v2558, %v2584
    %v2609 = vadd.f32 %v2559, %v2585
    %v2610 = vadd.f32 %v2560, %v2586
    %v2611 = vadd.f32 %v2561, %v2587
    %v2612 = vadd.f32 %v2562, %v2588
    %v2613 = vadd.f32 %v2563, %v2589
    %v2614 = vadd.f32 %v2564, %v2590
    %v2615 = vadd.f32 %v2565, %v2591
    %v2616 = vadd.f32 %v2566, %v2592
    %v2617 = vadd.f32 %v2567, %v2593
    %v2618 = vadd.f32 %v2568, %v2594
    %v2619 = vadd.f32 %v2569, %v2595
    %v2620 = vadd.f32 %v2570, %v2596
    %v2621 = vadd.f32 %v2571, %v2597
    %v2622 = vadd.f32 %v2572, %v2598
    %v2623 = vadd.f32 %v2573, %v2599
    %v2624 = vadd.f32 %v2574, %v2600
    %v2625 = vadd.f32 %v2575, %v2601
    %v2626 = vadd.f32 %v2576, %v2602
    %v2627 = vadd.f32 %v2577, %v2603
    %v2628 = vadd.f32 %v2578, %v2604
    %s2629 = sld [smem:[#allocation6 + $0x26]]
    %v2630 = vstv %s2629
    %v2631 = vmul.f32 %v2630, %v1021
    %v2632 = vmul.f32 %v2630, %v1022
    %v2633 = vmul.f32 %v2630, %v1023
    %v2634 = vmul.f32 %v2630, %v1024
    %v2635 = vmul.f32 %v2630, %v1025
    %v2636 = vmul.f32 %v2630, %v1026
    %v2637 = vmul.f32 %v2630, %v1027
    %v2638 = vmul.f32 %v2630, %v1028
    %v2639 = vmul.f32 %v2630, %v1029
    %v2640 = vmul.f32 %v2630, %v1030
    %v2641 = vmul.f32 %v2630, %v1031
    %v2642 = vmul.f32 %v2630, %v1032
    %v2643 = vmul.f32 %v2630, %v1033
    %v2644 = vmul.f32 %v2630, %v1034
    %v2645 = vmul.f32 %v2630, %v1035
    %v2646 = vmul.f32 %v2630, %v1036
    %v2647 = vmul.f32 %v2630, %v1037
    %v2648 = vmul.f32 %v2630, %v1038
    %v2649 = vmul.f32 %v2630, %v1039
    %v2650 = vmul.f32 %v2630, %v1040
    %v2651 = vmul.f32 %v2630, %v1041
    %v2652 = vmul.f32 %v2630, %v1042
    %v2653 = vmul.f32 %v2630, %v1043
    %v2654 = vmul.f32 %v2630, %v1044
    %v2655 = vadd.f32 %v2605, %v2631
    %v2656 = vadd.f32 %v2606, %v2632
    %v2657 = vadd.f32 %v2607, %v2633
    %v2658 = vadd.f32 %v2608, %v2634
    %v2659 = vadd.f32 %v2609, %v2635
    %v2660 = vadd.f32 %v2610, %v2636
    %v2661 = vadd.f32 %v2611, %v2637
    %v2662 = vadd.f32 %v2612, %v2638
    %v2663 = vadd.f32 %v2613, %v2639
    %v2664 = vadd.f32 %v2614, %v2640
    %v2665 = vadd.f32 %v2615, %v2641
    %v2666 = vadd.f32 %v2616, %v2642
    %v2667 = vadd.f32 %v2617, %v2643
    %v2668 = vadd.f32 %v2618, %v2644
    %v2669 = vadd.f32 %v2619, %v2645
    %v2670 = vadd.f32 %v2620, %v2646
    %v2671 = vadd.f32 %v2621, %v2647
    %v2672 = vadd.f32 %v2622, %v2648
    %v2673 = vadd.f32 %v2623, %v2649
    %v2674 = vadd.f32 %v2624, %v2650
    %v2675 = vadd.f32 %v2625, %v2651
    %v2676 = vadd.f32 %v2626, %v2652
    %v2677 = vadd.f32 %v2627, %v2653
    %v2678 = vadd.f32 %v2628, %v2654
    %s2679 = sld [smem:[#allocation6 + $0x27]]
    %v2680 = vstv %s2679
    %v2681 = vmul.f32 %v2680, %v1095
    %v2682 = vmul.f32 %v2680, %v1096
    %v2683 = vmul.f32 %v2680, %v1097
    %v2684 = vmul.f32 %v2680, %v1098
    %v2685 = vmul.f32 %v2680, %v1099
    %v2686 = vmul.f32 %v2680, %v1100
    %v2687 = vmul.f32 %v2680, %v1101
    %v2688 = vmul.f32 %v2680, %v1102
    %v2689 = vmul.f32 %v2680, %v1103
    %v2690 = vmul.f32 %v2680, %v1104
    %v2691 = vmul.f32 %v2680, %v1105
    %v2692 = vmul.f32 %v2680, %v1106
    %v2693 = vmul.f32 %v2680, %v1107
    %v2694 = vmul.f32 %v2680, %v1108
    %v2695 = vmul.f32 %v2680, %v1109
    %v2696 = vmul.f32 %v2680, %v1110
    %v2697 = vmul.f32 %v2680, %v1111
    %v2698 = vmul.f32 %v2680, %v1112
    %v2699 = vmul.f32 %v2680, %v1113
    %v2700 = vmul.f32 %v2680, %v1114
    %v2701 = vmul.f32 %v2680, %v1115
    %v2702 = vmul.f32 %v2680, %v1116
    %v2703 = vmul.f32 %v2680, %v1117
    %v2704 = vmul.f32 %v2680, %v1118
    %v2705 = vadd.f32 %v2655, %v2681
    %v2706 = vadd.f32 %v2656, %v2682
    %v2707 = vadd.f32 %v2657, %v2683
    %v2708 = vadd.f32 %v2658, %v2684
    %v2709 = vadd.f32 %v2659, %v2685
    %v2710 = vadd.f32 %v2660, %v2686
    %v2711 = vadd.f32 %v2661, %v2687
    %v2712 = vadd.f32 %v2662, %v2688
    %v2713 = vadd.f32 %v2663, %v2689
    %v2714 = vadd.f32 %v2664, %v2690
    %v2715 = vadd.f32 %v2665, %v2691
    %v2716 = vadd.f32 %v2666, %v2692
    %v2717 = vadd.f32 %v2667, %v2693
    %v2718 = vadd.f32 %v2668, %v2694
    %v2719 = vadd.f32 %v2669, %v2695
    %v2720 = vadd.f32 %v2670, %v2696
    %v2721 = vadd.f32 %v2671, %v2697
    %v2722 = vadd.f32 %v2672, %v2698
    %v2723 = vadd.f32 %v2673, %v2699
    %v2724 = vadd.f32 %v2674, %v2700
    %v2725 = vadd.f32 %v2675, %v2701
    %v2726 = vadd.f32 %v2676, %v2702
    %v2727 = vadd.f32 %v2677, %v2703
    %v2728 = vadd.f32 %v2678, %v2704
    %s2729 = sld [smem:[#allocation6 + $0x28]]
    %v2730 = vstv %s2729
    %v2731 = vmul.f32 %v2730, %v1170
    %v2732 = vmul.f32 %v2730, %v1171
    %v2733 = vmul.f32 %v2730, %v1172
    %v2734 = vmul.f32 %v2730, %v1173
    %v2735 = vmul.f32 %v2730, %v1174
    %v2736 = vmul.f32 %v2730, %v1175
    %v2737 = vmul.f32 %v2730, %v1176
    %v2738 = vmul.f32 %v2730, %v1177
    %v2739 = vmul.f32 %v2730, %v1178
    %v2740 = vmul.f32 %v2730, %v1179
    %v2741 = vmul.f32 %v2730, %v1180
    %v2742 = vmul.f32 %v2730, %v1181
    %v2743 = vmul.f32 %v2730, %v1182
    %v2744 = vmul.f32 %v2730, %v1183
    %v2745 = vmul.f32 %v2730, %v1184
    %v2746 = vmul.f32 %v2730, %v1185
    %v2747 = vmul.f32 %v2730, %v1186
    %v2748 = vmul.f32 %v2730, %v1187
    %v2749 = vmul.f32 %v2730, %v1188
    %v2750 = vmul.f32 %v2730, %v1189
    %v2751 = vmul.f32 %v2730, %v1190
    %v2752 = vmul.f32 %v2730, %v1191
    %v2753 = vmul.f32 %v2730, %v1192
    %v2754 = vmul.f32 %v2730, %v1193
    %v2755 = vadd.f32 %v2705, %v2731
    %v2756 = vadd.f32 %v2706, %v2732
    %v2757 = vadd.f32 %v2707, %v2733
    %v2758 = vadd.f32 %v2708, %v2734
    %v2759 = vadd.f32 %v2709, %v2735
    %v2760 = vadd.f32 %v2710, %v2736
    %v2761 = vadd.f32 %v2711, %v2737
    %v2762 = vadd.f32 %v2712, %v2738
    %v2763 = vadd.f32 %v2713, %v2739
    %v2764 = vadd.f32 %v2714, %v2740
    %v2765 = vadd.f32 %v2715, %v2741
    %v2766 = vadd.f32 %v2716, %v2742
    %v2767 = vadd.f32 %v2717, %v2743
    %v2768 = vadd.f32 %v2718, %v2744
    %v2769 = vadd.f32 %v2719, %v2745
    %v2770 = vadd.f32 %v2720, %v2746
    %v2771 = vadd.f32 %v2721, %v2747
    %v2772 = vadd.f32 %v2722, %v2748
    %v2773 = vadd.f32 %v2723, %v2749
    %v2774 = vadd.f32 %v2724, %v2750
    %v2775 = vadd.f32 %v2725, %v2751
    %v2776 = vadd.f32 %v2726, %v2752
    %v2777 = vadd.f32 %v2727, %v2753
    %v2778 = vadd.f32 %v2728, %v2754
    %s2779 = sld [smem:[#allocation6 + $0x29]]
    %v2780 = vstv %s2779
    %v2781 = vmul.f32 %v2780, %v1244
    %v2782 = vmul.f32 %v2780, %v1245
    %v2783 = vmul.f32 %v2780, %v1246
    %v2784 = vmul.f32 %v2780, %v1247
    %v2785 = vmul.f32 %v2780, %v1248
    %v2786 = vmul.f32 %v2780, %v1249
    %v2787 = vmul.f32 %v2780, %v1250
    %v2788 = vmul.f32 %v2780, %v1251
    %v2789 = vmul.f32 %v2780, %v1252
    %v2790 = vmul.f32 %v2780, %v1253
    %v2791 = vmul.f32 %v2780, %v1254
    %v2792 = vmul.f32 %v2780, %v1255
    %v2793 = vmul.f32 %v2780, %v1256
    %v2794 = vmul.f32 %v2780, %v1257
    %v2795 = vmul.f32 %v2780, %v1258
    %v2796 = vmul.f32 %v2780, %v1259
    %v2797 = vmul.f32 %v2780, %v1260
    %v2798 = vmul.f32 %v2780, %v1261
    %v2799 = vmul.f32 %v2780, %v1262
    %v2800 = vmul.f32 %v2780, %v1263
    %v2801 = vmul.f32 %v2780, %v1264
    %v2802 = vmul.f32 %v2780, %v1265
    %v2803 = vmul.f32 %v2780, %v1266
    %v2804 = vmul.f32 %v2780, %v1267
    %v2805 = vadd.f32 %v2755, %v2781
    %v2806 = vadd.f32 %v2756, %v2782
    %v2807 = vadd.f32 %v2757, %v2783
    %v2808 = vadd.f32 %v2758, %v2784
    %v2809 = vadd.f32 %v2759, %v2785
    %v2810 = vadd.f32 %v2760, %v2786
    %v2811 = vadd.f32 %v2761, %v2787
    %v2812 = vadd.f32 %v2762, %v2788
    %v2813 = vadd.f32 %v2763, %v2789
    %v2814 = vadd.f32 %v2764, %v2790
    %v2815 = vadd.f32 %v2765, %v2791
    %v2816 = vadd.f32 %v2766, %v2792
    %v2817 = vadd.f32 %v2767, %v2793
    %v2818 = vadd.f32 %v2768, %v2794
    %v2819 = vadd.f32 %v2769, %v2795
    %v2820 = vadd.f32 %v2770, %v2796
    %v2821 = vadd.f32 %v2771, %v2797
    %v2822 = vadd.f32 %v2772, %v2798
    %v2823 = vadd.f32 %v2773, %v2799
    %v2824 = vadd.f32 %v2774, %v2800
    %v2825 = vadd.f32 %v2775, %v2801
    %v2826 = vadd.f32 %v2776, %v2802
    %v2827 = vadd.f32 %v2777, %v2803
    %v2828 = vadd.f32 %v2778, %v2804
    %s2829 = sld [smem:[#allocation6 + $0x2a]]
    %v2830 = vstv %s2829
    %v2831 = vmul.f32 %v2830, %v1318
    %v2832 = vmul.f32 %v2830, %v1319
    %v2833 = vmul.f32 %v2830, %v1320
    %v2834 = vmul.f32 %v2830, %v1321
    %v2835 = vmul.f32 %v2830, %v1322
    %v2836 = vmul.f32 %v2830, %v1323
    %v2837 = vmul.f32 %v2830, %v1324
    %v2838 = vmul.f32 %v2830, %v1325
    %v2839 = vmul.f32 %v2830, %v1326
    %v2840 = vmul.f32 %v2830, %v1327
    %v2841 = vmul.f32 %v2830, %v1328
    %v2842 = vmul.f32 %v2830, %v1329
    %v2843 = vmul.f32 %v2830, %v1330
    %v2844 = vmul.f32 %v2830, %v1331
    %v2845 = vmul.f32 %v2830, %v1332
    %v2846 = vmul.f32 %v2830, %v1333
    %v2847 = vmul.f32 %v2830, %v1334
    %v2848 = vmul.f32 %v2830, %v1335
    %v2849 = vmul.f32 %v2830, %v1336
    %v2850 = vmul.f32 %v2830, %v1337
    %v2851 = vmul.f32 %v2830, %v1338
    %v2852 = vmul.f32 %v2830, %v1339
    %v2853 = vmul.f32 %v2830, %v1340
    %v2854 = vmul.f32 %v2830, %v1341
    %v2855 = vadd.f32 %v2805, %v2831
    %v2856 = vadd.f32 %v2806, %v2832
    %v2857 = vadd.f32 %v2807, %v2833
    %v2858 = vadd.f32 %v2808, %v2834
    %v2859 = vadd.f32 %v2809, %v2835
    %v2860 = vadd.f32 %v2810, %v2836
    %v2861 = vadd.f32 %v2811, %v2837
    %v2862 = vadd.f32 %v2812, %v2838
    %v2863 = vadd.f32 %v2813, %v2839
    %v2864 = vadd.f32 %v2814, %v2840
    %v2865 = vadd.f32 %v2815, %v2841
    %v2866 = vadd.f32 %v2816, %v2842
    %v2867 = vadd.f32 %v2817, %v2843
    %v2868 = vadd.f32 %v2818, %v2844
    %v2869 = vadd.f32 %v2819, %v2845
    %v2870 = vadd.f32 %v2820, %v2846
    %v2871 = vadd.f32 %v2821, %v2847
    %v2872 = vadd.f32 %v2822, %v2848
    %v2873 = vadd.f32 %v2823, %v2849
    %v2874 = vadd.f32 %v2824, %v2850
    %v2875 = vadd.f32 %v2825, %v2851
    %v2876 = vadd.f32 %v2826, %v2852
    %v2877 = vadd.f32 %v2827, %v2853
    %v2878 = vadd.f32 %v2828, %v2854
    %s2879 = sld [smem:[#allocation6 + $0x2b]]
    %v2880 = vstv %s2879
    %v2881 = vmul.f32 %v2880, %v1392
    %v2882 = vmul.f32 %v2880, %v1393
    %v2883 = vmul.f32 %v2880, %v1394
    %v2884 = vmul.f32 %v2880, %v1395
    %v2885 = vmul.f32 %v2880, %v1396
    %v2886 = vmul.f32 %v2880, %v1397
    %v2887 = vmul.f32 %v2880, %v1398
    %v2888 = vmul.f32 %v2880, %v1399
    %v2889 = vmul.f32 %v2880, %v1400
    %v2890 = vmul.f32 %v2880, %v1401
    %v2891 = vmul.f32 %v2880, %v1402
    %v2892 = vmul.f32 %v2880, %v1403
    %v2893 = vmul.f32 %v2880, %v1404
    %v2894 = vmul.f32 %v2880, %v1405
    %v2895 = vmul.f32 %v2880, %v1406
    %v2896 = vmul.f32 %v2880, %v1407
    %v2897 = vmul.f32 %v2880, %v1408
    %v2898 = vmul.f32 %v2880, %v1409
    %v2899 = vmul.f32 %v2880, %v1410
    %v2900 = vmul.f32 %v2880, %v1411
    %v2901 = vmul.f32 %v2880, %v1412
    %v2902 = vmul.f32 %v2880, %v1413
    %v2903 = vmul.f32 %v2880, %v1414
    %v2904 = vmul.f32 %v2880, %v1415
    %v2905 = vadd.f32 %v2855, %v2881
    %v2906 = vadd.f32 %v2856, %v2882
    %v2907 = vadd.f32 %v2857, %v2883
    %v2908 = vadd.f32 %v2858, %v2884
    %v2909 = vadd.f32 %v2859, %v2885
    %v2910 = vadd.f32 %v2860, %v2886
    %v2911 = vadd.f32 %v2861, %v2887
    %v2912 = vadd.f32 %v2862, %v2888
    %v2913 = vadd.f32 %v2863, %v2889
    %v2914 = vadd.f32 %v2864, %v2890
    %v2915 = vadd.f32 %v2865, %v2891
    %v2916 = vadd.f32 %v2866, %v2892
    %v2917 = vadd.f32 %v2867, %v2893
    %v2918 = vadd.f32 %v2868, %v2894
    %v2919 = vadd.f32 %v2869, %v2895
    %v2920 = vadd.f32 %v2870, %v2896
    %v2921 = vadd.f32 %v2871, %v2897
    %v2922 = vadd.f32 %v2872, %v2898
    %v2923 = vadd.f32 %v2873, %v2899
    %v2924 = vadd.f32 %v2874, %v2900
    %v2925 = vadd.f32 %v2875, %v2901
    %v2926 = vadd.f32 %v2876, %v2902
    %v2927 = vadd.f32 %v2877, %v2903
    %v2928 = vadd.f32 %v2878, %v2904
    %s2929 = sld [smem:[#allocation6 + $0x2c]]
    %v2930 = vstv %s2929
    %v2931 = vmul.f32 %v2930, %v1466
    %v2932 = vmul.f32 %v2930, %v1467
    %v2933 = vmul.f32 %v2930, %v1468
    %v2934 = vmul.f32 %v2930, %v1469
    %v2935 = vmul.f32 %v2930, %v1470
    %v2936 = vmul.f32 %v2930, %v1471
    %v2937 = vmul.f32 %v2930, %v1472
    %v2938 = vmul.f32 %v2930, %v1473
    %v2939 = vmul.f32 %v2930, %v1474
    %v2940 = vmul.f32 %v2930, %v1475
    %v2941 = vmul.f32 %v2930, %v1476
    %v2942 = vmul.f32 %v2930, %v1477
    %v2943 = vmul.f32 %v2930, %v1478
    %v2944 = vmul.f32 %v2930, %v1479
    %v2945 = vmul.f32 %v2930, %v1480
    %v2946 = vmul.f32 %v2930, %v1481
    %v2947 = vmul.f32 %v2930, %v1482
    %v2948 = vmul.f32 %v2930, %v1483
    %v2949 = vmul.f32 %v2930, %v1484
    %v2950 = vmul.f32 %v2930, %v1485
    %v2951 = vmul.f32 %v2930, %v1486
    %v2952 = vmul.f32 %v2930, %v1487
    %v2953 = vmul.f32 %v2930, %v1488
    %v2954 = vmul.f32 %v2930, %v1489
    %v2955 = vadd.f32 %v2905, %v2931
    %v2956 = vadd.f32 %v2906, %v2932
    %v2957 = vadd.f32 %v2907, %v2933
    %v2958 = vadd.f32 %v2908, %v2934
    %v2959 = vadd.f32 %v2909, %v2935
    %v2960 = vadd.f32 %v2910, %v2936
    %v2961 = vadd.f32 %v2911, %v2937
    %v2962 = vadd.f32 %v2912, %v2938
    %v2963 = vadd.f32 %v2913, %v2939
    %v2964 = vadd.f32 %v2914, %v2940
    %v2965 = vadd.f32 %v2915, %v2941
    %v2966 = vadd.f32 %v2916, %v2942
    %v2967 = vadd.f32 %v2917, %v2943
    %v2968 = vadd.f32 %v2918, %v2944
    %v2969 = vadd.f32 %v2919, %v2945
    %v2970 = vadd.f32 %v2920, %v2946
    %v2971 = vadd.f32 %v2921, %v2947
    %v2972 = vadd.f32 %v2922, %v2948
    %v2973 = vadd.f32 %v2923, %v2949
    %v2974 = vadd.f32 %v2924, %v2950
    %v2975 = vadd.f32 %v2925, %v2951
    %v2976 = vadd.f32 %v2926, %v2952
    %v2977 = vadd.f32 %v2927, %v2953
    %v2978 = vadd.f32 %v2928, %v2954
    %s2979 = sld [smem:[#allocation6 + $0x2d]]
    %v2980 = vstv %s2979
    %v2981 = vmul.f32 %v2980, %v1541
    %v2982 = vmul.f32 %v2980, %v1542
    %v2983 = vmul.f32 %v2980, %v1543
    %v2984 = vmul.f32 %v2980, %v1544
    %v2985 = vmul.f32 %v2980, %v1545
    %v2986 = vmul.f32 %v2980, %v1546
    %v2987 = vmul.f32 %v2980, %v1547
    %v2988 = vmul.f32 %v2980, %v1548
    %v2989 = vmul.f32 %v2980, %v1549
    %v2990 = vmul.f32 %v2980, %v1550
    %v2991 = vmul.f32 %v2980, %v1551
    %v2992 = vmul.f32 %v2980, %v1552
    %v2993 = vmul.f32 %v2980, %v1553
    %v2994 = vmul.f32 %v2980, %v1554
    %v2995 = vmul.f32 %v2980, %v1555
    %v2996 = vmul.f32 %v2980, %v1556
    %v2997 = vmul.f32 %v2980, %v1557
    %v2998 = vmul.f32 %v2980, %v1558
    %v2999 = vmul.f32 %v2980, %v1559
    %v3000 = vmul.f32 %v2980, %v1560
    %v3001 = vmul.f32 %v2980, %v1561
    %v3002 = vmul.f32 %v2980, %v1562
    %v3003 = vmul.f32 %v2980, %v1563
    %v3004 = vmul.f32 %v2980, %v1564
    %v3005 = vadd.f32 %v2955, %v2981
    %v3006 = vadd.f32 %v2956, %v2982
    %v3007 = vadd.f32 %v2957, %v2983
    %v3008 = vadd.f32 %v2958, %v2984
    %v3009 = vadd.f32 %v2959, %v2985
    %v3010 = vadd.f32 %v2960, %v2986
    %v3011 = vadd.f32 %v2961, %v2987
    %v3012 = vadd.f32 %v2962, %v2988
    %v3013 = vadd.f32 %v2963, %v2989
    %v3014 = vadd.f32 %v2964, %v2990
    %v3015 = vadd.f32 %v2965, %v2991
    %v3016 = vadd.f32 %v2966, %v2992
    %v3017 = vadd.f32 %v2967, %v2993
    %v3018 = vadd.f32 %v2968, %v2994
    %v3019 = vadd.f32 %v2969, %v2995
    %v3020 = vadd.f32 %v2970, %v2996
    %v3021 = vadd.f32 %v2971, %v2997
    %v3022 = vadd.f32 %v2972, %v2998
    %v3023 = vadd.f32 %v2973, %v2999
    %v3024 = vadd.f32 %v2974, %v3000
    %v3025 = vadd.f32 %v2975, %v3001
    %v3026 = vadd.f32 %v2976, %v3002
    %v3027 = vadd.f32 %v2977, %v3003
    %v3028 = vadd.f32 %v2978, %v3004
    %s3029 = sld [smem:[#allocation6 + $0x2e]]
    %v3030 = vstv %s3029
    %v3031 = vmul.f32 %v3030, %v1615
    %v3032 = vmul.f32 %v3030, %v1616
    %v3033 = vmul.f32 %v3030, %v1617
    %v3034 = vmul.f32 %v3030, %v1618
    %v3035 = vmul.f32 %v3030, %v1619
    %v3036 = vmul.f32 %v3030, %v1620
    %v3037 = vmul.f32 %v3030, %v1621
    %v3038 = vmul.f32 %v3030, %v1622
    %v3039 = vmul.f32 %v3030, %v1623
    %v3040 = vmul.f32 %v3030, %v1624
    %v3041 = vmul.f32 %v3030, %v1625
    %v3042 = vmul.f32 %v3030, %v1626
    %v3043 = vmul.f32 %v3030, %v1627
    %v3044 = vmul.f32 %v3030, %v1628
    %v3045 = vmul.f32 %v3030, %v1629
    %v3046 = vmul.f32 %v3030, %v1630
    %v3047 = vmul.f32 %v3030, %v1631
    %v3048 = vmul.f32 %v3030, %v1632
    %v3049 = vmul.f32 %v3030, %v1633
    %v3050 = vmul.f32 %v3030, %v1634
    %v3051 = vmul.f32 %v3030, %v1635
    %v3052 = vmul.f32 %v3030, %v1636
    %v3053 = vmul.f32 %v3030, %v1637
    %v3054 = vmul.f32 %v3030, %v1638
    %v3055 = vadd.f32 %v3005, %v3031
    %v3056 = vadd.f32 %v3006, %v3032
    %v3057 = vadd.f32 %v3007, %v3033
    %v3058 = vadd.f32 %v3008, %v3034
    %v3059 = vadd.f32 %v3009, %v3035
    %v3060 = vadd.f32 %v3010, %v3036
    %v3061 = vadd.f32 %v3011, %v3037
    %v3062 = vadd.f32 %v3012, %v3038
    %v3063 = vadd.f32 %v3013, %v3039
    %v3064 = vadd.f32 %v3014, %v3040
    %v3065 = vadd.f32 %v3015, %v3041
    %v3066 = vadd.f32 %v3016, %v3042
    %v3067 = vadd.f32 %v3017, %v3043
    %v3068 = vadd.f32 %v3018, %v3044
    %v3069 = vadd.f32 %v3019, %v3045
    %v3070 = vadd.f32 %v3020, %v3046
    %v3071 = vadd.f32 %v3021, %v3047
    %v3072 = vadd.f32 %v3022, %v3048
    %v3073 = vadd.f32 %v3023, %v3049
    %v3074 = vadd.f32 %v3024, %v3050
    %v3075 = vadd.f32 %v3025, %v3051
    %v3076 = vadd.f32 %v3026, %v3052
    %v3077 = vadd.f32 %v3027, %v3053
    %v3078 = vadd.f32 %v3028, %v3054
    %s3079 = sld [smem:[#allocation6 + $0x2f]]
    %v3080 = vstv %s3079
    %v3081 = vmul.f32 %v3080, %v1689
    %v3082 = vmul.f32 %v3080, %v1690
    %v3083 = vmul.f32 %v3080, %v1691
    %v3084 = vmul.f32 %v3080, %v1692
    %v3085 = vmul.f32 %v3080, %v1693
    %v3086 = vmul.f32 %v3080, %v1694
    %v3087 = vmul.f32 %v3080, %v1695
    %v3088 = vmul.f32 %v3080, %v1696
    %v3089 = vmul.f32 %v3080, %v1697
    %v3090 = vmul.f32 %v3080, %v1698
    %v3091 = vmul.f32 %v3080, %v1699
    %v3092 = vmul.f32 %v3080, %v1700
    %v3093 = vmul.f32 %v3080, %v1701
    %v3094 = vmul.f32 %v3080, %v1702
    %v3095 = vmul.f32 %v3080, %v1703
    %v3096 = vmul.f32 %v3080, %v1704
    %v3097 = vmul.f32 %v3080, %v1705
    %v3098 = vmul.f32 %v3080, %v1706
    %v3099 = vmul.f32 %v3080, %v1707
    %v3100 = vmul.f32 %v3080, %v1708
    %v3101 = vmul.f32 %v3080, %v1709
    %v3102 = vmul.f32 %v3080, %v1710
    %v3103 = vmul.f32 %v3080, %v1711
    %v3104 = vmul.f32 %v3080, %v1712
    %v3105 = vadd.f32 %v3055, %v3081
    %v3106 = vadd.f32 %v3056, %v3082
    %v3107 = vadd.f32 %v3057, %v3083
    %v3108 = vadd.f32 %v3058, %v3084
    %v3109 = vadd.f32 %v3059, %v3085
    %v3110 = vadd.f32 %v3060, %v3086
    %v3111 = vadd.f32 %v3061, %v3087
    %v3112 = vadd.f32 %v3062, %v3088
    %v3113 = vadd.f32 %v3063, %v3089
    %v3114 = vadd.f32 %v3064, %v3090
    %v3115 = vadd.f32 %v3065, %v3091
    %v3116 = vadd.f32 %v3066, %v3092
    %v3117 = vadd.f32 %v3067, %v3093
    %v3118 = vadd.f32 %v3068, %v3094
    %v3119 = vadd.f32 %v3069, %v3095
    %v3120 = vadd.f32 %v3070, %v3096
    %v3121 = vadd.f32 %v3071, %v3097
    %v3122 = vadd.f32 %v3072, %v3098
    %v3123 = vadd.f32 %v3073, %v3099
    %v3124 = vadd.f32 %v3074, %v3100
    %v3125 = vadd.f32 %v3075, %v3101
    %v3126 = vadd.f32 %v3076, %v3102
    %v3127 = vadd.f32 %v3077, %v3103
    %v3128 = vadd.f32 %v3078, %v3104
    %s3129 = sld [smem:[#allocation6 + $0x30]]
    %v3130 = vstv %s3129
    %v3131 = vmul.f32 %v3130, %v1763
    %v3132 = vmul.f32 %v3130, %v1764
    %v3133 = vmul.f32 %v3130, %v1765
    %v3134 = vmul.f32 %v3130, %v1766
    %v3135 = vmul.f32 %v3130, %v1767
    %v3136 = vmul.f32 %v3130, %v1768
    %v3137 = vmul.f32 %v3130, %v1769
    %v3138 = vmul.f32 %v3130, %v1770
    %v3139 = vmul.f32 %v3130, %v1771
    %v3140 = vmul.f32 %v3130, %v1772
    %v3141 = vmul.f32 %v3130, %v1773
    %v3142 = vmul.f32 %v3130, %v1774
    %v3143 = vmul.f32 %v3130, %v1775
    %v3144 = vmul.f32 %v3130, %v1776
    %v3145 = vmul.f32 %v3130, %v1777
    %v3146 = vmul.f32 %v3130, %v1778
    %v3147 = vmul.f32 %v3130, %v1779
    %v3148 = vmul.f32 %v3130, %v1780
    %v3149 = vmul.f32 %v3130, %v1781
    %v3150 = vmul.f32 %v3130, %v1782
    %v3151 = vmul.f32 %v3130, %v1783
    %v3152 = vmul.f32 %v3130, %v1784
    %v3153 = vmul.f32 %v3130, %v1785
    %v3154 = vmul.f32 %v3130, %v1786
    %v3155 = vadd.f32 %v3105, %v3131
    %v3156 = vadd.f32 %v3106, %v3132
    %v3157 = vadd.f32 %v3107, %v3133
    %v3158 = vadd.f32 %v3108, %v3134
    %v3159 = vadd.f32 %v3109, %v3135
    %v3160 = vadd.f32 %v3110, %v3136
    %v3161 = vadd.f32 %v3111, %v3137
    %v3162 = vadd.f32 %v3112, %v3138
    %v3163 = vadd.f32 %v3113, %v3139
    %v3164 = vadd.f32 %v3114, %v3140
    %v3165 = vadd.f32 %v3115, %v3141
    %v3166 = vadd.f32 %v3116, %v3142
    %v3167 = vadd.f32 %v3117, %v3143
    %v3168 = vadd.f32 %v3118, %v3144
    %v3169 = vadd.f32 %v3119, %v3145
    %v3170 = vadd.f32 %v3120, %v3146
    %v3171 = vadd.f32 %v3121, %v3147
    %v3172 = vadd.f32 %v3122, %v3148
    %v3173 = vadd.f32 %v3123, %v3149
    %v3174 = vadd.f32 %v3124, %v3150
    %v3175 = vadd.f32 %v3125, %v3151
    %v3176 = vadd.f32 %v3126, %v3152
    %v3177 = vadd.f32 %v3127, %v3153
    %v3178 = vadd.f32 %v3128, %v3154
    %s3179 = sld [smem:[#allocation6 + $0x31]]
    %v3180 = vstv %s3179
    %v3181 = vmul.f32 %v3180, %v1837
    %v3182 = vmul.f32 %v3180, %v1838
    %v3183 = vmul.f32 %v3180, %v1839
    %v3184 = vmul.f32 %v3180, %v1840
    %v3185 = vmul.f32 %v3180, %v1841
    %v3186 = vmul.f32 %v3180, %v1842
    %v3187 = vmul.f32 %v3180, %v1843
    %v3188 = vmul.f32 %v3180, %v1844
    %v3189 = vmul.f32 %v3180, %v1845
    %v3190 = vmul.f32 %v3180, %v1846
    %v3191 = vmul.f32 %v3180, %v1847
    %v3192 = vmul.f32 %v3180, %v1848
    %v3193 = vmul.f32 %v3180, %v1849
    %v3194 = vmul.f32 %v3180, %v1850
    %v3195 = vmul.f32 %v3180, %v1851
    %v3196 = vmul.f32 %v3180, %v1852
    %v3197 = vmul.f32 %v3180, %v1853
    %v3198 = vmul.f32 %v3180, %v1854
    %v3199 = vmul.f32 %v3180, %v1855
    %v3200 = vmul.f32 %v3180, %v1856
    %v3201 = vmul.f32 %v3180, %v1857
    %v3202 = vmul.f32 %v3180, %v1858
    %v3203 = vmul.f32 %v3180, %v1859
    %v3204 = vmul.f32 %v3180, %v1860
    %v3205 = vadd.f32 %v3155, %v3181
    %v3206 = vadd.f32 %v3156, %v3182
    %v3207 = vadd.f32 %v3157, %v3183
    %v3208 = vadd.f32 %v3158, %v3184
    %v3209 = vadd.f32 %v3159, %v3185
    %v3210 = vadd.f32 %v3160, %v3186
    %v3211 = vadd.f32 %v3161, %v3187
    %v3212 = vadd.f32 %v3162, %v3188
    %v3213 = vadd.f32 %v3163, %v3189
    %v3214 = vadd.f32 %v3164, %v3190
    %v3215 = vadd.f32 %v3165, %v3191
    %v3216 = vadd.f32 %v3166, %v3192
    %v3217 = vadd.f32 %v3167, %v3193
    %v3218 = vadd.f32 %v3168, %v3194
    %v3219 = vadd.f32 %v3169, %v3195
    %v3220 = vadd.f32 %v3170, %v3196
    %v3221 = vadd.f32 %v3171, %v3197
    %v3222 = vadd.f32 %v3172, %v3198
    %v3223 = vadd.f32 %v3173, %v3199
    %v3224 = vadd.f32 %v3174, %v3200
    %v3225 = vadd.f32 %v3175, %v3201
    %v3226 = vadd.f32 %v3176, %v3202
    %v3227 = vadd.f32 %v3177, %v3203
    %v3228 = vadd.f32 %v3178, %v3204
    %v3229 = vtanh.pop %v3205
    %v3230 = vtanh.pop %v3206
    %v3231 = vtanh.pop %v3207
    %v3232 = vtanh.pop %v3208
    %v3233 = vtanh.pop %v3209
    %v3234 = vtanh.pop %v3210
    %v3235 = vtanh.pop %v3211
    %v3236 = vtanh.pop %v3212
    %v3237 = vtanh.pop %v3213
    %v3238 = vtanh.pop %v3214
    %v3239 = vtanh.pop %v3215
    %v3240 = vtanh.pop %v3216
    %v3241 = vtanh.pop %v3217
    %v3242 = vtanh.pop %v3218
    %v3243 = vtanh.pop %v3219
    %v3244 = vtanh.pop %v3220
    %v3245 = vtanh.pop %v3221
    %v3246 = vtanh.pop %v3222
    %v3247 = vtanh.pop %v3223
    %v3248 = vtanh.pop %v3224
    %v3249 = vtanh.pop %v3225
    %v3250 = vtanh.pop %v3226
    %v3251 = vtanh.pop %v3227
    %v3252 = vtanh.pop %v3228
    %v3253 = vmax.f32 %v3229, %v3233
    %v3254 = vmax.f32 %v3231, %v3235
    %v3255 = vmax.f32 %v3253, %v3237
    %v3256 = vmax.f32 %v3254, %v3239
    %v3257 = vmax.f32 %v3255, %v3241
    %v3258 = vmax.f32 %v3256, %v3243
    %v3259 = vmax.f32 %v3257, %v3245
    %v3260 = vmax.f32 %v3258, %v3247
    %v3261 = vmax.f32 %v3259, %v3249
    %v3262 = vmax.f32 %v3260, %v3251
    %v3263 = vmax.f32 %v3261, %v3262
    %v3264 = vsel %vm1945, %v3230, -inf
    %v3265 = vsel %vm1945, %v3232, -inf
    %v3266 = vsel %vm1945, %v3234, -inf
    %v3267 = vmax.f32 %v3264, %v3266
    %v3268 = vsel %vm1945, %v3236, -inf
    %v3269 = vmax.f32 %v3265, %v3268
    %v3270 = vsel %vm1945, %v3238, -inf
    %v3271 = vmax.f32 %v3267, %v3270
    %v3272 = vsel %vm1945, %v3240, -inf
    %v3273 = vmax.f32 %v3269, %v3272
    %v3274 = vsel %vm1945, %v3242, -inf
    %v3275 = vmax.f32 %v3271, %v3274
    %v3276 = vsel %vm1945, %v3244, -inf
    %v3277 = vmax.f32 %v3273, %v3276
    %v3278 = vsel %vm1945, %v3246, -inf
    %v3279 = vmax.f32 %v3275, %v3278
    %v3280 = vsel %vm1945, %v3248, -inf
    %v3281 = vmax.f32 %v3277, %v3280
    %v3282 = vsel %vm1945, %v3250, -inf
    %v3283 = vmax.f32 %v3279, %v3282
    %v3284 = vsel %vm1945, %v3252, -inf
    %v3285 = vmax.f32 %v3281, %v3284
    %v3286 = vmax.f32 %v3283, %v3285
    %v3287 = vsel %vm1945, %v3286, -inf
    %v3288 = vmax.f32 %v3263, %v3287
    %v3289 = vrot.slane %v3288, 4
    %v3290 = vmax.f32 %v3288, %v3289
    %v3291 = vrot.slane %v3290, 2
    %v3292 = vmax.f32 %v3290, %v3291
    %v3293 = vrot.slane %v3292, 1
    %v3294 = vmax.f32 %v3292, %v3293
    %s3295 = sld [smem:[#allocation7 + $0x2]]
    %v3296 = vstv %s3295
    %s3297 = sld [smem:[#allocation6 + $0x32]]
    %v3298 = vstv %s3297
    %v3299 = vmul.f32 %v3298, %v57
    %v3300 = vmul.f32 %v3298, %v58
    %v3301 = vmul.f32 %v3298, %v59
    %v3302 = vmul.f32 %v3298, %v60
    %v3303 = vmul.f32 %v3298, %v61
    %v3304 = vmul.f32 %v3298, %v62
    %v3305 = vmul.f32 %v3298, %v63
    %v3306 = vmul.f32 %v3298, %v64
    %v3307 = vmul.f32 %v3298, %v65
    %v3308 = vmul.f32 %v3298, %v66
    %v3309 = vmul.f32 %v3298, %v67
    %v3310 = vmul.f32 %v3298, %v68
    %v3311 = vmul.f32 %v3298, %v69
    %v3312 = vmul.f32 %v3298, %v70
    %v3313 = vmul.f32 %v3298, %v71
    %v3314 = vmul.f32 %v3298, %v72
    %v3315 = vmul.f32 %v3298, %v73
    %v3316 = vmul.f32 %v3298, %v74
    %v3317 = vmul.f32 %v3298, %v75
    %v3318 = vmul.f32 %v3298, %v76
    %v3319 = vmul.f32 %v3298, %v77
    %v3320 = vmul.f32 %v3298, %v78
    %v3321 = vmul.f32 %v3298, %v79
    %v3322 = vmul.f32 %v3298, %v80
    %v3323 = vadd.f32 %v3296, %v3299
    %v3324 = vadd.f32 %v3296, %v3300
    %v3325 = vadd.f32 %v3296, %v3301
    %v3326 = vadd.f32 %v3296, %v3302
    %v3327 = vadd.f32 %v3296, %v3303
    %v3328 = vadd.f32 %v3296, %v3304
    %v3329 = vadd.f32 %v3296, %v3305
    %v3330 = vadd.f32 %v3296, %v3306
    %v3331 = vadd.f32 %v3296, %v3307
    %v3332 = vadd.f32 %v3296, %v3308
    %v3333 = vadd.f32 %v3296, %v3309
    %v3334 = vadd.f32 %v3296, %v3310
    %v3335 = vadd.f32 %v3296, %v3311
    %v3336 = vadd.f32 %v3296, %v3312
    %v3337 = vadd.f32 %v3296, %v3313
    %v3338 = vadd.f32 %v3296, %v3314
    %v3339 = vadd.f32 %v3296, %v3315
    %v3340 = vadd.f32 %v3296, %v3316
    %v3341 = vadd.f32 %v3296, %v3317
    %v3342 = vadd.f32 %v3296, %v3318
    %v3343 = vadd.f32 %v3296, %v3319
    %v3344 = vadd.f32 %v3296, %v3320
    %v3345 = vadd.f32 %v3296, %v3321
    %v3346 = vadd.f32 %v3296, %v3322
    %s3347 = sld [smem:[#allocation6 + $0x33]]
    %v3348 = vstv %s3347
    %v3349 = vmul.f32 %v3348, %v131
    %v3350 = vmul.f32 %v3348, %v132
    %v3351 = vmul.f32 %v3348, %v133
    %v3352 = vmul.f32 %v3348, %v134
    %v3353 = vmul.f32 %v3348, %v135
    %v3354 = vmul.f32 %v3348, %v136
    %v3355 = vmul.f32 %v3348, %v137
    %v3356 = vmul.f32 %v3348, %v138
    %v3357 = vmul.f32 %v3348, %v139
    %v3358 = vmul.f32 %v3348, %v140
    %v3359 = vmul.f32 %v3348, %v141
    %v3360 = vmul.f32 %v3348, %v142
    %v3361 = vmul.f32 %v3348, %v143
    %v3362 = vmul.f32 %v3348, %v144
    %v3363 = vmul.f32 %v3348, %v145
    %v3364 = vmul.f32 %v3348, %v146
    %v3365 = vmul.f32 %v3348, %v147
    %v3366 = vmul.f32 %v3348, %v148
    %v3367 = vmul.f32 %v3348, %v149
    %v3368 = vmul.f32 %v3348, %v150
    %v3369 = vmul.f32 %v3348, %v151
    %v3370 = vmul.f32 %v3348, %v152
    %v3371 = vmul.f32 %v3348, %v153
    %v3372 = vmul.f32 %v3348, %v154
    %v3373 = vadd.f32 %v3323, %v3349
    %v3374 = vadd.f32 %v3324, %v3350
    %v3375 = vadd.f32 %v3325, %v3351
    %v3376 = vadd.f32 %v3326, %v3352
    %v3377 = vadd.f32 %v3327, %v3353
    %v3378 = vadd.f32 %v3328, %v3354
    %v3379 = vadd.f32 %v3329, %v3355
    %v3380 = vadd.f32 %v3330, %v3356
    %v3381 = vadd.f32 %v3331, %v3357
    %v3382 = vadd.f32 %v3332, %v3358
    %v3383 = vadd.f32 %v3333, %v3359
    %v3384 = vadd.f32 %v3334, %v3360
    %v3385 = vadd.f32 %v3335, %v3361
    %v3386 = vadd.f32 %v3336, %v3362
    %v3387 = vadd.f32 %v3337, %v3363
    %v3388 = vadd.f32 %v3338, %v3364
    %v3389 = vadd.f32 %v3339, %v3365
    %v3390 = vadd.f32 %v3340, %v3366
    %v3391 = vadd.f32 %v3341, %v3367
    %v3392 = vadd.f32 %v3342, %v3368
    %v3393 = vadd.f32 %v3343, %v3369
    %v3394 = vadd.f32 %v3344, %v3370
    %v3395 = vadd.f32 %v3345, %v3371
    %v3396 = vadd.f32 %v3346, %v3372
    %s3397 = sld [smem:[#allocation6 + $0x34]]
    %v3398 = vstv %s3397
    %v3399 = vmul.f32 %v3398, %v205
    %v3400 = vmul.f32 %v3398, %v206
    %v3401 = vmul.f32 %v3398, %v207
    %v3402 = vmul.f32 %v3398, %v208
    %v3403 = vmul.f32 %v3398, %v209
    %v3404 = vmul.f32 %v3398, %v210
    %v3405 = vmul.f32 %v3398, %v211
    %v3406 = vmul.f32 %v3398, %v212
    %v3407 = vmul.f32 %v3398, %v213
    %v3408 = vmul.f32 %v3398, %v214
    %v3409 = vmul.f32 %v3398, %v215
    %v3410 = vmul.f32 %v3398, %v216
    %v3411 = vmul.f32 %v3398, %v217
    %v3412 = vmul.f32 %v3398, %v218
    %v3413 = vmul.f32 %v3398, %v219
    %v3414 = vmul.f32 %v3398, %v220
    %v3415 = vmul.f32 %v3398, %v221
    %v3416 = vmul.f32 %v3398, %v222
    %v3417 = vmul.f32 %v3398, %v223
    %v3418 = vmul.f32 %v3398, %v224
    %v3419 = vmul.f32 %v3398, %v225
    %v3420 = vmul.f32 %v3398, %v226
    %v3421 = vmul.f32 %v3398, %v227
    %v3422 = vmul.f32 %v3398, %v228
    %v3423 = vadd.f32 %v3373, %v3399
    %v3424 = vadd.f32 %v3374, %v3400
    %v3425 = vadd.f32 %v3375, %v3401
    %v3426 = vadd.f32 %v3376, %v3402
    %v3427 = vadd.f32 %v3377, %v3403
    %v3428 = vadd.f32 %v3378, %v3404
    %v3429 = vadd.f32 %v3379, %v3405
    %v3430 = vadd.f32 %v3380, %v3406
    %v3431 = vadd.f32 %v3381, %v3407
    %v3432 = vadd.f32 %v3382, %v3408
    %v3433 = vadd.f32 %v3383, %v3409
    %v3434 = vadd.f32 %v3384, %v3410
    %v3435 = vadd.f32 %v3385, %v3411
    %v3436 = vadd.f32 %v3386, %v3412
    %v3437 = vadd.f32 %v3387, %v3413
    %v3438 = vadd.f32 %v3388, %v3414
    %v3439 = vadd.f32 %v3389, %v3415
    %v3440 = vadd.f32 %v3390, %v3416
    %v3441 = vadd.f32 %v3391, %v3417
    %v3442 = vadd.f32 %v3392, %v3418
    %v3443 = vadd.f32 %v3393, %v3419
    %v3444 = vadd.f32 %v3394, %v3420
    %v3445 = vadd.f32 %v3395, %v3421
    %v3446 = vadd.f32 %v3396, %v3422
    %s3447 = sld [smem:[#allocation6 + $0x35]]
    %v3448 = vstv %s3447
    %v3449 = vmul.f32 %v3448, %v279
    %v3450 = vmul.f32 %v3448, %v280
    %v3451 = vmul.f32 %v3448, %v281
    %v3452 = vmul.f32 %v3448, %v282
    %v3453 = vmul.f32 %v3448, %v283
    %v3454 = vmul.f32 %v3448, %v284
    %v3455 = vmul.f32 %v3448, %v285
    %v3456 = vmul.f32 %v3448, %v286
    %v3457 = vmul.f32 %v3448, %v287
    %v3458 = vmul.f32 %v3448, %v288
    %v3459 = vmul.f32 %v3448, %v289
    %v3460 = vmul.f32 %v3448, %v290
    %v3461 = vmul.f32 %v3448, %v291
    %v3462 = vmul.f32 %v3448, %v292
    %v3463 = vmul.f32 %v3448, %v293
    %v3464 = vmul.f32 %v3448, %v294
    %v3465 = vmul.f32 %v3448, %v295
    %v3466 = vmul.f32 %v3448, %v296
    %v3467 = vmul.f32 %v3448, %v297
    %v3468 = vmul.f32 %v3448, %v298
    %v3469 = vmul.f32 %v3448, %v299
    %v3470 = vmul.f32 %v3448, %v300
    %v3471 = vmul.f32 %v3448, %v301
    %v3472 = vmul.f32 %v3448, %v302
    %v3473 = vadd.f32 %v3423, %v3449
    %v3474 = vadd.f32 %v3424, %v3450
    %v3475 = vadd.f32 %v3425, %v3451
    %v3476 = vadd.f32 %v3426, %v3452
    %v3477 = vadd.f32 %v3427, %v3453
    %v3478 = vadd.f32 %v3428, %v3454
    %v3479 = vadd.f32 %v3429, %v3455
    %v3480 = vadd.f32 %v3430, %v3456
    %v3481 = vadd.f32 %v3431, %v3457
    %v3482 = vadd.f32 %v3432, %v3458
    %v3483 = vadd.f32 %v3433, %v3459
    %v3484 = vadd.f32 %v3434, %v3460
    %v3485 = vadd.f32 %v3435, %v3461
    %v3486 = vadd.f32 %v3436, %v3462
    %v3487 = vadd.f32 %v3437, %v3463
    %v3488 = vadd.f32 %v3438, %v3464
    %v3489 = vadd.f32 %v3439, %v3465
    %v3490 = vadd.f32 %v3440, %v3466
    %v3491 = vadd.f32 %v3441, %v3467
    %v3492 = vadd.f32 %v3442, %v3468
    %v3493 = vadd.f32 %v3443, %v3469
    %v3494 = vadd.f32 %v3444, %v3470
    %v3495 = vadd.f32 %v3445, %v3471
    %v3496 = vadd.f32 %v3446, %v3472
    %s3497 = sld [smem:[#allocation6 + $0x36]]
    %v3498 = vstv %s3497
    %v3499 = vmul.f32 %v3498, %v353
    %v3500 = vmul.f32 %v3498, %v354
    %v3501 = vmul.f32 %v3498, %v355
    %v3502 = vmul.f32 %v3498, %v356
    %v3503 = vmul.f32 %v3498, %v357
    %v3504 = vmul.f32 %v3498, %v358
    %v3505 = vmul.f32 %v3498, %v359
    %v3506 = vmul.f32 %v3498, %v360
    %v3507 = vmul.f32 %v3498, %v361
    %v3508 = vmul.f32 %v3498, %v362
    %v3509 = vmul.f32 %v3498, %v363
    %v3510 = vmul.f32 %v3498, %v364
    %v3511 = vmul.f32 %v3498, %v365
    %v3512 = vmul.f32 %v3498, %v366
    %v3513 = vmul.f32 %v3498, %v367
    %v3514 = vmul.f32 %v3498, %v368
    %v3515 = vmul.f32 %v3498, %v369
    %v3516 = vmul.f32 %v3498, %v370
    %v3517 = vmul.f32 %v3498, %v371
    %v3518 = vmul.f32 %v3498, %v372
    %v3519 = vmul.f32 %v3498, %v373
    %v3520 = vmul.f32 %v3498, %v374
    %v3521 = vmul.f32 %v3498, %v375
    %v3522 = vmul.f32 %v3498, %v376
    %v3523 = vadd.f32 %v3473, %v3499
    %v3524 = vadd.f32 %v3474, %v3500
    %v3525 = vadd.f32 %v3475, %v3501
    %v3526 = vadd.f32 %v3476, %v3502
    %v3527 = vadd.f32 %v3477, %v3503
    %v3528 = vadd.f32 %v3478, %v3504
    %v3529 = vadd.f32 %v3479, %v3505
    %v3530 = vadd.f32 %v3480, %v3506
    %v3531 = vadd.f32 %v3481, %v3507
    %v3532 = vadd.f32 %v3482, %v3508
    %v3533 = vadd.f32 %v3483, %v3509
    %v3534 = vadd.f32 %v3484, %v3510
    %v3535 = vadd.f32 %v3485, %v3511
    %v3536 = vadd.f32 %v3486, %v3512
    %v3537 = vadd.f32 %v3487, %v3513
    %v3538 = vadd.f32 %v3488, %v3514
    %v3539 = vadd.f32 %v3489, %v3515
    %v3540 = vadd.f32 %v3490, %v3516
    %v3541 = vadd.f32 %v3491, %v3517
    %v3542 = vadd.f32 %v3492, %v3518
    %v3543 = vadd.f32 %v3493, %v3519
    %v3544 = vadd.f32 %v3494, %v3520
    %v3545 = vadd.f32 %v3495, %v3521
    %v3546 = vadd.f32 %v3496, %v3522
    %s3547 = sld [smem:[#allocation6 + $0x37]]
    %v3548 = vstv %s3547
    %v3549 = vmul.f32 %v3548, %v428
    %v3550 = vmul.f32 %v3548, %v429
    %v3551 = vmul.f32 %v3548, %v430
    %v3552 = vmul.f32 %v3548, %v431
    %v3553 = vmul.f32 %v3548, %v432
    %v3554 = vmul.f32 %v3548, %v433
    %v3555 = vmul.f32 %v3548, %v434
    %v3556 = vmul.f32 %v3548, %v435
    %v3557 = vmul.f32 %v3548, %v436
    %v3558 = vmul.f32 %v3548, %v437
    %v3559 = vmul.f32 %v3548, %v438
    %v3560 = vmul.f32 %v3548, %v439
    %v3561 = vmul.f32 %v3548, %v440
    %v3562 = vmul.f32 %v3548, %v441
    %v3563 = vmul.f32 %v3548, %v442
    %v3564 = vmul.f32 %v3548, %v443
    %v3565 = vmul.f32 %v3548, %v444
    %v3566 = vmul.f32 %v3548, %v445
    %v3567 = vmul.f32 %v3548, %v446
    %v3568 = vmul.f32 %v3548, %v447
    %v3569 = vmul.f32 %v3548, %v448
    %v3570 = vmul.f32 %v3548, %v449
    %v3571 = vmul.f32 %v3548, %v450
    %v3572 = vmul.f32 %v3548, %v451
    %v3573 = vadd.f32 %v3523, %v3549
    %v3574 = vadd.f32 %v3524, %v3550
    %v3575 = vadd.f32 %v3525, %v3551
    %v3576 = vadd.f32 %v3526, %v3552
    %v3577 = vadd.f32 %v3527, %v3553
    %v3578 = vadd.f32 %v3528, %v3554
    %v3579 = vadd.f32 %v3529, %v3555
    %v3580 = vadd.f32 %v3530, %v3556
    %v3581 = vadd.f32 %v3531, %v3557
    %v3582 = vadd.f32 %v3532, %v3558
    %v3583 = vadd.f32 %v3533, %v3559
    %v3584 = vadd.f32 %v3534, %v3560
    %v3585 = vadd.f32 %v3535, %v3561
    %v3586 = vadd.f32 %v3536, %v3562
    %v3587 = vadd.f32 %v3537, %v3563
    %v3588 = vadd.f32 %v3538, %v3564
    %v3589 = vadd.f32 %v3539, %v3565
    %v3590 = vadd.f32 %v3540, %v3566
    %v3591 = vadd.f32 %v3541, %v3567
    %v3592 = vadd.f32 %v3542, %v3568
    %v3593 = vadd.f32 %v3543, %v3569
    %v3594 = vadd.f32 %v3544, %v3570
    %v3595 = vadd.f32 %v3545, %v3571
    %v3596 = vadd.f32 %v3546, %v3572
    %s3597 = sld [smem:[#allocation6 + $0x38]]
    %v3598 = vstv %s3597
    %v3599 = vmul.f32 %v3598, %v502
    %v3600 = vmul.f32 %v3598, %v503
    %v3601 = vmul.f32 %v3598, %v504
    %v3602 = vmul.f32 %v3598, %v505
    %v3603 = vmul.f32 %v3598, %v506
    %v3604 = vmul.f32 %v3598, %v507
    %v3605 = vmul.f32 %v3598, %v508
    %v3606 = vmul.f32 %v3598, %v509
    %v3607 = vmul.f32 %v3598, %v510
    %v3608 = vmul.f32 %v3598, %v511
    %v3609 = vmul.f32 %v3598, %v512
    %v3610 = vmul.f32 %v3598, %v513
    %v3611 = vmul.f32 %v3598, %v514
    %v3612 = vmul.f32 %v3598, %v515
    %v3613 = vmul.f32 %v3598, %v516
    %v3614 = vmul.f32 %v3598, %v517
    %v3615 = vmul.f32 %v3598, %v518
    %v3616 = vmul.f32 %v3598, %v519
    %v3617 = vmul.f32 %v3598, %v520
    %v3618 = vmul.f32 %v3598, %v521
    %v3619 = vmul.f32 %v3598, %v522
    %v3620 = vmul.f32 %v3598, %v523
    %v3621 = vmul.f32 %v3598, %v524
    %v3622 = vmul.f32 %v3598, %v525
    %v3623 = vadd.f32 %v3573, %v3599
    %v3624 = vadd.f32 %v3574, %v3600
    %v3625 = vadd.f32 %v3575, %v3601
    %v3626 = vadd.f32 %v3576, %v3602
    %v3627 = vadd.f32 %v3577, %v3603
    %v3628 = vadd.f32 %v3578, %v3604
    %v3629 = vadd.f32 %v3579, %v3605
    %v3630 = vadd.f32 %v3580, %v3606
    %v3631 = vadd.f32 %v3581, %v3607
    %v3632 = vadd.f32 %v3582, %v3608
    %v3633 = vadd.f32 %v3583, %v3609
    %v3634 = vadd.f32 %v3584, %v3610
    %v3635 = vadd.f32 %v3585, %v3611
    %v3636 = vadd.f32 %v3586, %v3612
    %v3637 = vadd.f32 %v3587, %v3613
    %v3638 = vadd.f32 %v3588, %v3614
    %v3639 = vadd.f32 %v3589, %v3615
    %v3640 = vadd.f32 %v3590, %v3616
    %v3641 = vadd.f32 %v3591, %v3617
    %v3642 = vadd.f32 %v3592, %v3618
    %v3643 = vadd.f32 %v3593, %v3619
    %v3644 = vadd.f32 %v3594, %v3620
    %v3645 = vadd.f32 %v3595, %v3621
    %v3646 = vadd.f32 %v3596, %v3622
    %s3647 = sld [smem:[#allocation6 + $0x39]]
    %v3648 = vstv %s3647
    %v3649 = vmul.f32 %v3648, %v576
    %v3650 = vmul.f32 %v3648, %v577
    %v3651 = vmul.f32 %v3648, %v578
    %v3652 = vmul.f32 %v3648, %v579
    %v3653 = vmul.f32 %v3648, %v580
    %v3654 = vmul.f32 %v3648, %v581
    %v3655 = vmul.f32 %v3648, %v582
    %v3656 = vmul.f32 %v3648, %v583
    %v3657 = vmul.f32 %v3648, %v584
    %v3658 = vmul.f32 %v3648, %v585
    %v3659 = vmul.f32 %v3648, %v586
    %v3660 = vmul.f32 %v3648, %v587
    %v3661 = vmul.f32 %v3648, %v588
    %v3662 = vmul.f32 %v3648, %v589
    %v3663 = vmul.f32 %v3648, %v590
    %v3664 = vmul.f32 %v3648, %v591
    %v3665 = vmul.f32 %v3648, %v592
    %v3666 = vmul.f32 %v3648, %v593
    %v3667 = vmul.f32 %v3648, %v594
    %v3668 = vmul.f32 %v3648, %v595
    %v3669 = vmul.f32 %v3648, %v596
    %v3670 = vmul.f32 %v3648, %v597
    %v3671 = vmul.f32 %v3648, %v598
    %v3672 = vmul.f32 %v3648, %v599
    %v3673 = vadd.f32 %v3623, %v3649
    %v3674 = vadd.f32 %v3624, %v3650
    %v3675 = vadd.f32 %v3625, %v3651
    %v3676 = vadd.f32 %v3626, %v3652
    %v3677 = vadd.f32 %v3627, %v3653
    %v3678 = vadd.f32 %v3628, %v3654
    %v3679 = vadd.f32 %v3629, %v3655
    %v3680 = vadd.f32 %v3630, %v3656
    %v3681 = vadd.f32 %v3631, %v3657
    %v3682 = vadd.f32 %v3632, %v3658
    %v3683 = vadd.f32 %v3633, %v3659
    %v3684 = vadd.f32 %v3634, %v3660
    %v3685 = vadd.f32 %v3635, %v3661
    %v3686 = vadd.f32 %v3636, %v3662
    %v3687 = vadd.f32 %v3637, %v3663
    %v3688 = vadd.f32 %v3638, %v3664
    %v3689 = vadd.f32 %v3639, %v3665
    %v3690 = vadd.f32 %v3640, %v3666
    %v3691 = vadd.f32 %v3641, %v3667
    %v3692 = vadd.f32 %v3642, %v3668
    %v3693 = vadd.f32 %v3643, %v3669
    %v3694 = vadd.f32 %v3644, %v3670
    %v3695 = vadd.f32 %v3645, %v3671
    %v3696 = vadd.f32 %v3646, %v3672
    %s3697 = sld [smem:[#allocation6 + $0x3a]]
    %v3698 = vstv %s3697
    %v3699 = vmul.f32 %v3698, %v650
    %v3700 = vmul.f32 %v3698, %v651
    %v3701 = vmul.f32 %v3698, %v652
    %v3702 = vmul.f32 %v3698, %v653
    %v3703 = vmul.f32 %v3698, %v654
    %v3704 = vmul.f32 %v3698, %v655
    %v3705 = vmul.f32 %v3698, %v656
    %v3706 = vmul.f32 %v3698, %v657
    %v3707 = vmul.f32 %v3698, %v658
    %v3708 = vmul.f32 %v3698, %v659
    %v3709 = vmul.f32 %v3698, %v660
    %v3710 = vmul.f32 %v3698, %v661
    %v3711 = vmul.f32 %v3698, %v662
    %v3712 = vmul.f32 %v3698, %v663
    %v3713 = vmul.f32 %v3698, %v664
    %v3714 = vmul.f32 %v3698, %v665
    %v3715 = vmul.f32 %v3698, %v666
    %v3716 = vmul.f32 %v3698, %v667
    %v3717 = vmul.f32 %v3698, %v668
    %v3718 = vmul.f32 %v3698, %v669
    %v3719 = vmul.f32 %v3698, %v670
    %v3720 = vmul.f32 %v3698, %v671
    %v3721 = vmul.f32 %v3698, %v672
    %v3722 = vmul.f32 %v3698, %v673
    %v3723 = vadd.f32 %v3673, %v3699
    %v3724 = vadd.f32 %v3674, %v3700
    %v3725 = vadd.f32 %v3675, %v3701
    %v3726 = vadd.f32 %v3676, %v3702
    %v3727 = vadd.f32 %v3677, %v3703
    %v3728 = vadd.f32 %v3678, %v3704
    %v3729 = vadd.f32 %v3679, %v3705
    %v3730 = vadd.f32 %v3680, %v3706
    %v3731 = vadd.f32 %v3681, %v3707
    %v3732 = vadd.f32 %v3682, %v3708
    %v3733 = vadd.f32 %v3683, %v3709
    %v3734 = vadd.f32 %v3684, %v3710
    %v3735 = vadd.f32 %v3685, %v3711
    %v3736 = vadd.f32 %v3686, %v3712
    %v3737 = vadd.f32 %v3687, %v3713
    %v3738 = vadd.f32 %v3688, %v3714
    %v3739 = vadd.f32 %v3689, %v3715
    %v3740 = vadd.f32 %v3690, %v3716
    %v3741 = vadd.f32 %v3691, %v3717
    %v3742 = vadd.f32 %v3692, %v3718
    %v3743 = vadd.f32 %v3693, %v3719
    %v3744 = vadd.f32 %v3694, %v3720
    %v3745 = vadd.f32 %v3695, %v3721
    %v3746 = vadd.f32 %v3696, %v3722
    %s3747 = sld [smem:[#allocation6 + $0x3b]]
    %v3748 = vstv %s3747
    %v3749 = vmul.f32 %v3748, %v724
    %v3750 = vmul.f32 %v3748, %v725
    %v3751 = vmul.f32 %v3748, %v726
    %v3752 = vmul.f32 %v3748, %v727
    %v3753 = vmul.f32 %v3748, %v728
    %v3754 = vmul.f32 %v3748, %v729
    %v3755 = vmul.f32 %v3748, %v730
    %v3756 = vmul.f32 %v3748, %v731
    %v3757 = vmul.f32 %v3748, %v732
    %v3758 = vmul.f32 %v3748, %v733
    %v3759 = vmul.f32 %v3748, %v734
    %v3760 = vmul.f32 %v3748, %v735
    %v3761 = vmul.f32 %v3748, %v736
    %v3762 = vmul.f32 %v3748, %v737
    %v3763 = vmul.f32 %v3748, %v738
    %v3764 = vmul.f32 %v3748, %v739
    %v3765 = vmul.f32 %v3748, %v740
    %v3766 = vmul.f32 %v3748, %v741
    %v3767 = vmul.f32 %v3748, %v742
    %v3768 = vmul.f32 %v3748, %v743
    %v3769 = vmul.f32 %v3748, %v744
    %v3770 = vmul.f32 %v3748, %v745
    %v3771 = vmul.f32 %v3748, %v746
    %v3772 = vmul.f32 %v3748, %v747
    %v3773 = vadd.f32 %v3723, %v3749
    %v3774 = vadd.f32 %v3724, %v3750
    %v3775 = vadd.f32 %v3725, %v3751
    %v3776 = vadd.f32 %v3726, %v3752
    %v3777 = vadd.f32 %v3727, %v3753
    %v3778 = vadd.f32 %v3728, %v3754
    %v3779 = vadd.f32 %v3729, %v3755
    %v3780 = vadd.f32 %v3730, %v3756
    %v3781 = vadd.f32 %v3731, %v3757
    %v3782 = vadd.f32 %v3732, %v3758
    %v3783 = vadd.f32 %v3733, %v3759
    %v3784 = vadd.f32 %v3734, %v3760
    %v3785 = vadd.f32 %v3735, %v3761
    %v3786 = vadd.f32 %v3736, %v3762
    %v3787 = vadd.f32 %v3737, %v3763
    %v3788 = vadd.f32 %v3738, %v3764
    %v3789 = vadd.f32 %v3739, %v3765
    %v3790 = vadd.f32 %v3740, %v3766
    %v3791 = vadd.f32 %v3741, %v3767
    %v3792 = vadd.f32 %v3742, %v3768
    %v3793 = vadd.f32 %v3743, %v3769
    %v3794 = vadd.f32 %v3744, %v3770
    %v3795 = vadd.f32 %v3745, %v3771
    %v3796 = vadd.f32 %v3746, %v3772
    %s3797 = sld [smem:[#allocation6 + $0x3c]]
    %v3798 = vstv %s3797
    %v3799 = vmul.f32 %v3798, %v799
    %v3800 = vmul.f32 %v3798, %v800
    %v3801 = vmul.f32 %v3798, %v801
    %v3802 = vmul.f32 %v3798, %v802
    %v3803 = vmul.f32 %v3798, %v803
    %v3804 = vmul.f32 %v3798, %v804
    %v3805 = vmul.f32 %v3798, %v805
    %v3806 = vmul.f32 %v3798, %v806
    %v3807 = vmul.f32 %v3798, %v807
    %v3808 = vmul.f32 %v3798, %v808
    %v3809 = vmul.f32 %v3798, %v809
    %v3810 = vmul.f32 %v3798, %v810
    %v3811 = vmul.f32 %v3798, %v811
    %v3812 = vmul.f32 %v3798, %v812
    %v3813 = vmul.f32 %v3798, %v813
    %v3814 = vmul.f32 %v3798, %v814
    %v3815 = vmul.f32 %v3798, %v815
    %v3816 = vmul.f32 %v3798, %v816
    %v3817 = vmul.f32 %v3798, %v817
    %v3818 = vmul.f32 %v3798, %v818
    %v3819 = vmul.f32 %v3798, %v819
    %v3820 = vmul.f32 %v3798, %v820
    %v3821 = vmul.f32 %v3798, %v821
    %v3822 = vmul.f32 %v3798, %v822
    %v3823 = vadd.f32 %v3773, %v3799
    %v3824 = vadd.f32 %v3774, %v3800
    %v3825 = vadd.f32 %v3775, %v3801
    %v3826 = vadd.f32 %v3776, %v3802
    %v3827 = vadd.f32 %v3777, %v3803
    %v3828 = vadd.f32 %v3778, %v3804
    %v3829 = vadd.f32 %v3779, %v3805
    %v3830 = vadd.f32 %v3780, %v3806
    %v3831 = vadd.f32 %v3781, %v3807
    %v3832 = vadd.f32 %v3782, %v3808
    %v3833 = vadd.f32 %v3783, %v3809
    %v3834 = vadd.f32 %v3784, %v3810
    %v3835 = vadd.f32 %v3785, %v3811
    %v3836 = vadd.f32 %v3786, %v3812
    %v3837 = vadd.f32 %v3787, %v3813
    %v3838 = vadd.f32 %v3788, %v3814
    %v3839 = vadd.f32 %v3789, %v3815
    %v3840 = vadd.f32 %v3790, %v3816
    %v3841 = vadd.f32 %v3791, %v3817
    %v3842 = vadd.f32 %v3792, %v3818
    %v3843 = vadd.f32 %v3793, %v3819
    %v3844 = vadd.f32 %v3794, %v3820
    %v3845 = vadd.f32 %v3795, %v3821
    %v3846 = vadd.f32 %v3796, %v3822
    %s3847 = sld [smem:[#allocation6 + $0x3d]]
    %v3848 = vstv %s3847
    %v3849 = vmul.f32 %v3848, %v873
    %v3850 = vmul.f32 %v3848, %v874
    %v3851 = vmul.f32 %v3848, %v875
    %v3852 = vmul.f32 %v3848, %v876
    %v3853 = vmul.f32 %v3848, %v877
    %v3854 = vmul.f32 %v3848, %v878
    %v3855 = vmul.f32 %v3848, %v879
    %v3856 = vmul.f32 %v3848, %v880
    %v3857 = vmul.f32 %v3848, %v881
    %v3858 = vmul.f32 %v3848, %v882
    %v3859 = vmul.f32 %v3848, %v883
    %v3860 = vmul.f32 %v3848, %v884
    %v3861 = vmul.f32 %v3848, %v885
    %v3862 = vmul.f32 %v3848, %v886
    %v3863 = vmul.f32 %v3848, %v887
    %v3864 = vmul.f32 %v3848, %v888
    %v3865 = vmul.f32 %v3848, %v889
    %v3866 = vmul.f32 %v3848, %v890
    %v3867 = vmul.f32 %v3848, %v891
    %v3868 = vmul.f32 %v3848, %v892
    %v3869 = vmul.f32 %v3848, %v893
    %v3870 = vmul.f32 %v3848, %v894
    %v3871 = vmul.f32 %v3848, %v895
    %v3872 = vmul.f32 %v3848, %v896
    %v3873 = vadd.f32 %v3823, %v3849
    %v3874 = vadd.f32 %v3824, %v3850
    %v3875 = vadd.f32 %v3825, %v3851
    %v3876 = vadd.f32 %v3826, %v3852
    %v3877 = vadd.f32 %v3827, %v3853
    %v3878 = vadd.f32 %v3828, %v3854
    %v3879 = vadd.f32 %v3829, %v3855
    %v3880 = vadd.f32 %v3830, %v3856
    %v3881 = vadd.f32 %v3831, %v3857
    %v3882 = vadd.f32 %v3832, %v3858
    %v3883 = vadd.f32 %v3833, %v3859
    %v3884 = vadd.f32 %v3834, %v3860
    %v3885 = vadd.f32 %v3835, %v3861
    %v3886 = vadd.f32 %v3836, %v3862
    %v3887 = vadd.f32 %v3837, %v3863
    %v3888 = vadd.f32 %v3838, %v3864
    %v3889 = vadd.f32 %v3839, %v3865
    %v3890 = vadd.f32 %v3840, %v3866
    %v3891 = vadd.f32 %v3841, %v3867
    %v3892 = vadd.f32 %v3842, %v3868
    %v3893 = vadd.f32 %v3843, %v3869
    %v3894 = vadd.f32 %v3844, %v3870
    %v3895 = vadd.f32 %v3845, %v3871
    %v3896 = vadd.f32 %v3846, %v3872
    %s3897 = sld [smem:[#allocation6 + $0x3e]]
    %v3898 = vstv %s3897
    %v3899 = vmul.f32 %v3898, %v947
    %v3900 = vmul.f32 %v3898, %v948
    %v3901 = vmul.f32 %v3898, %v949
    %v3902 = vmul.f32 %v3898, %v950
    %v3903 = vmul.f32 %v3898, %v951
    %v3904 = vmul.f32 %v3898, %v952
    %v3905 = vmul.f32 %v3898, %v953
    %v3906 = vmul.f32 %v3898, %v954
    %v3907 = vmul.f32 %v3898, %v955
    %v3908 = vmul.f32 %v3898, %v956
    %v3909 = vmul.f32 %v3898, %v957
    %v3910 = vmul.f32 %v3898, %v958
    %v3911 = vmul.f32 %v3898, %v959
    %v3912 = vmul.f32 %v3898, %v960
    %v3913 = vmul.f32 %v3898, %v961
    %v3914 = vmul.f32 %v3898, %v962
    %v3915 = vmul.f32 %v3898, %v963
    %v3916 = vmul.f32 %v3898, %v964
    %v3917 = vmul.f32 %v3898, %v965
    %v3918 = vmul.f32 %v3898, %v966
    %v3919 = vmul.f32 %v3898, %v967
    %v3920 = vmul.f32 %v3898, %v968
    %v3921 = vmul.f32 %v3898, %v969
    %v3922 = vmul.f32 %v3898, %v970
    %v3923 = vadd.f32 %v3873, %v3899
    %v3924 = vadd.f32 %v3874, %v3900
    %v3925 = vadd.f32 %v3875, %v3901
    %v3926 = vadd.f32 %v3876, %v3902
    %v3927 = vadd.f32 %v3877, %v3903
    %v3928 = vadd.f32 %v3878, %v3904
    %v3929 = vadd.f32 %v3879, %v3905
    %v3930 = vadd.f32 %v3880, %v3906
    %v3931 = vadd.f32 %v3881, %v3907
    %v3932 = vadd.f32 %v3882, %v3908
    %v3933 = vadd.f32 %v3883, %v3909
    %v3934 = vadd.f32 %v3884, %v3910
    %v3935 = vadd.f32 %v3885, %v3911
    %v3936 = vadd.f32 %v3886, %v3912
    %v3937 = vadd.f32 %v3887, %v3913
    %v3938 = vadd.f32 %v3888, %v3914
    %v3939 = vadd.f32 %v3889, %v3915
    %v3940 = vadd.f32 %v3890, %v3916
    %v3941 = vadd.f32 %v3891, %v3917
    %v3942 = vadd.f32 %v3892, %v3918
    %v3943 = vadd.f32 %v3893, %v3919
    %v3944 = vadd.f32 %v3894, %v3920
    %v3945 = vadd.f32 %v3895, %v3921
    %v3946 = vadd.f32 %v3896, %v3922
    %s3947 = sld [smem:[#allocation6 + $0x3f]]
    %v3948 = vstv %s3947
    %v3949 = vmul.f32 %v3948, %v1021
    %v3950 = vmul.f32 %v3948, %v1022
    %v3951 = vmul.f32 %v3948, %v1023
    %v3952 = vmul.f32 %v3948, %v1024
    %v3953 = vmul.f32 %v3948, %v1025
    %v3954 = vmul.f32 %v3948, %v1026
    %v3955 = vmul.f32 %v3948, %v1027
    %v3956 = vmul.f32 %v3948, %v1028
    %v3957 = vmul.f32 %v3948, %v1029
    %v3958 = vmul.f32 %v3948, %v1030
    %v3959 = vmul.f32 %v3948, %v1031
    %v3960 = vmul.f32 %v3948, %v1032
    %v3961 = vmul.f32 %v3948, %v1033
    %v3962 = vmul.f32 %v3948, %v1034
    %v3963 = vmul.f32 %v3948, %v1035
    %v3964 = vmul.f32 %v3948, %v1036
    %v3965 = vmul.f32 %v3948, %v1037
    %v3966 = vmul.f32 %v3948, %v1038
    %v3967 = vmul.f32 %v3948, %v1039
    %v3968 = vmul.f32 %v3948, %v1040
    %v3969 = vmul.f32 %v3948, %v1041
    %v3970 = vmul.f32 %v3948, %v1042
    %v3971 = vmul.f32 %v3948, %v1043
    %v3972 = vmul.f32 %v3948, %v1044
    %v3973 = vadd.f32 %v3923, %v3949
    %v3974 = vadd.f32 %v3924, %v3950
    %v3975 = vadd.f32 %v3925, %v3951
    %v3976 = vadd.f32 %v3926, %v3952
    %v3977 = vadd.f32 %v3927, %v3953
    %v3978 = vadd.f32 %v3928, %v3954
    %v3979 = vadd.f32 %v3929, %v3955
    %v3980 = vadd.f32 %v3930, %v3956
    %v3981 = vadd.f32 %v3931, %v3957
    %v3982 = vadd.f32 %v3932, %v3958
    %v3983 = vadd.f32 %v3933, %v3959
    %v3984 = vadd.f32 %v3934, %v3960
    %v3985 = vadd.f32 %v3935, %v3961
    %v3986 = vadd.f32 %v3936, %v3962
    %v3987 = vadd.f32 %v3937, %v3963
    %v3988 = vadd.f32 %v3938, %v3964
    %v3989 = vadd.f32 %v3939, %v3965
    %v3990 = vadd.f32 %v3940, %v3966
    %v3991 = vadd.f32 %v3941, %v3967
    %v3992 = vadd.f32 %v3942, %v3968
    %v3993 = vadd.f32 %v3943, %v3969
    %v3994 = vadd.f32 %v3944, %v3970
    %v3995 = vadd.f32 %v3945, %v3971
    %v3996 = vadd.f32 %v3946, %v3972
    %s3997 = sld [smem:[#allocation6 + $0x40]]
    %v3998 = vstv %s3997
    %v3999 = vmul.f32 %v3998, %v1095
    %v4000 = vmul.f32 %v3998, %v1096
    %v4001 = vmul.f32 %v3998, %v1097
    %v4002 = vmul.f32 %v3998, %v1098
    %v4003 = vmul.f32 %v3998, %v1099
    %v4004 = vmul.f32 %v3998, %v1100
    %v4005 = vmul.f32 %v3998, %v1101
    %v4006 = vmul.f32 %v3998, %v1102
    %v4007 = vmul.f32 %v3998, %v1103
    %v4008 = vmul.f32 %v3998, %v1104
    %v4009 = vmul.f32 %v3998, %v1105
    %v4010 = vmul.f32 %v3998, %v1106
    %v4011 = vmul.f32 %v3998, %v1107
    %v4012 = vmul.f32 %v3998, %v1108
    %v4013 = vmul.f32 %v3998, %v1109
    %v4014 = vmul.f32 %v3998, %v1110
    %v4015 = vmul.f32 %v3998, %v1111
    %v4016 = vmul.f32 %v3998, %v1112
    %v4017 = vmul.f32 %v3998, %v1113
    %v4018 = vmul.f32 %v3998, %v1114
    %v4019 = vmul.f32 %v3998, %v1115
    %v4020 = vmul.f32 %v3998, %v1116
    %v4021 = vmul.f32 %v3998, %v1117
    %v4022 = vmul.f32 %v3998, %v1118
    %v4023 = vadd.f32 %v3973, %v3999
    %v4024 = vadd.f32 %v3974, %v4000
    %v4025 = vadd.f32 %v3975, %v4001
    %v4026 = vadd.f32 %v3976, %v4002
    %v4027 = vadd.f32 %v3977, %v4003
    %v4028 = vadd.f32 %v3978, %v4004
    %v4029 = vadd.f32 %v3979, %v4005
    %v4030 = vadd.f32 %v3980, %v4006
    %v4031 = vadd.f32 %v3981, %v4007
    %v4032 = vadd.f32 %v3982, %v4008
    %v4033 = vadd.f32 %v3983, %v4009
    %v4034 = vadd.f32 %v3984, %v4010
    %v4035 = vadd.f32 %v3985, %v4011
    %v4036 = vadd.f32 %v3986, %v4012
    %v4037 = vadd.f32 %v3987, %v4013
    %v4038 = vadd.f32 %v3988, %v4014
    %v4039 = vadd.f32 %v3989, %v4015
    %v4040 = vadd.f32 %v3990, %v4016
    %v4041 = vadd.f32 %v3991, %v4017
    %v4042 = vadd.f32 %v3992, %v4018
    %v4043 = vadd.f32 %v3993, %v4019
    %v4044 = vadd.f32 %v3994, %v4020
    %v4045 = vadd.f32 %v3995, %v4021
    %v4046 = vadd.f32 %v3996, %v4022
    %s4047 = sld [smem:[#allocation6 + $0x41]]
    %v4048 = vstv %s4047
    %v4049 = vmul.f32 %v4048, %v1170
    %v4050 = vmul.f32 %v4048, %v1171
    %v4051 = vmul.f32 %v4048, %v1172
    %v4052 = vmul.f32 %v4048, %v1173
    %v4053 = vmul.f32 %v4048, %v1174
    %v4054 = vmul.f32 %v4048, %v1175
    %v4055 = vmul.f32 %v4048, %v1176
    %v4056 = vmul.f32 %v4048, %v1177
    %v4057 = vmul.f32 %v4048, %v1178
    %v4058 = vmul.f32 %v4048, %v1179
    %v4059 = vmul.f32 %v4048, %v1180
    %v4060 = vmul.f32 %v4048, %v1181
    %v4061 = vmul.f32 %v4048, %v1182
    %v4062 = vmul.f32 %v4048, %v1183
    %v4063 = vmul.f32 %v4048, %v1184
    %v4064 = vmul.f32 %v4048, %v1185
    %v4065 = vmul.f32 %v4048, %v1186
    %v4066 = vmul.f32 %v4048, %v1187
    %v4067 = vmul.f32 %v4048, %v1188
    %v4068 = vmul.f32 %v4048, %v1189
    %v4069 = vmul.f32 %v4048, %v1190
    %v4070 = vmul.f32 %v4048, %v1191
    %v4071 = vmul.f32 %v4048, %v1192
    %v4072 = vmul.f32 %v4048, %v1193
    %v4073 = vadd.f32 %v4023, %v4049
    %v4074 = vadd.f32 %v4024, %v4050
    %v4075 = vadd.f32 %v4025, %v4051
    %v4076 = vadd.f32 %v4026, %v4052
    %v4077 = vadd.f32 %v4027, %v4053
    %v4078 = vadd.f32 %v4028, %v4054
    %v4079 = vadd.f32 %v4029, %v4055
    %v4080 = vadd.f32 %v4030, %v4056
    %v4081 = vadd.f32 %v4031, %v4057
    %v4082 = vadd.f32 %v4032, %v4058
    %v4083 = vadd.f32 %v4033, %v4059
    %v4084 = vadd.f32 %v4034, %v4060
    %v4085 = vadd.f32 %v4035, %v4061
    %v4086 = vadd.f32 %v4036, %v4062
    %v4087 = vadd.f32 %v4037, %v4063
    %v4088 = vadd.f32 %v4038, %v4064
    %v4089 = vadd.f32 %v4039, %v4065
    %v4090 = vadd.f32 %v4040, %v4066
    %v4091 = vadd.f32 %v4041, %v4067
    %v4092 = vadd.f32 %v4042, %v4068
    %v4093 = vadd.f32 %v4043, %v4069
    %v4094 = vadd.f32 %v4044, %v4070
    %v4095 = vadd.f32 %v4045, %v4071
    %v4096 = vadd.f32 %v4046, %v4072
    %s4097 = sld [smem:[#allocation6 + $0x42]]
    %v4098 = vstv %s4097
    %v4099 = vmul.f32 %v4098, %v1244
    %v4100 = vmul.f32 %v4098, %v1245
    %v4101 = vmul.f32 %v4098, %v1246
    %v4102 = vmul.f32 %v4098, %v1247
    %v4103 = vmul.f32 %v4098, %v1248
    %v4104 = vmul.f32 %v4098, %v1249
    %v4105 = vmul.f32 %v4098, %v1250
    %v4106 = vmul.f32 %v4098, %v1251
    %v4107 = vmul.f32 %v4098, %v1252
    %v4108 = vmul.f32 %v4098, %v1253
    %v4109 = vmul.f32 %v4098, %v1254
    %v4110 = vmul.f32 %v4098, %v1255
    %v4111 = vmul.f32 %v4098, %v1256
    %v4112 = vmul.f32 %v4098, %v1257
    %v4113 = vmul.f32 %v4098, %v1258
    %v4114 = vmul.f32 %v4098, %v1259
    %v4115 = vmul.f32 %v4098, %v1260
    %v4116 = vmul.f32 %v4098, %v1261
    %v4117 = vmul.f32 %v4098, %v1262
    %v4118 = vmul.f32 %v4098, %v1263
    %v4119 = vmul.f32 %v4098, %v1264
    %v4120 = vmul.f32 %v4098, %v1265
    %v4121 = vmul.f32 %v4098, %v1266
    %v4122 = vmul.f32 %v4098, %v1267
    %v4123 = vadd.f32 %v4073, %v4099
    %v4124 = vadd.f32 %v4074, %v4100
    %v4125 = vadd.f32 %v4075, %v4101
    %v4126 = vadd.f32 %v4076, %v4102
    %v4127 = vadd.f32 %v4077, %v4103
    %v4128 = vadd.f32 %v4078, %v4104
    %v4129 = vadd.f32 %v4079, %v4105
    %v4130 = vadd.f32 %v4080, %v4106
    %v4131 = vadd.f32 %v4081, %v4107
    %v4132 = vadd.f32 %v4082, %v4108
    %v4133 = vadd.f32 %v4083, %v4109
    %v4134 = vadd.f32 %v4084, %v4110
    %v4135 = vadd.f32 %v4085, %v4111
    %v4136 = vadd.f32 %v4086, %v4112
    %v4137 = vadd.f32 %v4087, %v4113
    %v4138 = vadd.f32 %v4088, %v4114
    %v4139 = vadd.f32 %v4089, %v4115
    %v4140 = vadd.f32 %v4090, %v4116
    %v4141 = vadd.f32 %v4091, %v4117
    %v4142 = vadd.f32 %v4092, %v4118
    %v4143 = vadd.f32 %v4093, %v4119
    %v4144 = vadd.f32 %v4094, %v4120
    %v4145 = vadd.f32 %v4095, %v4121
    %v4146 = vadd.f32 %v4096, %v4122
    %s4147 = sld [smem:[#allocation6 + $0x43]]
    %v4148 = vstv %s4147
    %v4149 = vmul.f32 %v4148, %v1318
    %v4150 = vmul.f32 %v4148, %v1319
    %v4151 = vmul.f32 %v4148, %v1320
    %v4152 = vmul.f32 %v4148, %v1321
    %v4153 = vmul.f32 %v4148, %v1322
    %v4154 = vmul.f32 %v4148, %v1323
    %v4155 = vmul.f32 %v4148, %v1324
    %v4156 = vmul.f32 %v4148, %v1325
    %v4157 = vmul.f32 %v4148, %v1326
    %v4158 = vmul.f32 %v4148, %v1327
    %v4159 = vmul.f32 %v4148, %v1328
    %v4160 = vmul.f32 %v4148, %v1329
    %v4161 = vmul.f32 %v4148, %v1330
    %v4162 = vmul.f32 %v4148, %v1331
    %v4163 = vmul.f32 %v4148, %v1332
    %v4164 = vmul.f32 %v4148, %v1333
    %v4165 = vmul.f32 %v4148, %v1334
    %v4166 = vmul.f32 %v4148, %v1335
    %v4167 = vmul.f32 %v4148, %v1336
    %v4168 = vmul.f32 %v4148, %v1337
    %v4169 = vmul.f32 %v4148, %v1338
    %v4170 = vmul.f32 %v4148, %v1339
    %v4171 = vmul.f32 %v4148, %v1340
    %v4172 = vmul.f32 %v4148, %v1341
    %v4173 = vadd.f32 %v4123, %v4149
    %v4174 = vadd.f32 %v4124, %v4150
    %v4175 = vadd.f32 %v4125, %v4151
    %v4176 = vadd.f32 %v4126, %v4152
    %v4177 = vadd.f32 %v4127, %v4153
    %v4178 = vadd.f32 %v4128, %v4154
    %v4179 = vadd.f32 %v4129, %v4155
    %v4180 = vadd.f32 %v4130, %v4156
    %v4181 = vadd.f32 %v4131, %v4157
    %v4182 = vadd.f32 %v4132, %v4158
    %v4183 = vadd.f32 %v4133, %v4159
    %v4184 = vadd.f32 %v4134, %v4160
    %v4185 = vadd.f32 %v4135, %v4161
    %v4186 = vadd.f32 %v4136, %v4162
    %v4187 = vadd.f32 %v4137, %v4163
    %v4188 = vadd.f32 %v4138, %v4164
    %v4189 = vadd.f32 %v4139, %v4165
    %v4190 = vadd.f32 %v4140, %v4166
    %v4191 = vadd.f32 %v4141, %v4167
    %v4192 = vadd.f32 %v4142, %v4168
    %v4193 = vadd.f32 %v4143, %v4169
    %v4194 = vadd.f32 %v4144, %v4170
    %v4195 = vadd.f32 %v4145, %v4171
    %v4196 = vadd.f32 %v4146, %v4172
    %s4197 = sld [smem:[#allocation6 + $0x44]]
    %v4198 = vstv %s4197
    %v4199 = vmul.f32 %v4198, %v1392
    %v4200 = vmul.f32 %v4198, %v1393
    %v4201 = vmul.f32 %v4198, %v1394
    %v4202 = vmul.f32 %v4198, %v1395
    %v4203 = vmul.f32 %v4198, %v1396
    %v4204 = vmul.f32 %v4198, %v1397
    %v4205 = vmul.f32 %v4198, %v1398
    %v4206 = vmul.f32 %v4198, %v1399
    %v4207 = vmul.f32 %v4198, %v1400
    %v4208 = vmul.f32 %v4198, %v1401
    %v4209 = vmul.f32 %v4198, %v1402
    %v4210 = vmul.f32 %v4198, %v1403
    %v4211 = vmul.f32 %v4198, %v1404
    %v4212 = vmul.f32 %v4198, %v1405
    %v4213 = vmul.f32 %v4198, %v1406
    %v4214 = vmul.f32 %v4198, %v1407
    %v4215 = vmul.f32 %v4198, %v1408
    %v4216 = vmul.f32 %v4198, %v1409
    %v4217 = vmul.f32 %v4198, %v1410
    %v4218 = vmul.f32 %v4198, %v1411
    %v4219 = vmul.f32 %v4198, %v1412
    %v4220 = vmul.f32 %v4198, %v1413
    %v4221 = vmul.f32 %v4198, %v1414
    %v4222 = vmul.f32 %v4198, %v1415
    %v4223 = vadd.f32 %v4173, %v4199
    %v4224 = vadd.f32 %v4174, %v4200
    %v4225 = vadd.f32 %v4175, %v4201
    %v4226 = vadd.f32 %v4176, %v4202
    %v4227 = vadd.f32 %v4177, %v4203
    %v4228 = vadd.f32 %v4178, %v4204
    %v4229 = vadd.f32 %v4179, %v4205
    %v4230 = vadd.f32 %v4180, %v4206
    %v4231 = vadd.f32 %v4181, %v4207
    %v4232 = vadd.f32 %v4182, %v4208
    %v4233 = vadd.f32 %v4183, %v4209
    %v4234 = vadd.f32 %v4184, %v4210
    %v4235 = vadd.f32 %v4185, %v4211
    %v4236 = vadd.f32 %v4186, %v4212
    %v4237 = vadd.f32 %v4187, %v4213
    %v4238 = vadd.f32 %v4188, %v4214
    %v4239 = vadd.f32 %v4189, %v4215
    %v4240 = vadd.f32 %v4190, %v4216
    %v4241 = vadd.f32 %v4191, %v4217
    %v4242 = vadd.f32 %v4192, %v4218
    %v4243 = vadd.f32 %v4193, %v4219
    %v4244 = vadd.f32 %v4194, %v4220
    %v4245 = vadd.f32 %v4195, %v4221
    %v4246 = vadd.f32 %v4196, %v4222
    %s4247 = sld [smem:[#allocation6 + $0x45]]
    %v4248 = vstv %s4247
    %v4249 = vmul.f32 %v4248, %v1466
    %v4250 = vmul.f32 %v4248, %v1467
    %v4251 = vmul.f32 %v4248, %v1468
    %v4252 = vmul.f32 %v4248, %v1469
    %v4253 = vmul.f32 %v4248, %v1470
    %v4254 = vmul.f32 %v4248, %v1471
    %v4255 = vmul.f32 %v4248, %v1472
    %v4256 = vmul.f32 %v4248, %v1473
    %v4257 = vmul.f32 %v4248, %v1474
    %v4258 = vmul.f32 %v4248, %v1475
    %v4259 = vmul.f32 %v4248, %v1476
    %v4260 = vmul.f32 %v4248, %v1477
    %v4261 = vmul.f32 %v4248, %v1478
    %v4262 = vmul.f32 %v4248, %v1479
    %v4263 = vmul.f32 %v4248, %v1480
    %v4264 = vmul.f32 %v4248, %v1481
    %v4265 = vmul.f32 %v4248, %v1482
    %v4266 = vmul.f32 %v4248, %v1483
    %v4267 = vmul.f32 %v4248, %v1484
    %v4268 = vmul.f32 %v4248, %v1485
    %v4269 = vmul.f32 %v4248, %v1486
    %v4270 = vmul.f32 %v4248, %v1487
    %v4271 = vmul.f32 %v4248, %v1488
    %v4272 = vmul.f32 %v4248, %v1489
    %v4273 = vadd.f32 %v4223, %v4249
    %v4274 = vadd.f32 %v4224, %v4250
    %v4275 = vadd.f32 %v4225, %v4251
    %v4276 = vadd.f32 %v4226, %v4252
    %v4277 = vadd.f32 %v4227, %v4253
    %v4278 = vadd.f32 %v4228, %v4254
    %v4279 = vadd.f32 %v4229, %v4255
    %v4280 = vadd.f32 %v4230, %v4256
    %v4281 = vadd.f32 %v4231, %v4257
    %v4282 = vadd.f32 %v4232, %v4258
    %v4283 = vadd.f32 %v4233, %v4259
    %v4284 = vadd.f32 %v4234, %v4260
    %v4285 = vadd.f32 %v4235, %v4261
    %v4286 = vadd.f32 %v4236, %v4262
    %v4287 = vadd.f32 %v4237, %v4263
    %v4288 = vadd.f32 %v4238, %v4264
    %v4289 = vadd.f32 %v4239, %v4265
    %v4290 = vadd.f32 %v4240, %v4266
    %v4291 = vadd.f32 %v4241, %v4267
    %v4292 = vadd.f32 %v4242, %v4268
    %v4293 = vadd.f32 %v4243, %v4269
    %v4294 = vadd.f32 %v4244, %v4270
    %v4295 = vadd.f32 %v4245, %v4271
    %v4296 = vadd.f32 %v4246, %v4272
    %s4297 = sld [smem:[#allocation6 + $0x46]]
    %v4298 = vstv %s4297
    %v4299 = vmul.f32 %v4298, %v1541
    %v4300 = vmul.f32 %v4298, %v1542
    %v4301 = vmul.f32 %v4298, %v1543
    %v4302 = vmul.f32 %v4298, %v1544
    %v4303 = vmul.f32 %v4298, %v1545
    %v4304 = vmul.f32 %v4298, %v1546
    %v4305 = vmul.f32 %v4298, %v1547
    %v4306 = vmul.f32 %v4298, %v1548
    %v4307 = vmul.f32 %v4298, %v1549
    %v4308 = vmul.f32 %v4298, %v1550
    %v4309 = vmul.f32 %v4298, %v1551
    %v4310 = vmul.f32 %v4298, %v1552
    %v4311 = vmul.f32 %v4298, %v1553
    %v4312 = vmul.f32 %v4298, %v1554
    %v4313 = vmul.f32 %v4298, %v1555
    %v4314 = vmul.f32 %v4298, %v1556
    %v4315 = vmul.f32 %v4298, %v1557
    %v4316 = vmul.f32 %v4298, %v1558
    %v4317 = vmul.f32 %v4298, %v1559
    %v4318 = vmul.f32 %v4298, %v1560
    %v4319 = vmul.f32 %v4298, %v1561
    %v4320 = vmul.f32 %v4298, %v1562
    %v4321 = vmul.f32 %v4298, %v1563
    %v4322 = vmul.f32 %v4298, %v1564
    %v4323 = vadd.f32 %v4273, %v4299
    %v4324 = vadd.f32 %v4274, %v4300
    %v4325 = vadd.f32 %v4275, %v4301
    %v4326 = vadd.f32 %v4276, %v4302
    %v4327 = vadd.f32 %v4277, %v4303
    %v4328 = vadd.f32 %v4278, %v4304
    %v4329 = vadd.f32 %v4279, %v4305
    %v4330 = vadd.f32 %v4280, %v4306
    %v4331 = vadd.f32 %v4281, %v4307
    %v4332 = vadd.f32 %v4282, %v4308
    %v4333 = vadd.f32 %v4283, %v4309
    %v4334 = vadd.f32 %v4284, %v4310
    %v4335 = vadd.f32 %v4285, %v4311
    %v4336 = vadd.f32 %v4286, %v4312
    %v4337 = vadd.f32 %v4287, %v4313
    %v4338 = vadd.f32 %v4288, %v4314
    %v4339 = vadd.f32 %v4289, %v4315
    %v4340 = vadd.f32 %v4290, %v4316
    %v4341 = vadd.f32 %v4291, %v4317
    %v4342 = vadd.f32 %v4292, %v4318
    %v4343 = vadd.f32 %v4293, %v4319
    %v4344 = vadd.f32 %v4294, %v4320
    %v4345 = vadd.f32 %v4295, %v4321
    %v4346 = vadd.f32 %v4296, %v4322
    %s4347 = sld [smem:[#allocation6 + $0x47]]
    %v4348 = vstv %s4347
    %v4349 = vmul.f32 %v4348, %v1615
    %v4350 = vmul.f32 %v4348, %v1616
    %v4351 = vmul.f32 %v4348, %v1617
    %v4352 = vmul.f32 %v4348, %v1618
    %v4353 = vmul.f32 %v4348, %v1619
    %v4354 = vmul.f32 %v4348, %v1620
    %v4355 = vmul.f32 %v4348, %v1621
    %v4356 = vmul.f32 %v4348, %v1622
    %v4357 = vmul.f32 %v4348, %v1623
    %v4358 = vmul.f32 %v4348, %v1624
    %v4359 = vmul.f32 %v4348, %v1625
    %v4360 = vmul.f32 %v4348, %v1626
    %v4361 = vmul.f32 %v4348, %v1627
    %v4362 = vmul.f32 %v4348, %v1628
    %v4363 = vmul.f32 %v4348, %v1629
    %v4364 = vmul.f32 %v4348, %v1630
    %v4365 = vmul.f32 %v4348, %v1631
    %v4366 = vmul.f32 %v4348, %v1632
    %v4367 = vmul.f32 %v4348, %v1633
    %v4368 = vmul.f32 %v4348, %v1634
    %v4369 = vmul.f32 %v4348, %v1635
    %v4370 = vmul.f32 %v4348, %v1636
    %v4371 = vmul.f32 %v4348, %v1637
    %v4372 = vmul.f32 %v4348, %v1638
    %v4373 = vadd.f32 %v4323, %v4349
    %v4374 = vadd.f32 %v4324, %v4350
    %v4375 = vadd.f32 %v4325, %v4351
    %v4376 = vadd.f32 %v4326, %v4352
    %v4377 = vadd.f32 %v4327, %v4353
    %v4378 = vadd.f32 %v4328, %v4354
    %v4379 = vadd.f32 %v4329, %v4355
    %v4380 = vadd.f32 %v4330, %v4356
    %v4381 = vadd.f32 %v4331, %v4357
    %v4382 = vadd.f32 %v4332, %v4358
    %v4383 = vadd.f32 %v4333, %v4359
    %v4384 = vadd.f32 %v4334, %v4360
    %v4385 = vadd.f32 %v4335, %v4361
    %v4386 = vadd.f32 %v4336, %v4362
    %v4387 = vadd.f32 %v4337, %v4363
    %v4388 = vadd.f32 %v4338, %v4364
    %v4389 = vadd.f32 %v4339, %v4365
    %v4390 = vadd.f32 %v4340, %v4366
    %v4391 = vadd.f32 %v4341, %v4367
    %v4392 = vadd.f32 %v4342, %v4368
    %v4393 = vadd.f32 %v4343, %v4369
    %v4394 = vadd.f32 %v4344, %v4370
    %v4395 = vadd.f32 %v4345, %v4371
    %v4396 = vadd.f32 %v4346, %v4372
    %s4397 = sld [smem:[#allocation6 + $0x48]]
    %v4398 = vstv %s4397
    %v4399 = vmul.f32 %v4398, %v1689
    %v4400 = vmul.f32 %v4398, %v1690
    %v4401 = vmul.f32 %v4398, %v1691
    %v4402 = vmul.f32 %v4398, %v1692
    %v4403 = vmul.f32 %v4398, %v1693
    %v4404 = vmul.f32 %v4398, %v1694
    %v4405 = vmul.f32 %v4398, %v1695
    %v4406 = vmul.f32 %v4398, %v1696
    %v4407 = vmul.f32 %v4398, %v1697
    %v4408 = vmul.f32 %v4398, %v1698
    %v4409 = vmul.f32 %v4398, %v1699
    %v4410 = vmul.f32 %v4398, %v1700
    %v4411 = vmul.f32 %v4398, %v1701
    %v4412 = vmul.f32 %v4398, %v1702
    %v4413 = vmul.f32 %v4398, %v1703
    %v4414 = vmul.f32 %v4398, %v1704
    %v4415 = vmul.f32 %v4398, %v1705
    %v4416 = vmul.f32 %v4398, %v1706
    %v4417 = vmul.f32 %v4398, %v1707
    %v4418 = vmul.f32 %v4398, %v1708
    %v4419 = vmul.f32 %v4398, %v1709
    %v4420 = vmul.f32 %v4398, %v1710
    %v4421 = vmul.f32 %v4398, %v1711
    %v4422 = vmul.f32 %v4398, %v1712
    %v4423 = vadd.f32 %v4373, %v4399
    %v4424 = vadd.f32 %v4374, %v4400
    %v4425 = vadd.f32 %v4375, %v4401
    %v4426 = vadd.f32 %v4376, %v4402
    %v4427 = vadd.f32 %v4377, %v4403
    %v4428 = vadd.f32 %v4378, %v4404
    %v4429 = vadd.f32 %v4379, %v4405
    %v4430 = vadd.f32 %v4380, %v4406
    %v4431 = vadd.f32 %v4381, %v4407
    %v4432 = vadd.f32 %v4382, %v4408
    %v4433 = vadd.f32 %v4383, %v4409
    %v4434 = vadd.f32 %v4384, %v4410
    %v4435 = vadd.f32 %v4385, %v4411
    %v4436 = vadd.f32 %v4386, %v4412
    %v4437 = vadd.f32 %v4387, %v4413
    %v4438 = vadd.f32 %v4388, %v4414
    %v4439 = vadd.f32 %v4389, %v4415
    %v4440 = vadd.f32 %v4390, %v4416
    %v4441 = vadd.f32 %v4391, %v4417
    %v4442 = vadd.f32 %v4392, %v4418
    %v4443 = vadd.f32 %v4393, %v4419
    %v4444 = vadd.f32 %v4394, %v4420
    %v4445 = vadd.f32 %v4395, %v4421
    %v4446 = vadd.f32 %v4396, %v4422
    %s4447 = sld [smem:[#allocation6 + $0x49]]
    %v4448 = vstv %s4447
    %v4449 = vmul.f32 %v4448, %v1763
    %v4450 = vmul.f32 %v4448, %v1764
    %v4451 = vmul.f32 %v4448, %v1765
    %v4452 = vmul.f32 %v4448, %v1766
    %v4453 = vmul.f32 %v4448, %v1767
    %v4454 = vmul.f32 %v4448, %v1768
    %v4455 = vmul.f32 %v4448, %v1769
    %v4456 = vmul.f32 %v4448, %v1770
    %v4457 = vmul.f32 %v4448, %v1771
    %v4458 = vmul.f32 %v4448, %v1772
    %v4459 = vmul.f32 %v4448, %v1773
    %v4460 = vmul.f32 %v4448, %v1774
    %v4461 = vmul.f32 %v4448, %v1775
    %v4462 = vmul.f32 %v4448, %v1776
    %v4463 = vmul.f32 %v4448, %v1777
    %v4464 = vmul.f32 %v4448, %v1778
    %v4465 = vmul.f32 %v4448, %v1779
    %v4466 = vmul.f32 %v4448, %v1780
    %v4467 = vmul.f32 %v4448, %v1781
    %v4468 = vmul.f32 %v4448, %v1782
    %v4469 = vmul.f32 %v4448, %v1783
    %v4470 = vmul.f32 %v4448, %v1784
    %v4471 = vmul.f32 %v4448, %v1785
    %v4472 = vmul.f32 %v4448, %v1786
    %v4473 = vadd.f32 %v4423, %v4449
    %v4474 = vadd.f32 %v4424, %v4450
    %v4475 = vadd.f32 %v4425, %v4451
    %v4476 = vadd.f32 %v4426, %v4452
    %v4477 = vadd.f32 %v4427, %v4453
    %v4478 = vadd.f32 %v4428, %v4454
    %v4479 = vadd.f32 %v4429, %v4455
    %v4480 = vadd.f32 %v4430, %v4456
    %v4481 = vadd.f32 %v4431, %v4457
    %v4482 = vadd.f32 %v4432, %v4458
    %v4483 = vadd.f32 %v4433, %v4459
    %v4484 = vadd.f32 %v4434, %v4460
    %v4485 = vadd.f32 %v4435, %v4461
    %v4486 = vadd.f32 %v4436, %v4462
    %v4487 = vadd.f32 %v4437, %v4463
    %v4488 = vadd.f32 %v4438, %v4464
    %v4489 = vadd.f32 %v4439, %v4465
    %v4490 = vadd.f32 %v4440, %v4466
    %v4491 = vadd.f32 %v4441, %v4467
    %v4492 = vadd.f32 %v4442, %v4468
    %v4493 = vadd.f32 %v4443, %v4469
    %v4494 = vadd.f32 %v4444, %v4470
    %v4495 = vadd.f32 %v4445, %v4471
    %v4496 = vadd.f32 %v4446, %v4472
    %s4497 = sld [smem:[#allocation6 + $0x4a]]
    %v4498 = vstv %s4497
    %v4499 = vmul.f32 %v4498, %v1837
    %v4500 = vmul.f32 %v4498, %v1838
    %v4501 = vmul.f32 %v4498, %v1839
    %v4502 = vmul.f32 %v4498, %v1840
    %v4503 = vmul.f32 %v4498, %v1841
    %v4504 = vmul.f32 %v4498, %v1842
    %v4505 = vmul.f32 %v4498, %v1843
    %v4506 = vmul.f32 %v4498, %v1844
    %v4507 = vmul.f32 %v4498, %v1845
    %v4508 = vmul.f32 %v4498, %v1846
    %v4509 = vmul.f32 %v4498, %v1847
    %v4510 = vmul.f32 %v4498, %v1848
    %v4511 = vmul.f32 %v4498, %v1849
    %v4512 = vmul.f32 %v4498, %v1850
    %v4513 = vmul.f32 %v4498, %v1851
    %v4514 = vmul.f32 %v4498, %v1852
    %v4515 = vmul.f32 %v4498, %v1853
    %v4516 = vmul.f32 %v4498, %v1854
    %v4517 = vmul.f32 %v4498, %v1855
    %v4518 = vmul.f32 %v4498, %v1856
    %v4519 = vmul.f32 %v4498, %v1857
    %v4520 = vmul.f32 %v4498, %v1858
    %v4521 = vmul.f32 %v4498, %v1859
    %v4522 = vmul.f32 %v4498, %v1860
    %v4523 = vadd.f32 %v4473, %v4499
    %v4524 = vadd.f32 %v4474, %v4500
    %v4525 = vadd.f32 %v4475, %v4501
    %v4526 = vadd.f32 %v4476, %v4502
    %v4527 = vadd.f32 %v4477, %v4503
    %v4528 = vadd.f32 %v4478, %v4504
    %v4529 = vadd.f32 %v4479, %v4505
    %v4530 = vadd.f32 %v4480, %v4506
    %v4531 = vadd.f32 %v4481, %v4507
    %v4532 = vadd.f32 %v4482, %v4508
    %v4533 = vadd.f32 %v4483, %v4509
    %v4534 = vadd.f32 %v4484, %v4510
    %v4535 = vadd.f32 %v4485, %v4511
    %v4536 = vadd.f32 %v4486, %v4512
    %v4537 = vadd.f32 %v4487, %v4513
    %v4538 = vadd.f32 %v4488, %v4514
    %v4539 = vadd.f32 %v4489, %v4515
    %v4540 = vadd.f32 %v4490, %v4516
    %v4541 = vadd.f32 %v4491, %v4517
    %v4542 = vadd.f32 %v4492, %v4518
    %v4543 = vadd.f32 %v4493, %v4519
    %v4544 = vadd.f32 %v4494, %v4520
    %v4545 = vadd.f32 %v4495, %v4521
    %v4546 = vadd.f32 %v4496, %v4522
    %v4547 = vtanh.pop %v4523
    %v4548 = vtanh.pop %v4524
    %v4549 = vtanh.pop %v4525
    %v4550 = vtanh.pop %v4526
    %v4551 = vtanh.pop %v4527
    %v4552 = vtanh.pop %v4528
    %v4553 = vtanh.pop %v4529
    %v4554 = vtanh.pop %v4530
    %v4555 = vtanh.pop %v4531
    %v4556 = vtanh.pop %v4532
    %v4557 = vtanh.pop %v4533
    %v4558 = vtanh.pop %v4534
    %v4559 = vtanh.pop %v4535
    %v4560 = vtanh.pop %v4536
    %v4561 = vtanh.pop %v4537
    %v4562 = vtanh.pop %v4538
    %v4563 = vtanh.pop %v4539
    %v4564 = vtanh.pop %v4540
    %v4565 = vtanh.pop %v4541
    %v4566 = vtanh.pop %v4542
    %v4567 = vtanh.pop %v4543
    %v4568 = vtanh.pop %v4544
    %v4569 = vtanh.pop %v4545
    %v4570 = vtanh.pop %v4546
    %v4571 = vmax.f32 %v4547, %v4551
    %v4572 = vmax.f32 %v4549, %v4553
    %v4573 = vmax.f32 %v4571, %v4555
    %v4574 = vmax.f32 %v4572, %v4557
    %v4575 = vmax.f32 %v4573, %v4559
    %v4576 = vmax.f32 %v4574, %v4561
    %v4577 = vmax.f32 %v4575, %v4563
    %v4578 = vmax.f32 %v4576, %v4565
    %v4579 = vmax.f32 %v4577, %v4567
    %v4580 = vmax.f32 %v4578, %v4569
    %v4581 = vmax.f32 %v4579, %v4580
    %v4582 = vsel %vm1945, %v4548, -inf
    %v4583 = vsel %vm1945, %v4550, -inf
    %v4584 = vsel %vm1945, %v4552, -inf
    %v4585 = vmax.f32 %v4582, %v4584
    %v4586 = vsel %vm1945, %v4554, -inf
    %v4587 = vmax.f32 %v4583, %v4586
    %v4588 = vsel %vm1945, %v4556, -inf
    %v4589 = vmax.f32 %v4585, %v4588
    %v4590 = vsel %vm1945, %v4558, -inf
    %v4591 = vmax.f32 %v4587, %v4590
    %v4592 = vsel %vm1945, %v4560, -inf
    %v4593 = vmax.f32 %v4589, %v4592
    %v4594 = vsel %vm1945, %v4562, -inf
    %v4595 = vmax.f32 %v4591, %v4594
    %v4596 = vsel %vm1945, %v4564, -inf
    %v4597 = vmax.f32 %v4593, %v4596
    %v4598 = vsel %vm1945, %v4566, -inf
    %v4599 = vmax.f32 %v4595, %v4598
    %v4600 = vsel %vm1945, %v4568, -inf
    %v4601 = vmax.f32 %v4597, %v4600
    %v4602 = vsel %vm1945, %v4570, -inf
    %v4603 = vmax.f32 %v4599, %v4602
    %v4604 = vmax.f32 %v4601, %v4603
    %v4605 = vsel %vm1945, %v4604, -inf
    %v4606 = vmax.f32 %v4581, %v4605
    %v4607 = vrot.slane %v4606, 4
    %v4608 = vmax.f32 %v4606, %v4607
    %v4609 = vrot.slane %v4608, 2
    %v4610 = vmax.f32 %v4608, %v4609
    %v4611 = vrot.slane %v4610, 1
    %v4612 = vmax.f32 %v4610, %v4611
    %vm4613 = vcmask 1040384
    %v4614 = vsel %vm4613, %v1976, %v3294
    %vm4615 = vcmask 1041408
    %v4616 = vsel %vm4615, %v4614, %v4612
    %vm4617 = vcmask 1042432
    %v4618 = vsel %vm4617, %v4616, -inf
    %v4619 = vrot.slane %v4618, 4
    %v4620 = vmax.f32 %v4618, %v4619
    %v4621 = vrot.slane %v4620, 2
    %v4622 = vmax.f32 %v4620, %v4621
    %v4623 = vrot.slane %v4622, 1
    %v4624 = vmax.f32 %v4622, %v4623
    %v4625 = vsub.f32 %v4616, %v4624
    %v4626 = vmul.f32 %v4625, 1.442695
    %v4627 = vpow.pop %v4626
    %v4628 = vsel %vm4617, %v4627, 0.0
    %v4629 = vrot.slane %v4628, 4
    %v4630 = vadd.f32 %v4628, %v4629
    %v4631 = vrot.slane %v4630, 2
    %v4632 = vadd.f32 %v4630, %v4631
    %v4633 = vrot.slane %v4632, 1
    %v4634 = vadd.f32 %v4632, %v4633
    %v4635 = vrcp.pop %v4634
    %v4636 = vmul.f32 %v4627, %v4635
    %4637 = vst [vmem:[#allocation9] sm:$0x7] %v4636
    // Predicated region
    $region26: #{tpu_custom_call.1} parent=1 // pred_check
      _
    $region27: #{tpu_custom_call.1} parent=1 // pred_check_branch
      %4639 = sbr.rel (0) target = $region29
    $region28: #{tpu_custom_call.1} parent=1 // pred_region
      %s4641 = ssub.s32 64, 64
      %4642 = vsyncadd [#allocation4], %s4641
      %s4644 = sshll.u32 [#allocation9], 4
      %s4645 = int_to_ptr.vmem [resolvable:$true] %s4644
      %4647 = dma.vmem_to_hbm [thread:$0]  %s4645, 64, %s3, [#allocation4]
    $region29: #{tpu_custom_call.1} parent=1 // pred_fallthru
      _
    // Predicated region
    $region30: #{tpu_custom_call.1} parent=1 // pred_check
      _
    $region31: #{tpu_custom_call.1} parent=1 // pred_check_branch
      %4649 = sbr.rel (0) target = $region33
    $region32: #{tpu_custom_call.1} parent=1 // pred_region
      %4650 = dma.done [#allocation4], 64
    $region33: #{tpu_custom_call.1} parent=1 // pred_fallthru
      _
    %4651 = vsyncpa [#allocation3], 1
    %4652 = vsyncpa [#allocation4], 1
    %4653 = vsyncpa [#allocation5], 1
    %4654 = vsyncpa [#allocation8], 1

</llo_original>
